<compile_context>
chip_gen: v7x
topology: tpu7x:2x2x1
jax: 0.10.0
libtpu: 0.0.40
codegen_flags: <defaults>
</compile_context>

<pallas_src>
import math
import jax
import jax.numpy as jnp
from jax import lax
from jax.experimental import pallas as pl
from jax.experimental.pallas import tpu as pltpu

# ----------------------------- small config ---------------------------------
B = 2                 # batch
S = 8                 # seq len
H = 128               # hidden size   (BERT-base: 768)
NUM_HEADS = 4         # heads         (BERT-base: 12)
HEAD_DIM = H // NUM_HEADS
HEAD_PAD = 128        # per-head 128-lane slot (zero-padded head_dim)
INTER = 256           # FFN size      (BERT-base: 3072)
VOCAB = 512           # vocab         (BERT-base: 30522)
NUM_LAYERS = 2        # layers        (BERT-base: 12)
MAX_POS = 64
DIFFUSION_STEPS = 64
LAMBDA_VAL = 0.01
LN_EPS = 1e-12


# ----------------------------- kernel ----------------------------------------
def _ln(x, g, b):
    mu = jnp.mean(x, axis=-1, keepdims=True)
    var = jnp.mean((x - mu) ** 2, axis=-1, keepdims=True)
    return (x - mu) * lax.rsqrt(var + LN_EPS) * g + b


def encoder_kernel(h0_ref, bias_ref, embg_ref, embb_ref, projw_ref, projb_ref,
                   wqkv, bqkv, wo, bo, ln1g, ln1b,
                   w1, b1, w2, b2, ln2g, ln2b,
                   hid_ref, logits_ref):
    """All encoder layers + final vocab projection; grid axis = layer.

    hid_ref (output, constant block index) doubles as the VMEM-resident
    hidden-state carry across layers; logits are written only in the last step.
    """
    layer = pl.program_id(0)

    @pl.when(layer == 0)
    def _():
        # embedding LayerNorm fused into the first grid step
        hid_ref[...] = _ln(h0_ref[...], embg_ref[...], embb_ref[...])

    h = hid_ref[...]                    # [N, H]  f32 (N = B*S)
    bias = bias_ref[...]                # [N, N]  additive mask (pad + cross-batch)
    h_bf = h.astype(jnp.bfloat16)

    # --- fused, head-padded QKV projection: one [N,H] x [H, 3*NH*128] MXU pass.
    #     Each head's q/k/v occupies a private, zero-padded 128-lane slot.
    qkv = jnp.dot(h_bf, wqkv[0], preferred_element_type=jnp.float32) + bqkv[0]
    qkv_bf = qkv.astype(jnp.bfloat16)

    # --- attention: all slices at 128-aligned lane offsets; K=128 score matmuls.
    ctxs = []
    for hd in range(NUM_HEADS):                       # static head loop
        q_off = hd * HEAD_PAD
        k_off = (NUM_HEADS + hd) * HEAD_PAD
        v_off = (2 * NUM_HEADS + hd) * HEAD_PAD
        qh = qkv_bf[:, q_off:q_off + HEAD_PAD]        # [N, 128] (padded lanes = 0)
        kh = qkv_bf[:, k_off:k_off + HEAD_PAD]
        vh = qkv_bf[:, v_off:v_off + HEAD_PAD]
        # contract over the (padded) head dim; zero padding contributes nothing.
        # 1/sqrt(dh) already folded into wq at init.
        s = lax.dot_general(qh, kh, (((1,), (1,)), ((), ())),
                            preferred_element_type=jnp.float32) + bias
        m = jnp.max(s, axis=-1, keepdims=True)
        p = jnp.exp(s - m)
        p = p * pl.reciprocal(jnp.sum(p, axis=-1, keepdims=True), approx=True)
        ctxs.append(jnp.dot(p.astype(jnp.bfloat16), vh,
                            preferred_element_type=jnp.float32))   # [N, 128]

    # lane-aligned concat, then a SINGLE K=NH*128 output projection
    # (wo rows for padded lanes are zero).
    ctx_all = jnp.concatenate(ctxs, axis=-1).astype(jnp.bfloat16)  # [N, NH*128]
    attn = jnp.dot(ctx_all, wo[0], preferred_element_type=jnp.float32) + bo[0]
    h1 = _ln(attn + h, ln1g[0], ln1b[0])              # post-attention LayerNorm

    # TODO(synk): HF BERT uses exact erf-GELU; tanh-approx GELU used here
    # (erf lowering is not guaranteed in Mosaic).
    inter = jax.nn.gelu(
        jnp.dot(h1.astype(jnp.bfloat16), w1[0],
                preferred_element_type=jnp.float32) + b1[0])
    ffn = jnp.dot(inter.astype(jnp.bfloat16), w2[0],
                  preferred_element_type=jnp.float32) + b2[0]
    new_h = _ln(ffn + h1, ln2g[0], ln2b[0])           # output LayerNorm

    hid_ref[...] = new_h                              # carry to next layer

    @pl.when(layer == pl.num_programs(0) - 1)
    def _():
        # fused final nn.Linear(H, VOCAB): lane-dense [N, 512] output
        logits_ref[...] = (jnp.dot(new_h.astype(jnp.bfloat16), projw_ref[...],
                                   preferred_element_type=jnp.float32)
                           + projb_ref[...])


# ----------------------------- wrapper ----------------------------------------
def _layer_spec(arr):
    nd = arr.ndim
    return pl.BlockSpec((1,) + arr.shape[1:],
                        lambda l, _nd=nd: (l,) + (0,) * (_nd - 1))


def run_model(h0, bias, params):
    """One pallas_call: all encoder layers + vocab projection."""
    n, hid = h0.shape
    vocab = params['proj_w'].shape[1]
    layer_keys = ['wqkv', 'bqkv', 'wo', 'bo', 'ln1g', 'ln1b',
                  'w1', 'b1', 'w2', 'b2', 'ln2g', 'ln2b']
    layer_ws = [params[k] for k in layer_keys]
    num_layers = layer_ws[0].shape[0]

    in_specs = ([pl.BlockSpec((n, hid), lambda l: (0, 0)),       # h0 (embeddings)
                 pl.BlockSpec((n, n), lambda l: (0, 0)),         # additive bias
                 pl.BlockSpec((1, hid), lambda l: (0, 0)),       # emb LN gamma
                 pl.BlockSpec((1, hid), lambda l: (0, 0)),       # emb LN beta
                 pl.BlockSpec((hid, vocab), lambda l: (0, 0)),   # proj_w (resident)
                 pl.BlockSpec((1, vocab), lambda l: (0, 0))]     # proj_b (resident)
                + [_layer_spec(w) for w in layer_ws])

    _, logits = pl.pallas_call(
        encoder_kernel,
        out_shape=(jax.ShapeDtypeStruct((n, hid), jnp.float32),    # hidden carry
                   jax.ShapeDtypeStruct((n, vocab), jnp.float32)), # logits
        grid=(num_layers,),
        in_specs=in_specs,
        out_specs=(pl.BlockSpec((n, hid), lambda l: (0, 0)),
                   pl.BlockSpec((n, vocab), lambda l: (0, 0))),
        compiler_params=pltpu.CompilerParams(
            dimension_semantics=("arbitrary",)),
    )(h0, bias, params['emb_ln_g'], params['emb_ln_b'],
      params['proj_w'], params['proj_b'], *layer_ws)
    return logits


# ----------------------------- params / forward ------------------------------
def _pad_head_cols(w):
    """[H, H] -> [H, NUM_HEADS*128]: each head's 32 output cols in its own
    128-lane slot (remaining lanes zero)."""
    out = jnp.zeros((H, NUM_HEADS * HEAD_PAD), w.dtype)
    for hd in range(NUM_HEADS):
        out = out.at[:, hd * HEAD_PAD:hd * HEAD_PAD + HEAD_DIM].set(
            w[:, hd * HEAD_DIM:(hd + 1) * HEAD_DIM])
    return out


def _pad_head_rows(w):
    """[H, H] -> [NUM_HEADS*128, H]: each head's 32 input rows placed at the
    start of its 128-row slot (remaining rows zero)."""
    out = jnp.zeros((NUM_HEADS * HEAD_PAD, H), w.dtype)
    for hd in range(NUM_HEADS):
        out = out.at[hd * HEAD_PAD:hd * HEAD_PAD + HEAD_DIM, :].set(
            w[hd * HEAD_DIM:(hd + 1) * HEAD_DIM, :])
    return out


def init_params(key):
    keys = iter(jax.random.split(key, 128))

    def nrm(shape, scale=0.02):
        return (scale * jax.random.normal(next(keys), shape)).astype(jnp.float32)

    ones = lambda s: jnp.ones(s, jnp.float32)
    zeros = lambda s: jnp.zeros(s, jnp.float32)

    params = {
        'word_emb': nrm((VOCAB, H)),
        'pos_emb': nrm((MAX_POS, H)),
        'type_emb': nrm((2, H)),
        'emb_ln_g': ones((1, H)), 'emb_ln_b': zeros((1, H)),
        'proj_w': nrm((H, VOCAB)).astype(jnp.bfloat16),   # bf16 matmul weight
        'proj_b': zeros((1, VOCAB)),
    }

    scale = 1.0 / math.sqrt(HEAD_DIM)   # folded into the Q projection at init
    wqkv, bqkv, wo, bo = [], [], [], []
    ln1g, ln1b, w1, b1, w2, b2, ln2g, ln2b = ([] for _ in range(8))
    for _ in range(NUM_LAYERS):
        wq = nrm((H, H)) * scale
        wk = nrm((H, H))
        wv = nrm((H, H))
        # head-padded, 128-lane-aligned QKV column layout: [H, 3*NH*128]
        wqkv.append(jnp.concatenate(
            [_pad_head_cols(wq), _pad_head_cols(wk), _pad_head_cols(wv)], axis=1))
        bqkv.append(zeros((1, 3 * NUM_HEADS * HEAD_PAD)))   # zero biases (padded)
        # row-padded output projection: [NH*128, H]
        wo.append(_pad_head_rows(nrm((H, H)))); bo.append(zeros((1, H)))
        ln1g.append(ones((1, H))); ln1b.append(zeros((1, H)))
        w1.append(nrm((H, INTER))); b1.append(zeros((1, INTER)))
        w2.append(nrm((INTER, H))); b2.append(zeros((1, H)))
        ln2g.append(ones((1, H))); ln2b.append(zeros((1, H)))

    params.update({
        'wqkv': jnp.stack(wqkv).astype(jnp.bfloat16),
        'bqkv': jnp.stack(bqkv),
        'wo': jnp.stack(wo).astype(jnp.bfloat16),
        'bo': jnp.stack(bo),
        'ln1g': jnp.stack(ln1g), 'ln1b': jnp.stack(ln1b),
        'w1': jnp.stack(w1).astype(jnp.bfloat16), 'b1': jnp.stack(b1),
        'w2': jnp.stack(w2).astype(jnp.bfloat16), 'b2': jnp.stack(b2),
        'ln2g': jnp.stack(ln2g), 'ln2b': jnp.stack(ln2b),
    })

    # spindle noise schedule buffer (registered buffer in the PyTorch module;
    # unused by forward, kept for fidelity)
    t_arr = jnp.arange(1, DIFFUSION_STEPS + 1, dtype=jnp.float32)
    params['alpha'] = (1.0 - t_arr / DIFFUSION_STEPS
                       - LAMBDA_VAL * jnp.sin(t_arr * jnp.pi / DIFFUSION_STEPS))
    return params


def diffusion_bert_forward(params, x_t, t=None):
    if x_t.ndim == 1:
        x_t = x_t[None, :]
    if x_t.ndim != 2:
        raise ValueError(f'Input shape must be 2D [batch_size, seq_len], got {x_t.shape}')

    # time-agnostic decoding: t is estimated from the mask ratio, but (as in the
    # PyTorch forward) it does not influence the output.
    if t is None:
        mask_ratio = jnp.mean((x_t == 0).astype(jnp.float32))
        t = jnp.round((1.0 - mask_ratio) * DIFFUSION_STEPS).astype(jnp.int32)

    bsz, seq = x_t.shape
    n = bsz * seq

    # additive attention bias over flattened [B*S] keys:
    #   -1e9 for pad keys (x_t == 0) and for cross-batch key/query pairs,
    # so one [N, N] softmax reproduces per-batch attention exactly.
    # NOTE: O(N^2) — re-tile per batch before scaling beyond toy sizes.
    pad_bias = jnp.where((x_t == 0).reshape(1, n), -1e9, 0.0)          # [1, N]
    bids = jnp.repeat(jnp.arange(bsz), seq)
    block_bias = jnp.where(bids[:, None] == bids[None, :], 0.0, -1e9)  # [N, N]
    bias = (block_bias + pad_bias).astype(jnp.float32)

    # --- embeddings (plain-JAX glue; fused by XLA under jit; LN fused in kernel) ---
    emb = (params['word_emb'][x_t]
           + params['pos_emb'][:seq][None, :, :]
           + params['type_emb'][0][None, None, :])
    h0 = emb.reshape(n, H).astype(jnp.float32)

    # --- all encoder layers + vocab projection in ONE Pallas call ---
    logits = run_model(h0, bias, params)
    return logits.reshape(bsz, seq, VOCAB)


# ----------------------------- main -------------------------------------------
if __name__ == "__main__":
    key = jax.random.PRNGKey(0)
    pkey, xkey = jax.random.split(key)
    params = init_params(pkey)

    x_t = jax.random.randint(xkey, (B, S), 0, VOCAB, dtype=jnp.int32)
    x_t = x_t.at[0, :2].set(0)     # a few "masked" (id 0 / pad) tokens

    fwd = jax.jit(diffusion_bert_forward)
    logits = fwd(params, x_t)
    jax.block_until_ready(logits)

    assert logits.shape == (B, S, VOCAB), logits.shape
    assert logits.dtype == jnp.float32
    assert bool(jnp.all(jnp.isfinite(logits)))
    print("KERNEL_OK")
</pallas_src>

<mosaic_0001>
module attributes {stable_mosaic.version = 11 : i64} {
  func.func @encoder_kernel(%arg0: i32, %arg1: memref<16x128xf32, #tpu.memory_space<vmem>>, %arg2: memref<16x16xf32, #tpu.memory_space<vmem>>, %arg3: memref<1x128xf32, #tpu.memory_space<vmem>>, %arg4: memref<1x128xf32, #tpu.memory_space<vmem>>, %arg5: memref<128x512xbf16, #tpu.memory_space<vmem>>, %arg6: memref<1x512xf32, #tpu.memory_space<vmem>>, %arg7: memref<1x128x1536xbf16, #tpu.memory_space<vmem>>, %arg8: memref<1x1x1536xf32, #tpu.memory_space<vmem>>, %arg9: memref<1x512x128xbf16, #tpu.memory_space<vmem>>, %arg10: memref<1x1x128xf32, #tpu.memory_space<vmem>>, %arg11: memref<1x1x128xf32, #tpu.memory_space<vmem>>, %arg12: memref<1x1x128xf32, #tpu.memory_space<vmem>>, %arg13: memref<1x128x256xbf16, #tpu.memory_space<vmem>>, %arg14: memref<1x1x256xf32, #tpu.memory_space<vmem>>, %arg15: memref<1x256x128xbf16, #tpu.memory_space<vmem>>, %arg16: memref<1x1x128xf32, #tpu.memory_space<vmem>>, %arg17: memref<1x1x128xf32, #tpu.memory_space<vmem>>, %arg18: memref<1x1x128xf32, #tpu.memory_space<vmem>>, %arg19: memref<16x128xf32, #tpu.memory_space<vmem>>, %arg20: memref<16x512xf32, #tpu.memory_space<vmem>>) attributes {dimension_semantics = [#tpu.dimension_semantics<arbitrary>], iteration_bounds = array<i64: 2>, scalar_prefetch = 0 : i64, scratch_operands = 0 : i64, tpu.core_type = #tpu.core_type<tc>, window_params = [{pipeline_mode = #tpu.pipeline_mode<synchronous>, transform_indices = @transform_0, window_bounds = array<i64: 16, 128>}, {pipeline_mode = #tpu.pipeline_mode<synchronous>, transform_indices = @transform_1, window_bounds = array<i64: 16, 16>}, {pipeline_mode = #tpu.pipeline_mode<synchronous>, transform_indices = @transform_2, window_bounds = array<i64: 1, 128>}, {pipeline_mode = #tpu.pipeline_mode<synchronous>, transform_indices = @transform_3, window_bounds = array<i64: 1, 128>}, {pipeline_mode = #tpu.pipeline_mode<synchronous>, transform_indices = @transform_4, window_bounds = array<i64: 128, 512>}, {pipeline_mode = #tpu.pipeline_mode<synchronous>, transform_indices = @transform_5, window_bounds = array<i64: 1, 512>}, {transform_indices = @transform_6, window_bounds = array<i64: 1, 128, 1536>}, {transform_indices = @transform_7, window_bounds = array<i64: 1, 1, 1536>}, {transform_indices = @transform_8, window_bounds = array<i64: 1, 512, 128>}, {transform_indices = @transform_9, window_bounds = array<i64: 1, 1, 128>}, {transform_indices = @transform_10, window_bounds = array<i64: 1, 1, 128>}, {transform_indices = @transform_11, window_bounds = array<i64: 1, 1, 128>}, {transform_indices = @transform_12, window_bounds = array<i64: 1, 128, 256>}, {transform_indices = @transform_13, window_bounds = array<i64: 1, 1, 256>}, {transform_indices = @transform_14, window_bounds = array<i64: 1, 256, 128>}, {transform_indices = @transform_15, window_bounds = array<i64: 1, 1, 128>}, {transform_indices = @transform_16, window_bounds = array<i64: 1, 1, 128>}, {transform_indices = @transform_17, window_bounds = array<i64: 1, 1, 128>}, {pipeline_mode = #tpu.pipeline_mode<synchronous>, transform_indices = @transform_18, window_bounds = array<i64: 16, 128>}, {pipeline_mode = #tpu.pipeline_mode<synchronous>, transform_indices = @transform_19, window_bounds = array<i64: 16, 512>}]} {
    %c0_i32 = arith.constant 0 : i32
    %0 = arith.cmpi eq, %arg0, %c0_i32 : i32
    %1 = arith.extui %0 : i1 to i32
    %c0_i32_0 = arith.constant 0 : i32
    %2 = arith.cmpi ne, %1, %c0_i32_0 : i32
    scf.if %2 {
      %c0_76 = arith.constant 0 : index
      %c0_77 = arith.constant 0 : index
      %178 = vector.load %arg1[%c0_76, %c0_77] : memref<16x128xf32, #tpu.memory_space<vmem>>, vector<16x128xf32>
      %c0_78 = arith.constant 0 : index
      %c0_79 = arith.constant 0 : index
      %179 = vector.load %arg3[%c0_78, %c0_79] : memref<1x128xf32, #tpu.memory_space<vmem>>, vector<1x128xf32>
      %c0_80 = arith.constant 0 : index
      %c0_81 = arith.constant 0 : index
      %180 = vector.load %arg4[%c0_80, %c0_81] : memref<1x128xf32, #tpu.memory_space<vmem>>, vector<1x128xf32>
      %cst_82 = arith.constant dense<0.000000e+00> : vector<16xf32>
      %181 = vector.multi_reduction <add>, %178, %cst_82 [1] : vector<16x128xf32> to vector<16xf32>
      %182 = vector.shape_cast %181 : vector<16xf32> to vector<16x1xf32>
      %cst_83 = arith.constant 1.280000e+02 : f32
      %183 = vector.broadcast %cst_83 : f32 to vector<16x1xf32>
      %184 = arith.divf %182, %183 : vector<16x1xf32>
      %185 = vector.broadcast %184 : vector<16x1xf32> to vector<16x128xf32>
      %186 = arith.subf %178, %185 : vector<16x128xf32>
      %187 = arith.mulf %186, %186 : vector<16x128xf32>
      %cst_84 = arith.constant dense<0.000000e+00> : vector<16xf32>
      %188 = vector.multi_reduction <add>, %187, %cst_84 [1] : vector<16x128xf32> to vector<16xf32>
      %189 = vector.shape_cast %188 : vector<16xf32> to vector<16x1xf32>
      %cst_85 = arith.constant 1.280000e+02 : f32
      %190 = vector.broadcast %cst_85 : f32 to vector<16x1xf32>
      %191 = arith.divf %189, %190 : vector<16x1xf32>
      %192 = vector.broadcast %184 : vector<16x1xf32> to vector<16x128xf32>
      %193 = arith.subf %178, %192 : vector<16x128xf32>
      %cst_86 = arith.constant 9.99999996E-13 : f32
      %194 = vector.broadcast %cst_86 : f32 to vector<16x1xf32>
      %195 = arith.addf %191, %194 : vector<16x1xf32>
      %196 = math.rsqrt %195 : vector<16x1xf32>
      %197 = vector.broadcast %196 : vector<16x1xf32> to vector<16x128xf32>
      %198 = arith.mulf %193, %197 : vector<16x128xf32>
      %199 = vector.broadcast %179 : vector<1x128xf32> to vector<16x128xf32>
      %200 = arith.mulf %198, %199 : vector<16x128xf32>
      %201 = vector.broadcast %180 : vector<1x128xf32> to vector<16x128xf32>
      %202 = arith.addf %200, %201 : vector<16x128xf32>
      %c0_87 = arith.constant 0 : index
      %c0_88 = arith.constant 0 : index
      %203 = vector.load %arg19[%c0_87, %c0_88] : memref<16x128xf32, #tpu.memory_space<vmem>>, vector<16x128xf32>
      tpu.vector_store %arg19[%c0_87, %c0_88], %202 {strides = array<i32>} : memref<16x128xf32, #tpu.memory_space<vmem>>, vector<16x128xf32>,
    } else {
    }
    %c0 = arith.constant 0 : index
    %c0_1 = arith.constant 0 : index
    %3 = vector.load %arg19[%c0, %c0_1] : memref<16x128xf32, #tpu.memory_space<vmem>>, vector<16x128xf32>
    %c0_2 = arith.constant 0 : index
    %c0_3 = arith.constant 0 : index
    %4 = vector.load %arg2[%c0_2, %c0_3] : memref<16x16xf32, #tpu.memory_space<vmem>>, vector<16x16xf32>
    %5 = arith.truncf %3 : vector<16x128xf32> to vector<16x128xbf16>
    %c0_4 = arith.constant 0 : index
    %c0_5 = arith.constant 0 : index
    %c0_6 = arith.constant 0 : index
    %6 = vector.load %arg7[%c0_4, %c0_5, %c0_6] : memref<1x128x1536xbf16, #tpu.memory_space<vmem>>, vector<1x128x1536xbf16>
    %7 = vector.shape_cast %6 : vector<1x128x1536xbf16> to vector<128x1536xbf16>
    %cst = arith.constant dense<0.000000e+00> : vector<16x1536xf32>
    %8 = tpu.matmul %5, %7, %cst {dimension_numbers = #tpu.dot_dimension_numbers<[1], [0], [0], [1], [0, 0, 1, 1], [], []>} : vector<16x128xbf16>, vector<128x1536xbf16>, vector<16x1536xf32> -> vector<16x1536xf32>
    %c0_7 = arith.constant 0 : index
    %c0_8 = arith.constant 0 : index
    %c0_9 = arith.constant 0 : index
    %9 = vector.load %arg8[%c0_7, %c0_8, %c0_9] : memref<1x1x1536xf32, #tpu.memory_space<vmem>>, vector<1x1x1536xf32>
    %10 = vector.shape_cast %9 : vector<1x1x1536xf32> to vector<1x1536xf32>
    %11 = vector.broadcast %10 : vector<1x1536xf32> to vector<16x1536xf32>
    %12 = arith.addf %8, %11 : vector<16x1536xf32>
    %13 = arith.truncf %12 : vector<16x1536xf32> to vector<16x1536xbf16>
    %14 = vector.extract_strided_slice %13 {offsets = [0, 0], sizes = [16, 128], strides = [1, 1]} : vector<16x1536xbf16> to vector<16x128xbf16>
    %15 = vector.extract_strided_slice %13 {offsets = [0, 512], sizes = [16, 128], strides = [1, 1]} : vector<16x1536xbf16> to vector<16x128xbf16>
    %16 = vector.extract_strided_slice %13 {offsets = [0, 1024], sizes = [16, 128], strides = [1, 1]} : vector<16x1536xbf16> to vector<16x128xbf16>
    %cst_10 = arith.constant dense<0.000000e+00> : vector<16x16xf32>
    %17 = tpu.matmul %14, %15, %cst_10 {dimension_numbers = #tpu.dot_dimension_numbers<[1], [1], [0], [0], [0, 0, 1, 0], [], []>} : vector<16x128xbf16>, vector<16x128xbf16>, vector<16x16xf32> -> vector<16x16xf32>
    %18 = arith.addf %17, %4 : vector<16x16xf32>
    %cst_11 = arith.constant dense<0xFF800000> : vector<16xf32>
    %19 = vector.multi_reduction <maximumf>, %18, %cst_11 [1] : vector<16x16xf32> to vector<16xf32>
    %20 = vector.shape_cast %19 : vector<16xf32> to vector<16x1xf32>
    %21 = vector.broadcast %20 : vector<16x1xf32> to vector<16x16xf32>
    %22 = arith.subf %18, %21 : vector<16x16xf32>
    %23 = math.exp %22 : vector<16x16xf32>
    %cst_12 = arith.constant dense<0.000000e+00> : vector<16xf32>
    %24 = vector.multi_reduction <add>, %23, %cst_12 [1] : vector<16x16xf32> to vector<16xf32>
    %25 = vector.shape_cast %24 : vector<16xf32> to vector<16x1xf32>
    %26 = tpu.reciprocal %25 {approx = true} : vector<16x1xf32> -> vector<16x1xf32>
    %27 = vector.broadcast %26 : vector<16x1xf32> to vector<16x16xf32>
    %28 = arith.mulf %23, %27 : vector<16x16xf32>
    %29 = arith.truncf %28 : vector<16x16xf32> to vector<16x16xbf16>
    %cst_13 = arith.constant dense<0.000000e+00> : vector<16x128xf32>
    %30 = tpu.matmul %29, %16, %cst_13 {dimension_numbers = #tpu.dot_dimension_numbers<[1], [0], [0], [1], [0, 0, 1, 1], [], []>} : vector<16x16xbf16>, vector<16x128xbf16>, vector<16x128xf32> -> vector<16x128xf32>
    %31 = vector.extract_strided_slice %13 {offsets = [0, 128], sizes = [16, 128], strides = [1, 1]} : vector<16x1536xbf16> to vector<16x128xbf16>
    %32 = vector.extract_strided_slice %13 {offsets = [0, 640], sizes = [16, 128], strides = [1, 1]} : vector<16x1536xbf16> to vector<16x128xbf16>
    %33 = vector.extract_strided_slice %13 {offsets = [0, 1152], sizes = [16, 128], strides = [1, 1]} : vector<16x1536xbf16> to vector<16x128xbf16>
    %cst_14 = arith.constant dense<0.000000e+00> : vector<16x16xf32>
    %34 = tpu.matmul %31, %32, %cst_14 {dimension_numbers = #tpu.dot_dimension_numbers<[1], [1], [0], [0], [0, 0, 1, 0], [], []>} : vector<16x128xbf16>, vector<16x128xbf16>, vector<16x16xf32> -> vector<16x16xf32>
    %35 = arith.addf %34, %4 : vector<16x16xf32>
    %cst_15 = arith.constant dense<0xFF800000> : vector<16xf32>
    %36 = vector.multi_reduction <maximumf>, %35, %cst_15 [1] : vector<16x16xf32> to vector<16xf32>
    %37 = vector.shape_cast %36 : vector<16xf32> to vector<16x1xf32>
    %38 = vector.broadcast %37 : vector<16x1xf32> to vector<16x16xf32>
    %39 = arith.subf %35, %38 : vector<16x16xf32>
    %40 = math.exp %39 : vector<16x16xf32>
    %cst_16 = arith.constant dense<0.000000e+00> : vector<16xf32>
    %41 = vector.multi_reduction <add>, %40, %cst_16 [1] : vector<16x16xf32> to vector<16xf32>
    %42 = vector.shape_cast %41 : vector<16xf32> to vector<16x1xf32>
    %43 = tpu.reciprocal %42 {approx = true} : vector<16x1xf32> -> vector<16x1xf32>
    %44 = vector.broadcast %43 : vector<16x1xf32> to vector<16x16xf32>
    %45 = arith.mulf %40, %44 : vector<16x16xf32>
    %46 = arith.truncf %45 : vector<16x16xf32> to vector<16x16xbf16>
    %cst_17 = arith.constant dense<0.000000e+00> : vector<16x128xf32>
    %47 = tpu.matmul %46, %33, %cst_17 {dimension_numbers = #tpu.dot_dimension_numbers<[1], [0], [0], [1], [0, 0, 1, 1], [], []>} : vector<16x16xbf16>, vector<16x128xbf16>, vector<16x128xf32> -> vector<16x128xf32>
    %48 = vector.extract_strided_slice %13 {offsets = [0, 256], sizes = [16, 128], strides = [1, 1]} : vector<16x1536xbf16> to vector<16x128xbf16>
    %49 = vector.extract_strided_slice %13 {offsets = [0, 768], sizes = [16, 128], strides = [1, 1]} : vector<16x1536xbf16> to vector<16x128xbf16>
    %50 = vector.extract_strided_slice %13 {offsets = [0, 1280], sizes = [16, 128], strides = [1, 1]} : vector<16x1536xbf16> to vector<16x128xbf16>
    %cst_18 = arith.constant dense<0.000000e+00> : vector<16x16xf32>
    %51 = tpu.matmul %48, %49, %cst_18 {dimension_numbers = #tpu.dot_dimension_numbers<[1], [1], [0], [0], [0, 0, 1, 0], [], []>} : vector<16x128xbf16>, vector<16x128xbf16>, vector<16x16xf32> -> vector<16x16xf32>
    %52 = arith.addf %51, %4 : vector<16x16xf32>
    %cst_19 = arith.constant dense<0xFF800000> : vector<16xf32>
    %53 = vector.multi_reduction <maximumf>, %52, %cst_19 [1] : vector<16x16xf32> to vector<16xf32>
    %54 = vector.shape_cast %53 : vector<16xf32> to vector<16x1xf32>
    %55 = vector.broadcast %54 : vector<16x1xf32> to vector<16x16xf32>
    %56 = arith.subf %52, %55 : vector<16x16xf32>
    %57 = math.exp %56 : vector<16x16xf32>
    %cst_20 = arith.constant dense<0.000000e+00> : vector<16xf32>
    %58 = vector.multi_reduction <add>, %57, %cst_20 [1] : vector<16x16xf32> to vector<16xf32>
    %59 = vector.shape_cast %58 : vector<16xf32> to vector<16x1xf32>
    %60 = tpu.reciprocal %59 {approx = true} : vector<16x1xf32> -> vector<16x1xf32>
    %61 = vector.broadcast %60 : vector<16x1xf32> to vector<16x16xf32>
    %62 = arith.mulf %57, %61 : vector<16x16xf32>
    %63 = arith.truncf %62 : vector<16x16xf32> to vector<16x16xbf16>
    %cst_21 = arith.constant dense<0.000000e+00> : vector<16x128xf32>
    %64 = tpu.matmul %63, %50, %cst_21 {dimension_numbers = #tpu.dot_dimension_numbers<[1], [0], [0], [1], [0, 0, 1, 1], [], []>} : vector<16x16xbf16>, vector<16x128xbf16>, vector<16x128xf32> -> vector<16x128xf32>
    %65 = vector.extract_strided_slice %13 {offsets = [0, 384], sizes = [16, 128], strides = [1, 1]} : vector<16x1536xbf16> to vector<16x128xbf16>
    %66 = vector.extract_strided_slice %13 {offsets = [0, 896], sizes = [16, 128], strides = [1, 1]} : vector<16x1536xbf16> to vector<16x128xbf16>
    %67 = vector.extract_strided_slice %13 {offsets = [0, 1408], sizes = [16, 128], strides = [1, 1]} : vector<16x1536xbf16> to vector<16x128xbf16>
    %cst_22 = arith.constant dense<0.000000e+00> : vector<16x16xf32>
    %68 = tpu.matmul %65, %66, %cst_22 {dimension_numbers = #tpu.dot_dimension_numbers<[1], [1], [0], [0], [0, 0, 1, 0], [], []>} : vector<16x128xbf16>, vector<16x128xbf16>, vector<16x16xf32> -> vector<16x16xf32>
    %69 = arith.addf %68, %4 : vector<16x16xf32>
    %cst_23 = arith.constant dense<0xFF800000> : vector<16xf32>
    %70 = vector.multi_reduction <maximumf>, %69, %cst_23 [1] : vector<16x16xf32> to vector<16xf32>
    %71 = vector.shape_cast %70 : vector<16xf32> to vector<16x1xf32>
    %72 = vector.broadcast %71 : vector<16x1xf32> to vector<16x16xf32>
    %73 = arith.subf %69, %72 : vector<16x16xf32>
    %74 = math.exp %73 : vector<16x16xf32>
    %cst_24 = arith.constant dense<0.000000e+00> : vector<16xf32>
    %75 = vector.multi_reduction <add>, %74, %cst_24 [1] : vector<16x16xf32> to vector<16xf32>
    %76 = vector.shape_cast %75 : vector<16xf32> to vector<16x1xf32>
    %77 = tpu.reciprocal %76 {approx = true} : vector<16x1xf32> -> vector<16x1xf32>
    %78 = vector.broadcast %77 : vector<16x1xf32> to vector<16x16xf32>
    %79 = arith.mulf %74, %78 : vector<16x16xf32>
    %80 = arith.truncf %79 : vector<16x16xf32> to vector<16x16xbf16>
    %cst_25 = arith.constant dense<0.000000e+00> : vector<16x128xf32>
    %81 = tpu.matmul %80, %67, %cst_25 {dimension_numbers = #tpu.dot_dimension_numbers<[1], [0], [0], [1], [0, 0, 1, 1], [], []>} : vector<16x16xbf16>, vector<16x128xbf16>, vector<16x128xf32> -> vector<16x128xf32>
    %82 = tpu.concatenate %30, %47, %64, %81 in 1 : vector<16x128xf32>, vector<16x128xf32>, vector<16x128xf32>, vector<16x128xf32> -> vector<16x512xf32>
    %83 = arith.truncf %82 : vector<16x512xf32> to vector<16x512xbf16>
    %c0_26 = arith.constant 0 : index
    %c0_27 = arith.constant 0 : index
    %c0_28 = arith.constant 0 : index
    %84 = vector.load %arg9[%c0_26, %c0_27, %c0_28] : memref<1x512x128xbf16, #tpu.memory_space<vmem>>, vector<1x512x128xbf16>
    %85 = vector.shape_cast %84 : vector<1x512x128xbf16> to vector<512x128xbf16>
    %cst_29 = arith.constant dense<0.000000e+00> : vector<16x128xf32>
    %86 = tpu.matmul %83, %85, %cst_29 {dimension_numbers = #tpu.dot_dimension_numbers<[1], [0], [0], [1], [0, 0, 1, 1], [], []>} : vector<16x512xbf16>, vector<512x128xbf16>, vector<16x128xf32> -> vector<16x128xf32>
    %c0_30 = arith.constant 0 : index
    %c0_31 = arith.constant 0 : index
    %c0_32 = arith.constant 0 : index
    %87 = vector.load %arg10[%c0_30, %c0_31, %c0_32] : memref<1x1x128xf32, #tpu.memory_space<vmem>>, vector<1x1x128xf32>
    %88 = vector.shape_cast %87 : vector<1x1x128xf32> to vector<1x128xf32>
    %89 = vector.broadcast %88 : vector<1x128xf32> to vector<16x128xf32>
    %90 = arith.addf %86, %89 : vector<16x128xf32>
    %91 = arith.addf %90, %3 : vector<16x128xf32>
    %c0_33 = arith.constant 0 : index
    %c0_34 = arith.constant 0 : index
    %c0_35 = arith.constant 0 : index
    %92 = vector.load %arg11[%c0_33, %c0_34, %c0_35] : memref<1x1x128xf32, #tpu.memory_space<vmem>>, vector<1x1x128xf32>
    %93 = vector.shape_cast %92 : vector<1x1x128xf32> to vector<1x128xf32>
    %c0_36 = arith.constant 0 : index
    %c0_37 = arith.constant 0 : index
    %c0_38 = arith.constant 0 : index
    %94 = vector.load %arg12[%c0_36, %c0_37, %c0_38] : memref<1x1x128xf32, #tpu.memory_space<vmem>>, vector<1x1x128xf32>
    %95 = vector.shape_cast %94 : vector<1x1x128xf32> to vector<1x128xf32>
    %cst_39 = arith.constant dense<0.000000e+00> : vector<16xf32>
    %96 = vector.multi_reduction <add>, %91, %cst_39 [1] : vector<16x128xf32> to vector<16xf32>
    %97 = vector.shape_cast %96 : vector<16xf32> to vector<16x1xf32>
    %cst_40 = arith.constant 1.280000e+02 : f32
    %98 = vector.broadcast %cst_40 : f32 to vector<16x1xf32>
    %99 = arith.divf %97, %98 : vector<16x1xf32>
    %100 = vector.broadcast %99 : vector<16x1xf32> to vector<16x128xf32>
    %101 = arith.subf %91, %100 : vector<16x128xf32>
    %102 = arith.mulf %101, %101 : vector<16x128xf32>
    %cst_41 = arith.constant dense<0.000000e+00> : vector<16xf32>
    %103 = vector.multi_reduction <add>, %102, %cst_41 [1] : vector<16x128xf32> to vector<16xf32>
    %104 = vector.shape_cast %103 : vector<16xf32> to vector<16x1xf32>
    %cst_42 = arith.constant 1.280000e+02 : f32
    %105 = vector.broadcast %cst_42 : f32 to vector<16x1xf32>
    %106 = arith.divf %104, %105 : vector<16x1xf32>
    %107 = vector.broadcast %99 : vector<16x1xf32> to vector<16x128xf32>
    %108 = arith.subf %91, %107 : vector<16x128xf32>
    %cst_43 = arith.constant 9.99999996E-13 : f32
    %109 = vector.broadcast %cst_43 : f32 to vector<16x1xf32>
    %110 = arith.addf %106, %109 : vector<16x1xf32>
    %111 = math.rsqrt %110 : vector<16x1xf32>
    %112 = vector.broadcast %111 : vector<16x1xf32> to vector<16x128xf32>
    %113 = arith.mulf %108, %112 : vector<16x128xf32>
    %114 = vector.broadcast %93 : vector<1x128xf32> to vector<16x128xf32>
    %115 = arith.mulf %113, %114 : vector<16x128xf32>
    %116 = vector.broadcast %95 : vector<1x128xf32> to vector<16x128xf32>
    %117 = arith.addf %115, %116 : vector<16x128xf32>
    %118 = arith.truncf %117 : vector<16x128xf32> to vector<16x128xbf16>
    %c0_44 = arith.constant 0 : index
    %c0_45 = arith.constant 0 : index
    %c0_46 = arith.constant 0 : index
    %119 = vector.load %arg13[%c0_44, %c0_45, %c0_46] : memref<1x128x256xbf16, #tpu.memory_space<vmem>>, vector<1x128x256xbf16>
    %120 = vector.shape_cast %119 : vector<1x128x256xbf16> to vector<128x256xbf16>
    %cst_47 = arith.constant dense<0.000000e+00> : vector<16x256xf32>
    %121 = tpu.matmul %118, %120, %cst_47 {dimension_numbers = #tpu.dot_dimension_numbers<[1], [0], [0], [1], [0, 0, 1, 1], [], []>} : vector<16x128xbf16>, vector<128x256xbf16>, vector<16x256xf32> -> vector<16x256xf32>
    %c0_48 = arith.constant 0 : index
    %c0_49 = arith.constant 0 : index
    %c0_50 = arith.constant 0 : index
    %122 = vector.load %arg14[%c0_48, %c0_49, %c0_50] : memref<1x1x256xf32, #tpu.memory_space<vmem>>, vector<1x1x256xf32>
    %123 = vector.shape_cast %122 : vector<1x1x256xf32> to vector<1x256xf32>
    %124 = vector.broadcast %123 : vector<1x256xf32> to vector<16x256xf32>
    %125 = arith.addf %121, %124 : vector<16x256xf32>
    %126 = arith.mulf %125, %125 : vector<16x256xf32>
    %127 = arith.mulf %125, %126 : vector<16x256xf32>
    %cst_51 = arith.constant 4.471500e-02 : f32
    %128 = vector.broadcast %cst_51 : f32 to vector<16x256xf32>
    %129 = arith.mulf %128, %127 : vector<16x256xf32>
    %130 = arith.addf %125, %129 : vector<16x256xf32>
    %cst_52 = arith.constant 0.797884583 : f32
    %131 = vector.broadcast %cst_52 : f32 to vector<16x256xf32>
    %132 = arith.mulf %131, %130 : vector<16x256xf32>
    %133 = math.tanh %132 : vector<16x256xf32>
    %cst_53 = arith.constant 1.000000e+00 : f32
    %134 = vector.broadcast %cst_53 : f32 to vector<16x256xf32>
    %135 = arith.addf %134, %133 : vector<16x256xf32>
    %cst_54 = arith.constant 5.000000e-01 : f32
    %136 = vector.broadcast %cst_54 : f32 to vector<16x256xf32>
    %137 = arith.mulf %136, %135 : vector<16x256xf32>
    %138 = arith.mulf %125, %137 : vector<16x256xf32>
    %139 = arith.truncf %138 : vector<16x256xf32> to vector<16x256xbf16>
    %c0_55 = arith.constant 0 : index
    %c0_56 = arith.constant 0 : index
    %c0_57 = arith.constant 0 : index
    %140 = vector.load %arg15[%c0_55, %c0_56, %c0_57] : memref<1x256x128xbf16, #tpu.memory_space<vmem>>, vector<1x256x128xbf16>
    %141 = vector.shape_cast %140 : vector<1x256x128xbf16> to vector<256x128xbf16>
    %cst_58 = arith.constant dense<0.000000e+00> : vector<16x128xf32>
    %142 = tpu.matmul %139, %141, %cst_58 {dimension_numbers = #tpu.dot_dimension_numbers<[1], [0], [0], [1], [0, 0, 1, 1], [], []>} : vector<16x256xbf16>, vector<256x128xbf16>, vector<16x128xf32> -> vector<16x128xf32>
    %c0_59 = arith.constant 0 : index
    %c0_60 = arith.constant 0 : index
    %c0_61 = arith.constant 0 : index
    %143 = vector.load %arg16[%c0_59, %c0_60, %c0_61] : memref<1x1x128xf32, #tpu.memory_space<vmem>>, vector<1x1x128xf32>
    %144 = vector.shape_cast %143 : vector<1x1x128xf32> to vector<1x128xf32>
    %145 = vector.broadcast %144 : vector<1x128xf32> to vector<16x128xf32>
    %146 = arith.addf %142, %145 : vector<16x128xf32>
    %147 = arith.addf %146, %117 : vector<16x128xf32>
    %c0_62 = arith.constant 0 : index
    %c0_63 = arith.constant 0 : index
    %c0_64 = arith.constant 0 : index
    %148 = vector.load %arg17[%c0_62, %c0_63, %c0_64] : memref<1x1x128xf32, #tpu.memory_space<vmem>>, vector<1x1x128xf32>
    %149 = vector.shape_cast %148 : vector<1x1x128xf32> to vector<1x128xf32>
    %c0_65 = arith.constant 0 : index
    %c0_66 = arith.constant 0 : index
    %c0_67 = arith.constant 0 : index
    %150 = vector.load %arg18[%c0_65, %c0_66, %c0_67] : memref<1x1x128xf32, #tpu.memory_space<vmem>>, vector<1x1x128xf32>
    %151 = vector.shape_cast %150 : vector<1x1x128xf32> to vector<1x128xf32>
    %cst_68 = arith.constant dense<0.000000e+00> : vector<16xf32>
    %152 = vector.multi_reduction <add>, %147, %cst_68 [1] : vector<16x128xf32> to vector<16xf32>
    %153 = vector.shape_cast %152 : vector<16xf32> to vector<16x1xf32>
    %cst_69 = arith.constant 1.280000e+02 : f32
    %154 = vector.broadcast %cst_69 : f32 to vector<16x1xf32>
    %155 = arith.divf %153, %154 : vector<16x1xf32>
    %156 = vector.broadcast %155 : vector<16x1xf32> to vector<16x128xf32>
    %157 = arith.subf %147, %156 : vector<16x128xf32>
    %158 = arith.mulf %157, %157 : vector<16x128xf32>
    %cst_70 = arith.constant dense<0.000000e+00> : vector<16xf32>
    %159 = vector.multi_reduction <add>, %158, %cst_70 [1] : vector<16x128xf32> to vector<16xf32>
    %160 = vector.shape_cast %159 : vector<16xf32> to vector<16x1xf32>
    %cst_71 = arith.constant 1.280000e+02 : f32
    %161 = vector.broadcast %cst_71 : f32 to vector<16x1xf32>
    %162 = arith.divf %160, %161 : vector<16x1xf32>
    %163 = vector.broadcast %155 : vector<16x1xf32> to vector<16x128xf32>
    %164 = arith.subf %147, %163 : vector<16x128xf32>
    %cst_72 = arith.constant 9.99999996E-13 : f32
    %165 = vector.broadcast %cst_72 : f32 to vector<16x1xf32>
    %166 = arith.addf %162, %165 : vector<16x1xf32>
    %167 = math.rsqrt %166 : vector<16x1xf32>
    %168 = vector.broadcast %167 : vector<16x1xf32> to vector<16x128xf32>
    %169 = arith.mulf %164, %168 : vector<16x128xf32>
    %170 = vector.broadcast %149 : vector<1x128xf32> to vector<16x128xf32>
    %171 = arith.mulf %169, %170 : vector<16x128xf32>
    %172 = vector.broadcast %151 : vector<1x128xf32> to vector<16x128xf32>
    %173 = arith.addf %171, %172 : vector<16x128xf32>
    %c0_73 = arith.constant 0 : index
    %c0_74 = arith.constant 0 : index
    %174 = vector.load %arg19[%c0_73, %c0_74] : memref<16x128xf32, #tpu.memory_space<vmem>>, vector<16x128xf32>
    tpu.vector_store %arg19[%c0_73, %c0_74], %173 {strides = array<i32>} : memref<16x128xf32, #tpu.memory_space<vmem>>, vector<16x128xf32>,
    %c1_i32 = arith.constant 1 : i32
    %175 = arith.cmpi eq, %arg0, %c1_i32 : i32
    %176 = arith.extui %175 : i1 to i32
    %c0_i32_75 = arith.constant 0 : i32
    %177 = arith.cmpi ne, %176, %c0_i32_75 : i32
    scf.if %177 {
      %178 = arith.truncf %173 : vector<16x128xf32> to vector<16x128xbf16>
      %c0_76 = arith.constant 0 : index
      %c0_77 = arith.constant 0 : index
      %179 = vector.load %arg5[%c0_76, %c0_77] : memref<128x512xbf16, #tpu.memory_space<vmem>>, vector<128x512xbf16>
      %cst_78 = arith.constant dense<0.000000e+00> : vector<16x512xf32>
      %180 = tpu.matmul %178, %179, %cst_78 {dimension_numbers = #tpu.dot_dimension_numbers<[1], [0], [0], [1], [0, 0, 1, 1], [], []>} : vector<16x128xbf16>, vector<128x512xbf16>, vector<16x512xf32> -> vector<16x512xf32>
      %c0_79 = arith.constant 0 : index
      %c0_80 = arith.constant 0 : index
      %181 = vector.load %arg6[%c0_79, %c0_80] : memref<1x512xf32, #tpu.memory_space<vmem>>, vector<1x512xf32>
      %182 = vector.broadcast %181 : vector<1x512xf32> to vector<16x512xf32>
      %183 = arith.addf %180, %182 : vector<16x512xf32>
      %c0_81 = arith.constant 0 : index
      %c0_82 = arith.constant 0 : index
      %184 = vector.load %arg20[%c0_81, %c0_82] : memref<16x512xf32, #tpu.memory_space<vmem>>, vector<16x512xf32>
      tpu.vector_store %arg20[%c0_81, %c0_82], %183 {strides = array<i32>} : memref<16x512xf32, #tpu.memory_space<vmem>>, vector<16x512xf32>,
    } else {
    }
    return
  }
  func.func @transform_0(%arg0: i32) -> (i32, i32) {
    %c0_i32 = arith.constant 0 : i32
    %c0_i32_0 = arith.constant 0 : i32
    %c0_i32_1 = arith.constant 0 : i32
    return %c0_i32, %c0_i32_0 : i32, i32
  }
  func.func @transform_1(%arg0: i32) -> (i32, i32) {
    %c0_i32 = arith.constant 0 : i32
    %c0_i32_0 = arith.constant 0 : i32
    %c0_i32_1 = arith.constant 0 : i32
    return %c0_i32, %c0_i32_0 : i32, i32
  }
  func.func @transform_2(%arg0: i32) -> (i32, i32) {
    %c0_i32 = arith.constant 0 : i32
    %c0_i32_0 = arith.constant 0 : i32
    %c0_i32_1 = arith.constant 0 : i32
    return %c0_i32, %c0_i32_0 : i32, i32
  }
  func.func @transform_3(%arg0: i32) -> (i32, i32) {
    %c0_i32 = arith.constant 0 : i32
    %c0_i32_0 = arith.constant 0 : i32
    %c0_i32_1 = arith.constant 0 : i32
    return %c0_i32, %c0_i32_0 : i32, i32
  }
  func.func @transform_4(%arg0: i32) -> (i32, i32) {
    %c0_i32 = arith.constant 0 : i32
    %c0_i32_0 = arith.constant 0 : i32
    %c0_i32_1 = arith.constant 0 : i32
    return %c0_i32, %c0_i32_0 : i32, i32
  }
  func.func @transform_5(%arg0: i32) -> (i32, i32) {
    %c0_i32 = arith.constant 0 : i32
    %c0_i32_0 = arith.constant 0 : i32
    %c0_i32_1 = arith.constant 0 : i32
    return %c0_i32, %c0_i32_0 : i32, i32
  }
  func.func @transform_6(%arg0: i32) -> (i32, i32, i32) {
    %c0_i32 = arith.constant 0 : i32
    %c0_i32_0 = arith.constant 0 : i32
    %c0_i32_1 = arith.constant 0 : i32
    return %arg0, %c0_i32, %c0_i32_0 : i32, i32, i32
  }
  func.func @transform_7(%arg0: i32) -> (i32, i32, i32) {
    %c0_i32 = arith.constant 0 : i32
    %c0_i32_0 = arith.constant 0 : i32
    %c0_i32_1 = arith.constant 0 : i32
    return %arg0, %c0_i32, %c0_i32_0 : i32, i32, i32
  }
  func.func @transform_8(%arg0: i32) -> (i32, i32, i32) {
    %c0_i32 = arith.constant 0 : i32
    %c0_i32_0 = arith.constant 0 : i32
    %c0_i32_1 = arith.constant 0 : i32
    return %arg0, %c0_i32, %c0_i32_0 : i32, i32, i32
  }
  func.func @transform_9(%arg0: i32) -> (i32, i32, i32) {
    %c0_i32 = arith.constant 0 : i32
    %c0_i32_0 = arith.constant 0 : i32
    %c0_i32_1 = arith.constant 0 : i32
    return %arg0, %c0_i32, %c0_i32_0 : i32, i32, i32
  }
  func.func @transform_10(%arg0: i32) -> (i32, i32, i32) {
    %c0_i32 = arith.constant 0 : i32
    %c0_i32_0 = arith.constant 0 : i32
    %c0_i32_1 = arith.constant 0 : i32
    return %arg0, %c0_i32, %c0_i32_0 : i32, i32, i32
  }
  func.func @transform_11(%arg0: i32) -> (i32, i32, i32) {
    %c0_i32 = arith.constant 0 : i32
    %c0_i32_0 = arith.constant 0 : i32
    %c0_i32_1 = arith.constant 0 : i32
    return %arg0, %c0_i32, %c0_i32_0 : i32, i32, i32
  }
  func.func @transform_12(%arg0: i32) -> (i32, i32, i32) {
    %c0_i32 = arith.constant 0 : i32
    %c0_i32_0 = arith.constant 0 : i32
    %c0_i32_1 = arith.constant 0 : i32
    return %arg0, %c0_i32, %c0_i32_0 : i32, i32, i32
  }
  func.func @transform_13(%arg0: i32) -> (i32, i32, i32) {
    %c0_i32 = arith.constant 0 : i32
    %c0_i32_0 = arith.constant 0 : i32
    %c0_i32_1 = arith.constant 0 : i32
    return %arg0, %c0_i32, %c0_i32_0 : i32, i32, i32
  }
  func.func @transform_14(%arg0: i32) -> (i32, i32, i32) {
    %c0_i32 = arith.constant 0 : i32
    %c0_i32_0 = arith.constant 0 : i32
    %c0_i32_1 = arith.constant 0 : i32
    return %arg0, %c0_i32, %c0_i32_0 : i32, i32, i32
  }
  func.func @transform_15(%arg0: i32) -> (i32, i32, i32) {
    %c0_i32 = arith.constant 0 : i32
    %c0_i32_0 = arith.constant 0 : i32
    %c0_i32_1 = arith.constant 0 : i32
    return %arg0, %c0_i32, %c0_i32_0 : i32, i32, i32
  }
  func.func @transform_16(%arg0: i32) -> (i32, i32, i32) {
    %c0_i32 = arith.constant 0 : i32
    %c0_i32_0 = arith.constant 0 : i32
    %c0_i32_1 = arith.constant 0 : i32
    return %arg0, %c0_i32, %c0_i32_0 : i32, i32, i32
  }
  func.func @transform_17(%arg0: i32) -> (i32, i32, i32) {
    %c0_i32 = arith.constant 0 : i32
    %c0_i32_0 = arith.constant 0 : i32
    %c0_i32_1 = arith.constant 0 : i32
    return %arg0, %c0_i32, %c0_i32_0 : i32, i32, i32
  }
  func.func @transform_18(%arg0: i32) -> (i32, i32) {
    %c0_i32 = arith.constant 0 : i32
    %c0_i32_0 = arith.constant 0 : i32
    %c0_i32_1 = arith.constant 0 : i32
    return %c0_i32, %c0_i32_0 : i32, i32
  }
  func.func @transform_19(%arg0: i32) -> (i32, i32) {
    %c0_i32 = arith.constant 0 : i32
    %c0_i32_0 = arith.constant 0 : i32
    %c0_i32_1 = arith.constant 0 : i32
    return %c0_i32, %c0_i32_0 : i32, i32
  }
}

</mosaic_0001>

<llo_original>
// kernel: diffusion_bert_forward.1
$region0: #{diffusion_bert_forward.1}
  #allocation0 [shape = 'u32[]', space=smem, size = 0x4, offset = 0x4, fixed_abs, tag = 'smem constant byte address 0x4 - core index']
  #allocation1 [shape = 'u32[144,128]{1,0:T(1,128)}', space=vmem, size = 0x12000, scoped, tag = 'internal scratch']
  %s0 = inlined_call_operand.vmem [shape: f32[16,128], index: 0, kind: input, shape index: {}]
  %s1 = inlined_call_operand.vmem [shape: f32[16,16], index: 1, kind: input, shape index: {}]
  %s2 = inlined_call_operand.vmem [shape: f32[1,128], index: 2, kind: input, shape index: {}]
  %s3 = inlined_call_operand.vmem [shape: f32[1,128], index: 3, kind: input, shape index: {}]
  %s4 = inlined_call_operand.vmem [shape: bf16[128,512], index: 4, kind: input, shape index: {}]
  %s5 = inlined_call_operand.vmem [shape: f32[1,512], index: 5, kind: input, shape index: {}]
  %s6 = inlined_call_operand.hbm [shape: bf16[2,128,1536], index: 6, kind: input, shape index: {}]
  %s7 = inlined_call_operand.vmem [shape: f32[2,1,1536], index: 7, kind: input, shape index: {}]
  %s8 = inlined_call_operand.hbm [shape: bf16[2,512,128], index: 8, kind: input, shape index: {}]
  %s9 = inlined_call_operand.vmem [shape: f32[2,1,128], index: 9, kind: input, shape index: {}]
  %s10 = inlined_call_operand.vmem [shape: f32[2,1,128], index: 10, kind: input, shape index: {}]
  %s11 = inlined_call_operand.vmem [shape: f32[2,1,128], index: 11, kind: input, shape index: {}]
  %s12 = inlined_call_operand.hbm [shape: bf16[2,128,256], index: 12, kind: input, shape index: {}]
  %s13 = inlined_call_operand.vmem [shape: f32[2,1,256], index: 13, kind: input, shape index: {}]
  %s14 = inlined_call_operand.hbm [shape: bf16[2,256,128], index: 14, kind: input, shape index: {}]
  %s15 = inlined_call_operand.vmem [shape: f32[2,1,128], index: 15, kind: input, shape index: {}]
  %s16 = inlined_call_operand.vmem [shape: f32[2,1,128], index: 16, kind: input, shape index: {}]
  %s17 = inlined_call_operand.vmem [shape: f32[2,1,128], index: 17, kind: input, shape index: {}]
  %s18 = inlined_call_operand.hbm [shape: f32[16,128], index: 18, kind: output, shape index: {0}]
  %s19 = inlined_call_operand.hbm [shape: f32[16,512], index: 19, kind: output, shape index: {1}]
  %20 = xla_tuple %s18, %s19
  %s21 = sld [smem:[#allocation0]]
  $region137: #{diffusion_bert_forward.1} parent=0
    _
  %s23 = ssub.s32 1, %s21
  %s24 = scalar_select 0, %s23, %s21
  $region1: #{diffusion_bert_forward.1} parent=0
    #allocation2 [shape = 'u8[786432]{0}', space=vmem, size = 0xc0000, scoped, tag = 'input window, operand 6']
    #allocation3 [shape = 's32[2]{0}', space=sflag, size = 0x8, scoped, tag = 'scoped memory for diffusion_bert_forward.1']
    #allocation4 [shape = 's32[2]{0}', space=sflag, size = 0x8, scoped, tag = 'scoped memory for diffusion_bert_forward.1']
    #allocation5 [shape = 'u8[262144]{0}', space=vmem, size = 0x40000, scoped, tag = 'input window, operand 8']
    #allocation6 [shape = 's32[2]{0}', space=sflag, size = 0x8, scoped, tag = 'scoped memory for diffusion_bert_forward.1']
    #allocation7 [shape = 'u8[131072]{0}', space=vmem, size = 0x20000, scoped, tag = 'input window, operand 12']
    #allocation8 [shape = 'u8[131072]{0}', space=vmem, size = 0x20000, scoped, tag = 'input window, operand 14']
    #allocation9 [shape = 's32[2]{0}', space=sflag, size = 0x8, scoped, tag = 'scoped memory for diffusion_bert_forward.1']
    #allocation10 [shape = 'u8[8192]{0}', space=vmem, size = 0x2000, scoped, tag = 'output window, operand 0, single buffered']
    #allocation11 [shape = 'u8[32768]{0}', space=vmem, size = 0x8000, scoped, tag = 'output window, operand 1, single buffered']
    #allocation12 [shape = 's32[1]{0}', space=sflag, size = 0x4, scoped, tag = 'scoped memory for diffusion_bert_forward.1']
    %25 = vsyncpa [#allocation3], 0
    %s26 = scalar_lea.sflag [#allocation3], 1
    %27 = vsyncpa %s26, 0
    %28 = vsyncpa [#allocation6], 0
    %s29 = scalar_lea.sflag [#allocation6], 1
    %30 = vsyncpa %s29, 0
    %31 = vsyncpa [#allocation9], 0
    %s32 = scalar_lea.sflag [#allocation9], 1
    %33 = vsyncpa %s32, 0
    %34 = vsyncpa [#allocation4], 0
    %35 = vsyncpa [#allocation12], 0
    loop: start=0, step=1, limit=4
    $region2: #{diffusion_bert_forward.1} parent=1 // loop_pre_header
      _
    $region3: #{diffusion_bert_forward.1} parent=1 // loop_header
      %s37 = sphi 0, %s41
      %p38 = scmp.ge.s32.totalorder %s37, 4
      %s45 = sphi 0, %s45
      %s47 = sphi 0, %s45
      %s48 = sphi 0, %s47
      %s62 = sphi 0, %s48
      %s66 = sphi 0, %s66
      %s68 = sphi 0, %s66
      %s69 = sphi 0, %s68
      %s83 = sphi 0, %s69
      %s87 = sphi 0, %s87
      %s89 = sphi 0, %s87
      %s90 = sphi 0, %s89
      %s104 = sphi 0, %s90
      %s108 = sphi 0, %s108
      %s110 = sphi 0, %s108
      %s111 = sphi 0, %s110
      %s125 = sphi 0, %s111
      %s129 = sphi 0, %s129
      %s131 = sphi 0, %s129
      %s132 = sphi 0, %s131
      %s146 = sphi 0, %s132
      %s150 = sphi 0, %s150
      %s152 = sphi 0, %s150
      %s153 = sphi 0, %s152
      %s167 = sphi 0, %s153
      %s173 = sphi 0, %s175
      %s176 = sphi 0, %s173
      %s177 = sphi 0, %s176
      %s193 = sphi 0, %s177
      %s199 = sphi 0, %s201
      %s202 = sphi 0, %s199
      %s203 = sphi 0, %s202
      %s219 = sphi 0, %s203
      %s225 = sphi 0, %s227
      %s228 = sphi 0, %s225
      %s229 = sphi 0, %s228
      %s245 = sphi 0, %s229
      %s251 = sphi 0, %s253
      %s254 = sphi 0, %s251
      %s255 = sphi 0, %s254
      %s271 = sphi 0, %s255
      %s277 = sphi 0, %s279
      %s280 = sphi 0, %s277
      %s281 = sphi 0, %s280
      %s297 = sphi 0, %s281
      %s303 = sphi 0, %s305
      %s306 = sphi 0, %s303
      %s307 = sphi 0, %s306
      %s323 = sphi 0, %s307
      %s329 = sphi 0, %s331
      %s332 = sphi 0, %s329
      %s333 = sphi 0, %s332
      %s349 = sphi 0, %s333
      %s355 = sphi 0, %s357
      %s358 = sphi 0, %s355
      %s359 = sphi 0, %s358
      %s375 = sphi 0, %s359
      %s381 = sphi 0, %s383
      %s384 = sphi 0, %s381
      %s385 = sphi 0, %s384
      %s401 = sphi 0, %s385
      %s407 = sphi 0, %s409
      %s410 = sphi 0, %s407
      %s411 = sphi 0, %s410
      %s427 = sphi 0, %s411
      %s433 = sphi 0, %s435
      %s436 = sphi 0, %s433
      %s437 = sphi 0, %s436
      %s453 = sphi 0, %s437
      %s459 = sphi 0, %s461
      %s462 = sphi 0, %s459
      %s463 = sphi 0, %s462
      %s479 = sphi 0, %s463
      %s483 = sphi 0, %s483
      %s485 = sphi 0, %s483
      %s486 = sphi 0, %s485
      %s500 = sphi 0, %s486
      %s504 = sphi 0, %s504
      %s506 = sphi 0, %s504
      %s507 = sphi 0, %s506
      %s521 = sphi 0, %s507
    $region4: #{diffusion_bert_forward.1} parent=1 // loop_header_branch
      %40 = sbr.rel (%p38) target = $region8
    $region5: #{diffusion_bert_forward.1} parent=1 // loop_body
      %s42 = ssub.s32 %s37, 1
      %s43 = ssub.s32 %s37, 2
      %s44 = sadd.s32 %s37, 1
      %s46 = sadd.s32 %s45, 1
      %p49 = scmp.eq.s32.totalorder %s37, 1
      %p50 = scmp.ne.s32.totalorder %s45, %s47
      %p51 = scmp.eq.s32.totalorder %s37, 0
      %p52 = por %p50, %p51
      %p53 = scmp.ne.s32.totalorder %s45, %s47
      %p54 = scmp.eq.s32.totalorder %s42, 1
      %p55 = por %p53, %p54
      %p56 = scmp.ne.s32.totalorder %s47, %s48
      %p57 = scmp.eq.s32.totalorder %s42, 0
      %p58 = por %p56, %p57
      %p59 = scmp.ne.s32.totalorder %s47, %s48
      %p60 = scmp.eq.s32.totalorder %s43, 1
      %p61 = por %p59, %p60
      %p63 = scmp.ne.s32.totalorder %s48, %s62
      %p64 = scmp.eq.s32.totalorder %s43, 0
      %p65 = por %p63, %p64
      %s67 = sadd.s32 %s66, 1
      %p70 = scmp.eq.s32.totalorder %s37, 1
      %p71 = scmp.ne.s32.totalorder %s66, %s68
      %p72 = scmp.eq.s32.totalorder %s37, 0
      %p73 = por %p71, %p72
      %p74 = scmp.ne.s32.totalorder %s66, %s68
      %p75 = scmp.eq.s32.totalorder %s42, 1
      %p76 = por %p74, %p75
      %p77 = scmp.ne.s32.totalorder %s68, %s69
      %p78 = scmp.eq.s32.totalorder %s42, 0
      %p79 = por %p77, %p78
      %p80 = scmp.ne.s32.totalorder %s68, %s69
      %p81 = scmp.eq.s32.totalorder %s43, 1
      %p82 = por %p80, %p81
      %p84 = scmp.ne.s32.totalorder %s69, %s83
      %p85 = scmp.eq.s32.totalorder %s43, 0
      %p86 = por %p84, %p85
      %s88 = sadd.s32 %s87, 1
      %p91 = scmp.eq.s32.totalorder %s37, 1
      %p92 = scmp.ne.s32.totalorder %s87, %s89
      %p93 = scmp.eq.s32.totalorder %s37, 0
      %p94 = por %p92, %p93
      %p95 = scmp.ne.s32.totalorder %s87, %s89
      %p96 = scmp.eq.s32.totalorder %s42, 1
      %p97 = por %p95, %p96
      %p98 = scmp.ne.s32.totalorder %s89, %s90
      %p99 = scmp.eq.s32.totalorder %s42, 0
      %p100 = por %p98, %p99
      %p101 = scmp.ne.s32.totalorder %s89, %s90
      %p102 = scmp.eq.s32.totalorder %s43, 1
      %p103 = por %p101, %p102
      %p105 = scmp.ne.s32.totalorder %s90, %s104
      %p106 = scmp.eq.s32.totalorder %s43, 0
      %p107 = por %p105, %p106
      %s109 = sadd.s32 %s108, 1
      %p112 = scmp.eq.s32.totalorder %s37, 1
      %p113 = scmp.ne.s32.totalorder %s108, %s110
      %p114 = scmp.eq.s32.totalorder %s37, 0
      %p115 = por %p113, %p114
      %p116 = scmp.ne.s32.totalorder %s108, %s110
      %p117 = scmp.eq.s32.totalorder %s42, 1
      %p118 = por %p116, %p117
      %p119 = scmp.ne.s32.totalorder %s110, %s111
      %p120 = scmp.eq.s32.totalorder %s42, 0
      %p121 = por %p119, %p120
      %p122 = scmp.ne.s32.totalorder %s110, %s111
      %p123 = scmp.eq.s32.totalorder %s43, 1
      %p124 = por %p122, %p123
      %p126 = scmp.ne.s32.totalorder %s111, %s125
      %p127 = scmp.eq.s32.totalorder %s43, 0
      %p128 = por %p126, %p127
      %s130 = sadd.s32 %s129, 1
      %p133 = scmp.eq.s32.totalorder %s37, 1
      %p134 = scmp.ne.s32.totalorder %s129, %s131
      %p135 = scmp.eq.s32.totalorder %s37, 0
      %p136 = por %p134, %p135
      %p137 = scmp.ne.s32.totalorder %s129, %s131
      %p138 = scmp.eq.s32.totalorder %s42, 1
      %p139 = por %p137, %p138
      %p140 = scmp.ne.s32.totalorder %s131, %s132
      %p141 = scmp.eq.s32.totalorder %s42, 0
      %p142 = por %p140, %p141
      %p143 = scmp.ne.s32.totalorder %s131, %s132
      %p144 = scmp.eq.s32.totalorder %s43, 1
      %p145 = por %p143, %p144
      %p147 = scmp.ne.s32.totalorder %s132, %s146
      %p148 = scmp.eq.s32.totalorder %s43, 0
      %p149 = por %p147, %p148
      %s151 = sadd.s32 %s150, 1
      %p154 = scmp.eq.s32.totalorder %s37, 1
      %p155 = scmp.ne.s32.totalorder %s150, %s152
      %p156 = scmp.eq.s32.totalorder %s37, 0
      %p157 = por %p155, %p156
      %p158 = scmp.ne.s32.totalorder %s150, %s152
      %p159 = scmp.eq.s32.totalorder %s42, 1
      %p160 = por %p158, %p159
      %p161 = scmp.ne.s32.totalorder %s152, %s153
      %p162 = scmp.eq.s32.totalorder %s42, 0
      %p163 = por %p161, %p162
      %p164 = scmp.ne.s32.totalorder %s152, %s153
      %p165 = scmp.eq.s32.totalorder %s43, 1
      %p166 = por %p164, %p165
      %p168 = scmp.ne.s32.totalorder %s153, %s167
      %p169 = scmp.eq.s32.totalorder %s43, 0
      %p170 = por %p168, %p169
      %s171 = ssub.s32 %s37, %s44
      %p172 = scmp.eq.s32.totalorder %s171, 0
      %s174 = sadd.s32 %s173, 1
      %s175 = scalar_select %p172, %s173, %s174
      %p178 = pneg %p172
      %p179 = scmp.eq.s32.totalorder %s37, 1
      %p180 = por %p178, %p179
      %p181 = scmp.ne.s32.totalorder %s173, %s176
      %p182 = scmp.eq.s32.totalorder %s37, 0
      %p183 = por %p181, %p182
      %p184 = scmp.ne.s32.totalorder %s173, %s176
      %p185 = scmp.eq.s32.totalorder %s42, 1
      %p186 = por %p184, %p185
      %p187 = scmp.ne.s32.totalorder %s176, %s177
      %p188 = scmp.eq.s32.totalorder %s42, 0
      %p189 = por %p187, %p188
      %p190 = scmp.ne.s32.totalorder %s176, %s177
      %p191 = scmp.eq.s32.totalorder %s43, 1
      %p192 = por %p190, %p191
      %p194 = scmp.ne.s32.totalorder %s177, %s193
      %p195 = scmp.eq.s32.totalorder %s43, 0
      %p196 = por %p194, %p195
      %s197 = ssub.s32 %s37, %s44
      %p198 = scmp.eq.s32.totalorder %s197, 0
      %s200 = sadd.s32 %s199, 1
      %s201 = scalar_select %p198, %s199, %s200
      %p204 = pneg %p198
      %p205 = scmp.eq.s32.totalorder %s37, 1
      %p206 = por %p204, %p205
      %p207 = scmp.ne.s32.totalorder %s199, %s202
      %p208 = scmp.eq.s32.totalorder %s37, 0
      %p209 = por %p207, %p208
      %p210 = scmp.ne.s32.totalorder %s199, %s202
      %p211 = scmp.eq.s32.totalorder %s42, 1
      %p212 = por %p210, %p211
      %p213 = scmp.ne.s32.totalorder %s202, %s203
      %p214 = scmp.eq.s32.totalorder %s42, 0
      %p215 = por %p213, %p214
      %p216 = scmp.ne.s32.totalorder %s202, %s203
      %p217 = scmp.eq.s32.totalorder %s43, 1
      %p218 = por %p216, %p217
      %p220 = scmp.ne.s32.totalorder %s203, %s219
      %p221 = scmp.eq.s32.totalorder %s43, 0
      %p222 = por %p220, %p221
      %s223 = ssub.s32 %s37, %s44
      %p224 = scmp.eq.s32.totalorder %s223, 0
      %s226 = sadd.s32 %s225, 1
      %s227 = scalar_select %p224, %s225, %s226
      %p230 = pneg %p224
      %p231 = scmp.eq.s32.totalorder %s37, 1
      %p232 = por %p230, %p231
      %p233 = scmp.ne.s32.totalorder %s225, %s228
      %p234 = scmp.eq.s32.totalorder %s37, 0
      %p235 = por %p233, %p234
      %p236 = scmp.ne.s32.totalorder %s225, %s228
      %p237 = scmp.eq.s32.totalorder %s42, 1
      %p238 = por %p236, %p237
      %p239 = scmp.ne.s32.totalorder %s228, %s229
      %p240 = scmp.eq.s32.totalorder %s42, 0
      %p241 = por %p239, %p240
      %p242 = scmp.ne.s32.totalorder %s228, %s229
      %p243 = scmp.eq.s32.totalorder %s43, 1
      %p244 = por %p242, %p243
      %p246 = scmp.ne.s32.totalorder %s229, %s245
      %p247 = scmp.eq.s32.totalorder %s43, 0
      %p248 = por %p246, %p247
      %s249 = ssub.s32 %s37, %s44
      %p250 = scmp.eq.s32.totalorder %s249, 0
      %s252 = sadd.s32 %s251, 1
      %s253 = scalar_select %p250, %s251, %s252
      %p256 = pneg %p250
      %p257 = scmp.eq.s32.totalorder %s37, 1
      %p258 = por %p256, %p257
      %p259 = scmp.ne.s32.totalorder %s251, %s254
      %p260 = scmp.eq.s32.totalorder %s37, 0
      %p261 = por %p259, %p260
      %p262 = scmp.ne.s32.totalorder %s251, %s254
      %p263 = scmp.eq.s32.totalorder %s42, 1
      %p264 = por %p262, %p263
      %p265 = scmp.ne.s32.totalorder %s254, %s255
      %p266 = scmp.eq.s32.totalorder %s42, 0
      %p267 = por %p265, %p266
      %p268 = scmp.ne.s32.totalorder %s254, %s255
      %p269 = scmp.eq.s32.totalorder %s43, 1
      %p270 = por %p268, %p269
      %p272 = scmp.ne.s32.totalorder %s255, %s271
      %p273 = scmp.eq.s32.totalorder %s43, 0
      %p274 = por %p272, %p273
      %s275 = ssub.s32 %s37, %s44
      %p276 = scmp.eq.s32.totalorder %s275, 0
      %s278 = sadd.s32 %s277, 1
      %s279 = scalar_select %p276, %s277, %s278
      %p282 = pneg %p276
      %p283 = scmp.eq.s32.totalorder %s37, 1
      %p284 = por %p282, %p283
      %p285 = scmp.ne.s32.totalorder %s277, %s280
      %p286 = scmp.eq.s32.totalorder %s37, 0
      %p287 = por %p285, %p286
      %p288 = scmp.ne.s32.totalorder %s277, %s280
      %p289 = scmp.eq.s32.totalorder %s42, 1
      %p290 = por %p288, %p289
      %p291 = scmp.ne.s32.totalorder %s280, %s281
      %p292 = scmp.eq.s32.totalorder %s42, 0
      %p293 = por %p291, %p292
      %p294 = scmp.ne.s32.totalorder %s280, %s281
      %p295 = scmp.eq.s32.totalorder %s43, 1
      %p296 = por %p294, %p295
      %p298 = scmp.ne.s32.totalorder %s281, %s297
      %p299 = scmp.eq.s32.totalorder %s43, 0
      %p300 = por %p298, %p299
      %s301 = ssub.s32 %s37, %s44
      %p302 = scmp.eq.s32.totalorder %s301, 0
      %s304 = sadd.s32 %s303, 1
      %s305 = scalar_select %p302, %s303, %s304
      %p308 = pneg %p302
      %p309 = scmp.eq.s32.totalorder %s37, 1
      %p310 = por %p308, %p309
      %p311 = scmp.ne.s32.totalorder %s303, %s306
      %p312 = scmp.eq.s32.totalorder %s37, 0
      %p313 = por %p311, %p312
      %p314 = scmp.ne.s32.totalorder %s303, %s306
      %p315 = scmp.eq.s32.totalorder %s42, 1
      %p316 = por %p314, %p315
      %p317 = scmp.ne.s32.totalorder %s306, %s307
      %p318 = scmp.eq.s32.totalorder %s42, 0
      %p319 = por %p317, %p318
      %p320 = scmp.ne.s32.totalorder %s306, %s307
      %p321 = scmp.eq.s32.totalorder %s43, 1
      %p322 = por %p320, %p321
      %p324 = scmp.ne.s32.totalorder %s307, %s323
      %p325 = scmp.eq.s32.totalorder %s43, 0
      %p326 = por %p324, %p325
      %s327 = ssub.s32 %s37, %s44
      %p328 = scmp.eq.s32.totalorder %s327, 0
      %s330 = sadd.s32 %s329, 1
      %s331 = scalar_select %p328, %s329, %s330
      %p334 = pneg %p328
      %p335 = scmp.eq.s32.totalorder %s37, 1
      %p336 = por %p334, %p335
      %p337 = scmp.ne.s32.totalorder %s329, %s332
      %p338 = scmp.eq.s32.totalorder %s37, 0
      %p339 = por %p337, %p338
      %p340 = scmp.ne.s32.totalorder %s329, %s332
      %p341 = scmp.eq.s32.totalorder %s42, 1
      %p342 = por %p340, %p341
      %p343 = scmp.ne.s32.totalorder %s332, %s333
      %p344 = scmp.eq.s32.totalorder %s42, 0
      %p345 = por %p343, %p344
      %p346 = scmp.ne.s32.totalorder %s332, %s333
      %p347 = scmp.eq.s32.totalorder %s43, 1
      %p348 = por %p346, %p347
      %p350 = scmp.ne.s32.totalorder %s333, %s349
      %p351 = scmp.eq.s32.totalorder %s43, 0
      %p352 = por %p350, %p351
      %s353 = ssub.s32 %s37, %s44
      %p354 = scmp.eq.s32.totalorder %s353, 0
      %s356 = sadd.s32 %s355, 1
      %s357 = scalar_select %p354, %s355, %s356
      %p360 = pneg %p354
      %p361 = scmp.eq.s32.totalorder %s37, 1
      %p362 = por %p360, %p361
      %p363 = scmp.ne.s32.totalorder %s355, %s358
      %p364 = scmp.eq.s32.totalorder %s37, 0
      %p365 = por %p363, %p364
      %p366 = scmp.ne.s32.totalorder %s355, %s358
      %p367 = scmp.eq.s32.totalorder %s42, 1
      %p368 = por %p366, %p367
      %p369 = scmp.ne.s32.totalorder %s358, %s359
      %p370 = scmp.eq.s32.totalorder %s42, 0
      %p371 = por %p369, %p370
      %p372 = scmp.ne.s32.totalorder %s358, %s359
      %p373 = scmp.eq.s32.totalorder %s43, 1
      %p374 = por %p372, %p373
      %p376 = scmp.ne.s32.totalorder %s359, %s375
      %p377 = scmp.eq.s32.totalorder %s43, 0
      %p378 = por %p376, %p377
      %s379 = ssub.s32 %s37, %s44
      %p380 = scmp.eq.s32.totalorder %s379, 0
      %s382 = sadd.s32 %s381, 1
      %s383 = scalar_select %p380, %s381, %s382
      %p386 = pneg %p380
      %p387 = scmp.eq.s32.totalorder %s37, 1
      %p388 = por %p386, %p387
      %p389 = scmp.ne.s32.totalorder %s381, %s384
      %p390 = scmp.eq.s32.totalorder %s37, 0
      %p391 = por %p389, %p390
      %p392 = scmp.ne.s32.totalorder %s381, %s384
      %p393 = scmp.eq.s32.totalorder %s42, 1
      %p394 = por %p392, %p393
      %p395 = scmp.ne.s32.totalorder %s384, %s385
      %p396 = scmp.eq.s32.totalorder %s42, 0
      %p397 = por %p395, %p396
      %p398 = scmp.ne.s32.totalorder %s384, %s385
      %p399 = scmp.eq.s32.totalorder %s43, 1
      %p400 = por %p398, %p399
      %p402 = scmp.ne.s32.totalorder %s385, %s401
      %p403 = scmp.eq.s32.totalorder %s43, 0
      %p404 = por %p402, %p403
      %s405 = ssub.s32 %s37, %s44
      %p406 = scmp.eq.s32.totalorder %s405, 0
      %s408 = sadd.s32 %s407, 1
      %s409 = scalar_select %p406, %s407, %s408
      %p412 = pneg %p406
      %p413 = scmp.eq.s32.totalorder %s37, 1
      %p414 = por %p412, %p413
      %p415 = scmp.ne.s32.totalorder %s407, %s410
      %p416 = scmp.eq.s32.totalorder %s37, 0
      %p417 = por %p415, %p416
      %p418 = scmp.ne.s32.totalorder %s407, %s410
      %p419 = scmp.eq.s32.totalorder %s42, 1
      %p420 = por %p418, %p419
      %p421 = scmp.ne.s32.totalorder %s410, %s411
      %p422 = scmp.eq.s32.totalorder %s42, 0
      %p423 = por %p421, %p422
      %p424 = scmp.ne.s32.totalorder %s410, %s411
      %p425 = scmp.eq.s32.totalorder %s43, 1
      %p426 = por %p424, %p425
      %p428 = scmp.ne.s32.totalorder %s411, %s427
      %p429 = scmp.eq.s32.totalorder %s43, 0
      %p430 = por %p428, %p429
      %s431 = ssub.s32 %s37, %s44
      %p432 = scmp.eq.s32.totalorder %s431, 0
      %s434 = sadd.s32 %s433, 1
      %s435 = scalar_select %p432, %s433, %s434
      %p438 = pneg %p432
      %p439 = scmp.eq.s32.totalorder %s37, 1
      %p440 = por %p438, %p439
      %p441 = scmp.ne.s32.totalorder %s433, %s436
      %p442 = scmp.eq.s32.totalorder %s37, 0
      %p443 = por %p441, %p442
      %p444 = scmp.ne.s32.totalorder %s433, %s436
      %p445 = scmp.eq.s32.totalorder %s42, 1
      %p446 = por %p444, %p445
      %p447 = scmp.ne.s32.totalorder %s436, %s437
      %p448 = scmp.eq.s32.totalorder %s42, 0
      %p449 = por %p447, %p448
      %p450 = scmp.ne.s32.totalorder %s436, %s437
      %p451 = scmp.eq.s32.totalorder %s43, 1
      %p452 = por %p450, %p451
      %p454 = scmp.ne.s32.totalorder %s437, %s453
      %p455 = scmp.eq.s32.totalorder %s43, 0
      %p456 = por %p454, %p455
      %s457 = ssub.s32 %s37, %s44
      %p458 = scmp.eq.s32.totalorder %s457, 0
      %s460 = sadd.s32 %s459, 1
      %s461 = scalar_select %p458, %s459, %s460
      %p464 = pneg %p458
      %p465 = scmp.eq.s32.totalorder %s37, 1
      %p466 = por %p464, %p465
      %p467 = scmp.ne.s32.totalorder %s459, %s462
      %p468 = scmp.eq.s32.totalorder %s37, 0
      %p469 = por %p467, %p468
      %p470 = scmp.ne.s32.totalorder %s459, %s462
      %p471 = scmp.eq.s32.totalorder %s42, 1
      %p472 = por %p470, %p471
      %p473 = scmp.ne.s32.totalorder %s462, %s463
      %p474 = scmp.eq.s32.totalorder %s42, 0
      %p475 = por %p473, %p474
      %p476 = scmp.ne.s32.totalorder %s462, %s463
      %p477 = scmp.eq.s32.totalorder %s43, 1
      %p478 = por %p476, %p477
      %p480 = scmp.ne.s32.totalorder %s463, %s479
      %p481 = scmp.eq.s32.totalorder %s43, 0
      %p482 = por %p480, %p481
      %s484 = sadd.s32 %s483, 1
      %p487 = scmp.eq.s32.totalorder %s37, 1
      %p488 = scmp.ne.s32.totalorder %s483, %s485
      %p489 = scmp.eq.s32.totalorder %s37, 0
      %p490 = por %p488, %p489
      %p491 = scmp.ne.s32.totalorder %s483, %s485
      %p492 = scmp.eq.s32.totalorder %s42, 1
      %p493 = por %p491, %p492
      %p494 = scmp.ne.s32.totalorder %s485, %s486
      %p495 = scmp.eq.s32.totalorder %s42, 0
      %p496 = por %p494, %p495
      %p497 = scmp.ne.s32.totalorder %s485, %s486
      %p498 = scmp.eq.s32.totalorder %s43, 1
      %p499 = por %p497, %p498
      %p501 = scmp.ne.s32.totalorder %s486, %s500
      %p502 = scmp.eq.s32.totalorder %s43, 0
      %p503 = por %p501, %p502
      %s505 = sadd.s32 %s504, 1
      %p508 = scmp.eq.s32.totalorder %s37, 1
      %p509 = scmp.ne.s32.totalorder %s504, %s506
      %p510 = scmp.eq.s32.totalorder %s37, 0
      %p511 = por %p509, %p510
      %p512 = scmp.ne.s32.totalorder %s504, %s506
      %p513 = scmp.eq.s32.totalorder %s42, 1
      %p514 = por %p512, %p513
      %p515 = scmp.ne.s32.totalorder %s506, %s507
      %p516 = scmp.eq.s32.totalorder %s42, 0
      %p517 = por %p515, %p516
      %p518 = scmp.ne.s32.totalorder %s506, %s507
      %p519 = scmp.eq.s32.totalorder %s43, 1
      %p520 = por %p518, %p519
      %p522 = scmp.ne.s32.totalorder %s507, %s521
      %p523 = scmp.eq.s32.totalorder %s43, 0
      %p524 = por %p522, %p523
      %p525 = scmp.le.s32.totalorder 1, %s37
      %p526 = scmp.lt.s32.totalorder %s37, 3
      %p527 = pnand %p525, %p526
      %p528 = pneg %p527
      // Predicated region
      $region9: #{diffusion_bert_forward.1} parent=5 // pred_check
        _
      $region10: #{diffusion_bert_forward.1} parent=5 // pred_check_branch
        %530 = sbr.rel (%p527) target = $region12
      $region11: #{diffusion_bert_forward.1} parent=5 // pred_region
        %s531 = ssub.s32 %s37, 1
        // Predicated region
        $region13: #{diffusion_bert_forward.1} parent=11 // pred_check
          %p532 = pneg %p58
        $region14: #{diffusion_bert_forward.1} parent=11 // pred_check_branch
          %534 = sbr.rel (%p532) target = $region16
        $region15: #{diffusion_bert_forward.1} parent=11 // pred_region
          _
        $region16: #{diffusion_bert_forward.1} parent=11 // pred_fallthru
          _
        // Predicated region
        $region17: #{diffusion_bert_forward.1} parent=11 // pred_check
          %p535 = pneg %p79
        $region18: #{diffusion_bert_forward.1} parent=11 // pred_check_branch
          %537 = sbr.rel (%p535) target = $region20
        $region19: #{diffusion_bert_forward.1} parent=11 // pred_region
          _
        $region20: #{diffusion_bert_forward.1} parent=11 // pred_fallthru
          _
        // Predicated region
        $region21: #{diffusion_bert_forward.1} parent=11 // pred_check
          %p538 = pneg %p100
        $region22: #{diffusion_bert_forward.1} parent=11 // pred_check_branch
          %540 = sbr.rel (%p538) target = $region24
        $region23: #{diffusion_bert_forward.1} parent=11 // pred_region
          _
        $region24: #{diffusion_bert_forward.1} parent=11 // pred_fallthru
          _
        // Predicated region
        $region25: #{diffusion_bert_forward.1} parent=11 // pred_check
          %p541 = pneg %p121
        $region26: #{diffusion_bert_forward.1} parent=11 // pred_check_branch
          %543 = sbr.rel (%p541) target = $region28
        $region27: #{diffusion_bert_forward.1} parent=11 // pred_region
          _
        $region28: #{diffusion_bert_forward.1} parent=11 // pred_fallthru
          _
        // Predicated region
        $region29: #{diffusion_bert_forward.1} parent=11 // pred_check
          %p544 = pneg %p142
        $region30: #{diffusion_bert_forward.1} parent=11 // pred_check_branch
          %546 = sbr.rel (%p544) target = $region32
        $region31: #{diffusion_bert_forward.1} parent=11 // pred_region
          _
        $region32: #{diffusion_bert_forward.1} parent=11 // pred_fallthru
          _
        // Predicated region
        $region33: #{diffusion_bert_forward.1} parent=11 // pred_check
          %p547 = pneg %p163
        $region34: #{diffusion_bert_forward.1} parent=11 // pred_check_branch
          %549 = sbr.rel (%p547) target = $region36
        $region35: #{diffusion_bert_forward.1} parent=11 // pred_region
          _
        $region36: #{diffusion_bert_forward.1} parent=11 // pred_fallthru
          _
      $region12: #{diffusion_bert_forward.1} parent=5 // pred_fallthru
        _
      %p550 = scmp.lt.s32.totalorder %s37, 2
      // Predicated region
      $region37: #{diffusion_bert_forward.1} parent=5 // pred_check
        %p551 = pneg %p550
      $region38: #{diffusion_bert_forward.1} parent=5 // pred_check_branch
        %553 = sbr.rel (%p551) target = $region40
      $region39: #{diffusion_bert_forward.1} parent=5 // pred_region
        // Predicated region
        $region41: #{diffusion_bert_forward.1} parent=39 // pred_check
          %p554 = pneg %p183
        $region42: #{diffusion_bert_forward.1} parent=39 // pred_check_branch
          %556 = sbr.rel (%p554) target = $region44
        $region43: #{diffusion_bert_forward.1} parent=39 // pred_region
          %s557 = sand.u32 %s173, 1
          %s558 = scalar_lea.sflag [#allocation3], %s557
          %s559 = sand.u32 %s173, 1
          %s560 = smul.addr %s559, 768
          %s561 = scalar_lea.vmem [#allocation2], %s560
          %s563 = ssub.s32 12288, 12288
          %564 = vsyncadd %s558, %s563
          %s565 = smul.addr %s37, 192
          %s566 = smul.addr %s565, 64
          %s567 = scalar_lea.hbm %s6, %s566
          %s568 = sshll.u32 %s561, 4
          %s569 = int_to_ptr.vmem [resolvable:$true] %s568
          %574 = dma.hbm_to_vmem [thread:$0]  %s567, 12288, %s569, %s558, 768, 768, 48
        $region44: #{diffusion_bert_forward.1} parent=39 // pred_fallthru
          _
        // Predicated region
        $region45: #{diffusion_bert_forward.1} parent=39 // pred_check
          %p575 = pneg %p209
        $region46: #{diffusion_bert_forward.1} parent=39 // pred_check_branch
          %577 = sbr.rel (%p575) target = $region48
        $region47: #{diffusion_bert_forward.1} parent=39 // pred_region
          %p578 = scmp.lt.s32.totalorder %s37, 1
          %s579 = scalar_select %p578, %s37, 1
          %s580 = smul.addr %s579, 12
          %s581 = scalar_lea.vmem %s7, %s580
        $region48: #{diffusion_bert_forward.1} parent=39 // pred_fallthru
          _
        // Predicated region
        $region49: #{diffusion_bert_forward.1} parent=39 // pred_check
          %p582 = pneg %p235
        $region50: #{diffusion_bert_forward.1} parent=39 // pred_check_branch
          %584 = sbr.rel (%p582) target = $region52
        $region51: #{diffusion_bert_forward.1} parent=39 // pred_region
          %s585 = sand.u32 %s37, 1
          %s586 = scalar_lea.sflag [#allocation6], %s585
          %s587 = sand.u32 %s225, 1
          %s588 = smul.addr %s587, 256
          %s589 = scalar_lea.vmem [#allocation5], %s588
          %s591 = ssub.s32 4096, 4096
          %592 = vsyncadd %s586, %s591
          %s593 = smul.addr %s37, 64
          %s594 = smul.addr %s593, 64
          %s595 = scalar_lea.hbm %s8, %s594
          %s596 = sshll.u32 %s589, 4
          %s597 = int_to_ptr.vmem [resolvable:$true] %s596
          %602 = dma.hbm_to_vmem [thread:$0]  %s595, 4096, %s597, %s586, 64, 64, 4
        $region52: #{diffusion_bert_forward.1} parent=39 // pred_fallthru
          _
        // Predicated region
        $region53: #{diffusion_bert_forward.1} parent=39 // pred_check
          %p603 = pneg %p261
        $region54: #{diffusion_bert_forward.1} parent=39 // pred_check_branch
          %605 = sbr.rel (%p603) target = $region56
        $region55: #{diffusion_bert_forward.1} parent=39 // pred_region
          %p606 = scmp.lt.s32.totalorder %s37, 1
          %s607 = scalar_select %p606, %s37, 1
          %s608 = scalar_lea.vmem %s9, %s607
        $region56: #{diffusion_bert_forward.1} parent=39 // pred_fallthru
          _
        // Predicated region
        $region57: #{diffusion_bert_forward.1} parent=39 // pred_check
          %p609 = pneg %p287
        $region58: #{diffusion_bert_forward.1} parent=39 // pred_check_branch
          %611 = sbr.rel (%p609) target = $region60
        $region59: #{diffusion_bert_forward.1} parent=39 // pred_region
          %p612 = scmp.lt.s32.totalorder %s37, 1
          %s613 = scalar_select %p612, %s37, 1
          %s614 = scalar_lea.vmem %s10, %s613
        $region60: #{diffusion_bert_forward.1} parent=39 // pred_fallthru
          _
        // Predicated region
        $region61: #{diffusion_bert_forward.1} parent=39 // pred_check
          %p615 = pneg %p313
        $region62: #{diffusion_bert_forward.1} parent=39 // pred_check_branch
          %617 = sbr.rel (%p615) target = $region64
        $region63: #{diffusion_bert_forward.1} parent=39 // pred_region
          %p618 = scmp.lt.s32.totalorder %s37, 1
          %s619 = scalar_select %p618, %s37, 1
          %s620 = scalar_lea.vmem %s11, %s619
        $region64: #{diffusion_bert_forward.1} parent=39 // pred_fallthru
          _
        // Predicated region
        $region65: #{diffusion_bert_forward.1} parent=39 // pred_check
          %p621 = pneg %p339
        $region66: #{diffusion_bert_forward.1} parent=39 // pred_check_branch
          %623 = sbr.rel (%p621) target = $region68
        $region67: #{diffusion_bert_forward.1} parent=39 // pred_region
          %s624 = sand.u32 %s37, 1
          %s625 = scalar_lea.sflag [#allocation6], %s624
          %s626 = sand.u32 %s329, 1
          %s627 = smul.addr %s626, 128
          %s628 = scalar_lea.vmem [#allocation7], %s627
          %s630 = ssub.s32 2048, 2048
          %631 = vsyncadd %s625, %s630
          %s632 = smul.addr %s37, 32
          %s633 = smul.addr %s632, 64
          %s634 = scalar_lea.hbm %s12, %s633
          %s635 = sshll.u32 %s628, 4
          %s636 = int_to_ptr.vmem [resolvable:$true] %s635
          %641 = dma.hbm_to_vmem [thread:$0]  %s634, 2048, %s636, %s625, 128, 128, 8
        $region68: #{diffusion_bert_forward.1} parent=39 // pred_fallthru
          _
        // Predicated region
        $region69: #{diffusion_bert_forward.1} parent=39 // pred_check
          %p642 = pneg %p365
        $region70: #{diffusion_bert_forward.1} parent=39 // pred_check_branch
          %644 = sbr.rel (%p642) target = $region72
        $region71: #{diffusion_bert_forward.1} parent=39 // pred_region
          %p645 = scmp.lt.s32.totalorder %s37, 1
          %s646 = scalar_select %p645, %s37, 1
          %s647 = smul.addr %s646, 2
          %s648 = scalar_lea.vmem %s13, %s647
        $region72: #{diffusion_bert_forward.1} parent=39 // pred_fallthru
          _
        // Predicated region
        $region73: #{diffusion_bert_forward.1} parent=39 // pred_check
          %p649 = pneg %p391
        $region74: #{diffusion_bert_forward.1} parent=39 // pred_check_branch
          %651 = sbr.rel (%p649) target = $region76
        $region75: #{diffusion_bert_forward.1} parent=39 // pred_region
          %s652 = sand.u32 %s381, 1
          %s653 = scalar_lea.sflag [#allocation9], %s652
          %s654 = sand.u32 %s381, 1
          %s655 = smul.addr %s654, 128
          %s656 = scalar_lea.vmem [#allocation8], %s655
          %s658 = ssub.s32 2048, 2048
          %659 = vsyncadd %s653, %s658
          %s660 = smul.addr %s37, 32
          %s661 = smul.addr %s660, 64
          %s662 = scalar_lea.hbm %s14, %s661
          %s663 = sshll.u32 %s656, 4
          %s664 = int_to_ptr.vmem [resolvable:$true] %s663
          %669 = dma.hbm_to_vmem [thread:$0]  %s662, 2048, %s664, %s653, 64, 64, 4
        $region76: #{diffusion_bert_forward.1} parent=39 // pred_fallthru
          _
        // Predicated region
        $region77: #{diffusion_bert_forward.1} parent=39 // pred_check
          %p670 = pneg %p417
        $region78: #{diffusion_bert_forward.1} parent=39 // pred_check_branch
          %672 = sbr.rel (%p670) target = $region80
        $region79: #{diffusion_bert_forward.1} parent=39 // pred_region
          %p673 = scmp.lt.s32.totalorder %s37, 1
          %s674 = scalar_select %p673, %s37, 1
          %s675 = scalar_lea.vmem %s15, %s674
        $region80: #{diffusion_bert_forward.1} parent=39 // pred_fallthru
          _
        // Predicated region
        $region81: #{diffusion_bert_forward.1} parent=39 // pred_check
          %p676 = pneg %p443
        $region82: #{diffusion_bert_forward.1} parent=39 // pred_check_branch
          %678 = sbr.rel (%p676) target = $region84
        $region83: #{diffusion_bert_forward.1} parent=39 // pred_region
          %p679 = scmp.lt.s32.totalorder %s37, 1
          %s680 = scalar_select %p679, %s37, 1
          %s681 = scalar_lea.vmem %s16, %s680
        $region84: #{diffusion_bert_forward.1} parent=39 // pred_fallthru
          _
        // Predicated region
        $region85: #{diffusion_bert_forward.1} parent=39 // pred_check
          %p682 = pneg %p469
        $region86: #{diffusion_bert_forward.1} parent=39 // pred_check_branch
          %684 = sbr.rel (%p682) target = $region88
        $region87: #{diffusion_bert_forward.1} parent=39 // pred_region
          %p685 = scmp.lt.s32.totalorder %s37, 1
          %s686 = scalar_select %p685, %s37, 1
          %s687 = scalar_lea.vmem %s17, %s686
        $region88: #{diffusion_bert_forward.1} parent=39 // pred_fallthru
          _
      $region40: #{diffusion_bert_forward.1} parent=5 // pred_fallthru
        _
      %p688 = scmp.le.s32.totalorder 1, %s37
      %p689 = scmp.lt.s32.totalorder %s37, 3
      %p690 = pnand %p688, %p689
      %p691 = pneg %p690
      // Predicated region
      $region89: #{diffusion_bert_forward.1} parent=5 // pred_check
        _
      $region90: #{diffusion_bert_forward.1} parent=5 // pred_check_branch
        %693 = sbr.rel (%p690) target = $region92
      $region91: #{diffusion_bert_forward.1} parent=5 // pred_region
        %s694 = ssub.s32 %s37, 1
        %s695 = sand.u32 %s176, 1
        %s696 = scalar_lea.sflag [#allocation3], %s695
        %s697 = sand.u32 %s176, 1
        %s698 = smul.addr %s697, 768
        %s699 = scalar_lea.vmem [#allocation2], %s698
        // Predicated region
        $region93: #{diffusion_bert_forward.1} parent=91 // pred_check
          %p700 = pneg %p189
        $region94: #{diffusion_bert_forward.1} parent=91 // pred_check_branch
          %702 = sbr.rel (%p700) target = $region96
        $region95: #{diffusion_bert_forward.1} parent=91 // pred_region
          %703 = dma.done %s696, 12288
        $region96: #{diffusion_bert_forward.1} parent=91 // pred_fallthru
          _
        %s704 = sand.u32 %s42, 1
        %s705 = scalar_lea.sflag [#allocation6], %s704
        %s706 = sand.u32 %s228, 1
        %s707 = smul.addr %s706, 256
        %s708 = scalar_lea.vmem [#allocation5], %s707
        // Predicated region
        $region97: #{diffusion_bert_forward.1} parent=91 // pred_check
          %p709 = pneg %p241
        $region98: #{diffusion_bert_forward.1} parent=91 // pred_check_branch
          %711 = sbr.rel (%p709) target = $region100
        $region99: #{diffusion_bert_forward.1} parent=91 // pred_region
          %712 = dma.done %s705, 4096
        $region100: #{diffusion_bert_forward.1} parent=91 // pred_fallthru
          _
        %s713 = sand.u32 %s42, 1
        %s714 = scalar_lea.sflag [#allocation6], %s713
        %s715 = sand.u32 %s332, 1
        %s716 = smul.addr %s715, 128
        %s717 = scalar_lea.vmem [#allocation7], %s716
        // Predicated region
        $region101: #{diffusion_bert_forward.1} parent=91 // pred_check
          %p718 = pneg %p345
        $region102: #{diffusion_bert_forward.1} parent=91 // pred_check_branch
          %720 = sbr.rel (%p718) target = $region104
        $region103: #{diffusion_bert_forward.1} parent=91 // pred_region
          %721 = dma.done %s714, 2048
        $region104: #{diffusion_bert_forward.1} parent=91 // pred_fallthru
          _
        %s722 = sand.u32 %s384, 1
        %s723 = scalar_lea.sflag [#allocation9], %s722
        %s724 = sand.u32 %s384, 1
        %s725 = smul.addr %s724, 128
        %s726 = scalar_lea.vmem [#allocation8], %s725
        // Predicated region
        $region105: #{diffusion_bert_forward.1} parent=91 // pred_check
          %p727 = pneg %p397
        $region106: #{diffusion_bert_forward.1} parent=91 // pred_check_branch
          %729 = sbr.rel (%p727) target = $region108
        $region107: #{diffusion_bert_forward.1} parent=91 // pred_region
          %730 = dma.done %s723, 2048
        $region108: #{diffusion_bert_forward.1} parent=91 // pred_fallthru
          _
        %p731 = pneg %p58
        %p732 = pneg %p55
        %p733 = pneg %p79
        %p734 = pneg %p76
        %p735 = pneg %p100
        %p736 = pneg %p97
        %p737 = pneg %p121
        %p738 = pneg %p118
        %p739 = pneg %p142
        %p740 = pneg %p139
        %p741 = pneg %p163
        %p742 = pneg %p160
        %s743 = sand.u32 %s176, 1
        %s744 = scalar_lea.sflag [#allocation3], %s743
        %s745 = sand.u32 %s176, 1
        %s746 = smul.addr %s745, 768
        %s747 = scalar_lea.vmem [#allocation2], %s746
        %p748 = pneg %p189
        %p749 = pneg %p186
        %p750 = scmp.lt.s32.totalorder %s42, 1
        %s751 = scalar_select %p750, %s42, 1
        %s752 = smul.addr %s751, 12
        %s753 = scalar_lea.vmem %s7, %s752
        %p754 = pneg %p215
        %p755 = pneg %p212
        %s756 = sand.u32 %s42, 1
        %s757 = scalar_lea.sflag [#allocation6], %s756
        %s758 = sand.u32 %s228, 1
        %s759 = smul.addr %s758, 256
        %s760 = scalar_lea.vmem [#allocation5], %s759
        %p761 = pneg %p241
        %p762 = pneg %p238
        %p763 = scmp.lt.s32.totalorder %s42, 1
        %s764 = scalar_select %p763, %s42, 1
        %s765 = scalar_lea.vmem %s9, %s764
        %p766 = pneg %p267
        %p767 = pneg %p264
        %p768 = scmp.lt.s32.totalorder %s42, 1
        %s769 = scalar_select %p768, %s42, 1
        %s770 = scalar_lea.vmem %s10, %s769
        %p771 = pneg %p293
        %p772 = pneg %p290
        %p773 = scmp.lt.s32.totalorder %s42, 1
        %s774 = scalar_select %p773, %s42, 1
        %s775 = scalar_lea.vmem %s11, %s774
        %p776 = pneg %p319
        %p777 = pneg %p316
        %s778 = sand.u32 %s42, 1
        %s779 = scalar_lea.sflag [#allocation6], %s778
        %s780 = sand.u32 %s332, 1
        %s781 = smul.addr %s780, 128
        %s782 = scalar_lea.vmem [#allocation7], %s781
        %p783 = pneg %p345
        %p784 = pneg %p342
        %p785 = scmp.lt.s32.totalorder %s42, 1
        %s786 = scalar_select %p785, %s42, 1
        %s787 = smul.addr %s786, 2
        %s788 = scalar_lea.vmem %s13, %s787
        %p789 = pneg %p371
        %p790 = pneg %p368
        %s791 = sand.u32 %s384, 1
        %s792 = scalar_lea.sflag [#allocation9], %s791
        %s793 = sand.u32 %s384, 1
        %s794 = smul.addr %s793, 128
        %s795 = scalar_lea.vmem [#allocation8], %s794
        %p796 = pneg %p397
        %p797 = pneg %p394
        %p798 = scmp.lt.s32.totalorder %s42, 1
        %s799 = scalar_select %p798, %s42, 1
        %s800 = scalar_lea.vmem %s15, %s799
        %p801 = pneg %p423
        %p802 = pneg %p420
        %p803 = scmp.lt.s32.totalorder %s42, 1
        %s804 = scalar_select %p803, %s42, 1
        %s805 = scalar_lea.vmem %s16, %s804
        %p806 = pneg %p449
        %p807 = pneg %p446
        %p808 = scmp.lt.s32.totalorder %s42, 1
        %s809 = scalar_select %p808, %s42, 1
        %s810 = scalar_lea.vmem %s17, %s809
        %p811 = pneg %p475
        %p812 = pneg %p472
        %p813 = pneg %p496
        %p814 = pneg %p493
        %p815 = pneg %p517
        %p816 = pneg %p514
        %p817 = scmp.lt.s32.totalorder %s42, 1
        %s818 = scalar_select %p817, %s42, 1
        %s819 = smul.addr %s818, 12
        %s820 = scalar_lea.vmem %s7, %s819
        %p821 = scmp.lt.s32.totalorder %s42, 1
        %s822 = scalar_select %p821, %s42, 1
        %s823 = scalar_lea.vmem %s9, %s822
        %p824 = scmp.lt.s32.totalorder %s42, 1
        %s825 = scalar_select %p824, %s42, 1
        %s826 = scalar_lea.vmem %s10, %s825
        %p827 = scmp.lt.s32.totalorder %s42, 1
        %s828 = scalar_select %p827, %s42, 1
        %s829 = scalar_lea.vmem %s11, %s828
        %p830 = scmp.lt.s32.totalorder %s42, 1
        %s831 = scalar_select %p830, %s42, 1
        %s832 = smul.addr %s831, 2
        %s833 = scalar_lea.vmem %s13, %s832
        %p834 = scmp.lt.s32.totalorder %s42, 1
        %s835 = scalar_select %p834, %s42, 1
        %s836 = scalar_lea.vmem %s15, %s835
        %p837 = scmp.lt.s32.totalorder %s42, 1
        %s838 = scalar_select %p837, %s42, 1
        %s839 = scalar_lea.vmem %s16, %s838
        %p840 = scmp.lt.s32.totalorder %s42, 1
        %s841 = scalar_select %p840, %s42, 1
        %s842 = scalar_lea.vmem %s17, %s841
        %p844 = scmp.eq.s32.totalorder %s42, 0
        // Predicated region
        $region109: #{diffusion_bert_forward.1} parent=91 // pred_check
          %p845 = pneg %p844
        $region110: #{diffusion_bert_forward.1} parent=91 // pred_check_branch
          %847 = sbr.rel (%p845) target = $region112
        $region111: #{diffusion_bert_forward.1} parent=91 // pred_region
          %v848 = vld [vmem:[%s0] sm:$0xff]
          %v849 = vld [vmem:[%s0 + $0x8] sm:$0xff]
          %v850 = vld [vmem:[%s2] sm:$0x1]
          %v851 = vld [vmem:[%s3] sm:$0x1]
          %852 = vadd.xlane.f32.xlu0 %v848
          %v853 = vpop.xlane.xlu0 %852
          %854 = vadd.xlane.f32.xlu0 %v849
          %v855 = vpop.xlane.xlu0 %854
          %v856 = vrcp.pop 128.0
          %v857 = vmul.f32 %v853, %v856
          %v858 = vmul.f32 %v855, %v856
          %v859 = vsub.f32 %v848, %v857
          %v860 = vsub.f32 %v849, %v858
          %v861 = vmul.f32 %v859, %v859
          %v862 = vmul.f32 %v860, %v860
          %863 = vadd.xlane.f32.xlu0 %v861
          %v864 = vpop.xlane.xlu0 %863
          %865 = vadd.xlane.f32.xlu0 %v862
          %v866 = vpop.xlane.xlu0 %865
          %v867 = vmul.f32 %v864, %v856
          %v868 = vmul.f32 %v866, %v856
          %v869 = vadd.f32 %v867, 1e-12
          %v870 = vadd.f32 %v868, 1e-12
          %v871 = vrsqrt.pop %v869
          %v872 = vrsqrt.pop %v870
          %v873 = vmul.f32 %v859, %v871
          %v874 = vmul.f32 %v860, %v872
          %v876 = vlaneseq
          %v877 = vshrl.u32 %v876, 7
          %v878 = vsub.s32 0, %v877
          %v879 = vrot.slane %v850, %v878
          %v881 = vmul.f32 %v873, %v879
          %v882 = vmul.f32 %v874, %v879
          %v884 = vlaneseq
          %v885 = vshrl.u32 %v884, 7
          %v886 = vsub.s32 0, %v885
          %v887 = vrot.slane %v851, %v886
          %v889 = vadd.f32 %v881, %v887
          %v890 = vadd.f32 %v882, %v887
          %891 = vst [vmem:[#allocation10] sm:$0xff] %v889
          %892 = vst [vmem:[#allocation10 + $0x8] sm:$0xff] %v890
        $region112: #{diffusion_bert_forward.1} parent=91 // pred_fallthru
          _
        %v893 = vld [vmem:[#allocation10] sm:$0xff]
        %v894 = vld [vmem:[#allocation10 + $0x8] sm:$0xff]
        %v895 = vld [vmem:[%s1] sm:$0xff]
        %v896 = vld [vmem:[%s1 + $0x8] sm:$0xff]
        %v897 = vpack.c.bf16 %v894, %v893
        %v898 = vld [vmem:[%s699] sm:$0xff]
        %v899 = vld [vmem:[%s699 + $0x8] sm:$0xff]
        %v900 = vld [vmem:[%s699 + $0x10] sm:$0xff]
        %v901 = vld [vmem:[%s699 + $0x18] sm:$0xff]
        %v902 = vld [vmem:[%s699 + $0x20] sm:$0xff]
        %v903 = vld [vmem:[%s699 + $0x28] sm:$0xff]
        %v904 = vld [vmem:[%s699 + $0x30] sm:$0xff]
        %v905 = vld [vmem:[%s699 + $0x38] sm:$0xff]
        %v906 = vld [vmem:[%s699 + $0x40] sm:$0xff]
        %v907 = vld [vmem:[%s699 + $0x48] sm:$0xff]
        %v908 = vld [vmem:[%s699 + $0x50] sm:$0xff]
        %v909 = vld [vmem:[%s699 + $0x58] sm:$0xff]
        %v910 = vld [vmem:[%s699 + $0x60] sm:$0xff]
        %v911 = vld [vmem:[%s699 + $0x68] sm:$0xff]
        %v912 = vld [vmem:[%s699 + $0x70] sm:$0xff]
        %v913 = vld [vmem:[%s699 + $0x78] sm:$0xff]
        %v914 = vld [vmem:[%s699 + $0x80] sm:$0xff]
        %v915 = vld [vmem:[%s699 + $0x88] sm:$0xff]
        %v916 = vld [vmem:[%s699 + $0x90] sm:$0xff]
        %v917 = vld [vmem:[%s699 + $0x98] sm:$0xff]
        %v918 = vld [vmem:[%s699 + $0xa0] sm:$0xff]
        %v919 = vld [vmem:[%s699 + $0xa8] sm:$0xff]
        %v920 = vld [vmem:[%s699 + $0xb0] sm:$0xff]
        %v921 = vld [vmem:[%s699 + $0xb8] sm:$0xff]
        %v922 = vld [vmem:[%s699 + $0xc0] sm:$0xff]
        %v923 = vld [vmem:[%s699 + $0xc8] sm:$0xff]
        %v924 = vld [vmem:[%s699 + $0xd0] sm:$0xff]
        %v925 = vld [vmem:[%s699 + $0xd8] sm:$0xff]
        %v926 = vld [vmem:[%s699 + $0xe0] sm:$0xff]
        %v927 = vld [vmem:[%s699 + $0xe8] sm:$0xff]
        %v928 = vld [vmem:[%s699 + $0xf0] sm:$0xff]
        %v929 = vld [vmem:[%s699 + $0xf8] sm:$0xff]
        %v930 = vld [vmem:[%s699 + $0x100] sm:$0xff]
        %v931 = vld [vmem:[%s699 + $0x108] sm:$0xff]
        %v932 = vld [vmem:[%s699 + $0x110] sm:$0xff]
        %v933 = vld [vmem:[%s699 + $0x118] sm:$0xff]
        %v934 = vld [vmem:[%s699 + $0x120] sm:$0xff]
        %v935 = vld [vmem:[%s699 + $0x128] sm:$0xff]
        %v936 = vld [vmem:[%s699 + $0x130] sm:$0xff]
        %v937 = vld [vmem:[%s699 + $0x138] sm:$0xff]
        %v938 = vld [vmem:[%s699 + $0x140] sm:$0xff]
        %v939 = vld [vmem:[%s699 + $0x148] sm:$0xff]
        %v940 = vld [vmem:[%s699 + $0x150] sm:$0xff]
        %v941 = vld [vmem:[%s699 + $0x158] sm:$0xff]
        %v942 = vld [vmem:[%s699 + $0x160] sm:$0xff]
        %v943 = vld [vmem:[%s699 + $0x168] sm:$0xff]
        %v944 = vld [vmem:[%s699 + $0x170] sm:$0xff]
        %v945 = vld [vmem:[%s699 + $0x178] sm:$0xff]
        %v946 = vld [vmem:[%s699 + $0x180] sm:$0xff]
        %v947 = vld [vmem:[%s699 + $0x188] sm:$0xff]
        %v948 = vld [vmem:[%s699 + $0x190] sm:$0xff]
        %v949 = vld [vmem:[%s699 + $0x198] sm:$0xff]
        %v950 = vld [vmem:[%s699 + $0x1a0] sm:$0xff]
        %v951 = vld [vmem:[%s699 + $0x1a8] sm:$0xff]
        %v952 = vld [vmem:[%s699 + $0x1b0] sm:$0xff]
        %v953 = vld [vmem:[%s699 + $0x1b8] sm:$0xff]
        %v954 = vld [vmem:[%s699 + $0x1c0] sm:$0xff]
        %v955 = vld [vmem:[%s699 + $0x1c8] sm:$0xff]
        %v956 = vld [vmem:[%s699 + $0x1d0] sm:$0xff]
        %v957 = vld [vmem:[%s699 + $0x1d8] sm:$0xff]
        %v958 = vld [vmem:[%s699 + $0x1e0] sm:$0xff]
        %v959 = vld [vmem:[%s699 + $0x1e8] sm:$0xff]
        %v960 = vld [vmem:[%s699 + $0x1f0] sm:$0xff]
        %v961 = vld [vmem:[%s699 + $0x1f8] sm:$0xff]
        %v962 = vld [vmem:[%s699 + $0x200] sm:$0xff]
        %v963 = vld [vmem:[%s699 + $0x208] sm:$0xff]
        %v964 = vld [vmem:[%s699 + $0x210] sm:$0xff]
        %v965 = vld [vmem:[%s699 + $0x218] sm:$0xff]
        %v966 = vld [vmem:[%s699 + $0x220] sm:$0xff]
        %v967 = vld [vmem:[%s699 + $0x228] sm:$0xff]
        %v968 = vld [vmem:[%s699 + $0x230] sm:$0xff]
        %v969 = vld [vmem:[%s699 + $0x238] sm:$0xff]
        %v970 = vld [vmem:[%s699 + $0x240] sm:$0xff]
        %v971 = vld [vmem:[%s699 + $0x248] sm:$0xff]
        %v972 = vld [vmem:[%s699 + $0x250] sm:$0xff]
        %v973 = vld [vmem:[%s699 + $0x258] sm:$0xff]
        %v974 = vld [vmem:[%s699 + $0x260] sm:$0xff]
        %v975 = vld [vmem:[%s699 + $0x268] sm:$0xff]
        %v976 = vld [vmem:[%s699 + $0x270] sm:$0xff]
        %v977 = vld [vmem:[%s699 + $0x278] sm:$0xff]
        %v978 = vld [vmem:[%s699 + $0x280] sm:$0xff]
        %v979 = vld [vmem:[%s699 + $0x288] sm:$0xff]
        %v980 = vld [vmem:[%s699 + $0x290] sm:$0xff]
        %v981 = vld [vmem:[%s699 + $0x298] sm:$0xff]
        %v982 = vld [vmem:[%s699 + $0x2a0] sm:$0xff]
        %v983 = vld [vmem:[%s699 + $0x2a8] sm:$0xff]
        %v984 = vld [vmem:[%s699 + $0x2b0] sm:$0xff]
        %v985 = vld [vmem:[%s699 + $0x2b8] sm:$0xff]
        %v986 = vld [vmem:[%s699 + $0x2c0] sm:$0xff]
        %v987 = vld [vmem:[%s699 + $0x2c8] sm:$0xff]
        %v988 = vld [vmem:[%s699 + $0x2d0] sm:$0xff]
        %v989 = vld [vmem:[%s699 + $0x2d8] sm:$0xff]
        %v990 = vld [vmem:[%s699 + $0x2e0] sm:$0xff]
        %v991 = vld [vmem:[%s699 + $0x2e8] sm:$0xff]
        %v992 = vld [vmem:[%s699 + $0x2f0] sm:$0xff]
        %v993 = vld [vmem:[%s699 + $0x2f8] sm:$0xff]
        %v994 = vld [vmem:[%s820] sm:$0xff]
        %v995 = vld [vmem:[%s820 + $0x8] sm:$0xf]
        %v998 = vlaneseq
        %v999 = vshrl.u32 %v998, 7
        %v1000 = vsub.s32 0, %v999
        %v1001 = vrot.slane %v994, %v1000
        %v1002 = vlaneseq
        %v1003 = vshrl.u32 %v1002, 7
        %v1004 = vsub.s32 1, %v1003
        %v1005 = vrot.slane %v994, %v1004
        %v1006 = vlaneseq
        %v1007 = vshrl.u32 %v1006, 7
        %v1008 = vsub.s32 2, %v1007
        %v1009 = vrot.slane %v994, %v1008
        %v1010 = vlaneseq
        %v1011 = vshrl.u32 %v1010, 7
        %v1012 = vsub.s32 3, %v1011
        %v1013 = vrot.slane %v994, %v1012
        %v1014 = vlaneseq
        %v1015 = vshrl.u32 %v1014, 7
        %v1016 = vsub.s32 4, %v1015
        %v1017 = vrot.slane %v994, %v1016
        %v1018 = vlaneseq
        %v1019 = vshrl.u32 %v1018, 7
        %v1020 = vsub.s32 5, %v1019
        %v1021 = vrot.slane %v994, %v1020
        %v1022 = vlaneseq
        %v1023 = vshrl.u32 %v1022, 7
        %v1024 = vsub.s32 6, %v1023
        %v1025 = vrot.slane %v994, %v1024
        %v1026 = vlaneseq
        %v1027 = vshrl.u32 %v1026, 7
        %v1028 = vsub.s32 7, %v1027
        %v1029 = vrot.slane %v994, %v1028
        %v1030 = vlaneseq
        %v1031 = vshrl.u32 %v1030, 7
        %v1032 = vsub.s32 0, %v1031
        %v1033 = vrot.slane %v995, %v1032
        %v1034 = vlaneseq
        %v1035 = vshrl.u32 %v1034, 7
        %v1036 = vsub.s32 1, %v1035
        %v1037 = vrot.slane %v995, %v1036
        %v1038 = vlaneseq
        %v1039 = vshrl.u32 %v1038, 7
        %v1040 = vsub.s32 2, %v1039
        %v1041 = vrot.slane %v995, %v1040
        %v1042 = vlaneseq
        %v1043 = vshrl.u32 %v1042, 7
        %v1044 = vsub.s32 3, %v1043
        %v1045 = vrot.slane %v995, %v1044
        %v1154 = vunpack.c.l.b16 %v898
        %v1155 = vunpack.c.h.b16 %v898
        %v1156 = vunpack.c.l.b16 %v899
        %v1157 = vunpack.c.h.b16 %v899
        %v1158 = vunpack.c.l.b16 %v900
        %v1159 = vunpack.c.h.b16 %v900
        %v1160 = vunpack.c.l.b16 %v901
        %v1161 = vunpack.c.h.b16 %v901
        %v1162 = vunpack.c.l.b16 %v902
        %v1163 = vunpack.c.h.b16 %v902
        %v1164 = vunpack.c.l.b16 %v903
        %v1165 = vunpack.c.h.b16 %v903
        %v1166 = vunpack.c.l.b16 %v904
        %v1167 = vunpack.c.h.b16 %v904
        %v1168 = vunpack.c.l.b16 %v905
        %v1169 = vunpack.c.h.b16 %v905
        %v1170 = vunpack.c.l.b16 %v906
        %v1171 = vunpack.c.h.b16 %v906
        %v1172 = vunpack.c.l.b16 %v907
        %v1173 = vunpack.c.h.b16 %v907
        %v1174 = vunpack.c.l.b16 %v908
        %v1175 = vunpack.c.h.b16 %v908
        %v1176 = vunpack.c.l.b16 %v909
        %v1177 = vunpack.c.h.b16 %v909
        %v1178 = vunpack.c.l.b16 %v910
        %v1179 = vunpack.c.h.b16 %v910
        %v1180 = vunpack.c.l.b16 %v911
        %v1181 = vunpack.c.h.b16 %v911
        %v1182 = vunpack.c.l.b16 %v912
        %v1183 = vunpack.c.h.b16 %v912
        %v1184 = vunpack.c.l.b16 %v913
        %v1185 = vunpack.c.h.b16 %v913
        %v1186 = vunpack.c.l.b16 %v914
        %v1187 = vunpack.c.h.b16 %v914
        %v1188 = vunpack.c.l.b16 %v915
        %v1189 = vunpack.c.h.b16 %v915
        %v1190 = vunpack.c.l.b16 %v916
        %v1191 = vunpack.c.h.b16 %v916
        %v1192 = vunpack.c.l.b16 %v917
        %v1193 = vunpack.c.h.b16 %v917
        %v1194 = vunpack.c.l.b16 %v918
        %v1195 = vunpack.c.h.b16 %v918
        %v1196 = vunpack.c.l.b16 %v919
        %v1197 = vunpack.c.h.b16 %v919
        %v1198 = vunpack.c.l.b16 %v920
        %v1199 = vunpack.c.h.b16 %v920
        %v1200 = vunpack.c.l.b16 %v921
        %v1201 = vunpack.c.h.b16 %v921
        %v1202 = vunpack.c.l.b16 %v922
        %v1203 = vunpack.c.h.b16 %v922
        %v1204 = vunpack.c.l.b16 %v923
        %v1205 = vunpack.c.h.b16 %v923
        %v1206 = vunpack.c.l.b16 %v924
        %v1207 = vunpack.c.h.b16 %v924
        %v1208 = vunpack.c.l.b16 %v925
        %v1209 = vunpack.c.h.b16 %v925
        %v1210 = vunpack.c.l.b16 %v926
        %v1211 = vunpack.c.h.b16 %v926
        %v1212 = vunpack.c.l.b16 %v927
        %v1213 = vunpack.c.h.b16 %v927
        %v1214 = vunpack.c.l.b16 %v928
        %v1215 = vunpack.c.h.b16 %v928
        %v1216 = vunpack.c.l.b16 %v929
        %v1217 = vunpack.c.h.b16 %v929
        %v1218 = vunpack.c.l.b16 %v930
        %v1219 = vunpack.c.h.b16 %v930
        %v1220 = vunpack.c.l.b16 %v931
        %v1221 = vunpack.c.h.b16 %v931
        %v1222 = vunpack.c.l.b16 %v932
        %v1223 = vunpack.c.h.b16 %v932
        %v1224 = vunpack.c.l.b16 %v933
        %v1225 = vunpack.c.h.b16 %v933
        %v1226 = vunpack.c.l.b16 %v934
        %v1227 = vunpack.c.h.b16 %v934
        %v1228 = vunpack.c.l.b16 %v935
        %v1229 = vunpack.c.h.b16 %v935
        %v1230 = vunpack.c.l.b16 %v936
        %v1231 = vunpack.c.h.b16 %v936
        %v1232 = vunpack.c.l.b16 %v937
        %v1233 = vunpack.c.h.b16 %v937
        %v1234 = vunpack.c.l.b16 %v938
        %v1235 = vunpack.c.h.b16 %v938
        %v1236 = vunpack.c.l.b16 %v939
        %v1237 = vunpack.c.h.b16 %v939
        %v1238 = vunpack.c.l.b16 %v940
        %v1239 = vunpack.c.h.b16 %v940
        %v1240 = vunpack.c.l.b16 %v941
        %v1241 = vunpack.c.h.b16 %v941
        %v1242 = vunpack.c.l.b16 %v942
        %v1243 = vunpack.c.h.b16 %v942
        %v1244 = vunpack.c.l.b16 %v943
        %v1245 = vunpack.c.h.b16 %v943
        %v1246 = vunpack.c.l.b16 %v944
        %v1247 = vunpack.c.h.b16 %v944
        %v1248 = vunpack.c.l.b16 %v945
        %v1249 = vunpack.c.h.b16 %v945
        %v1250 = vunpack.c.l.b16 %v946
        %v1251 = vunpack.c.h.b16 %v946
        %v1252 = vunpack.c.l.b16 %v947
        %v1253 = vunpack.c.h.b16 %v947
        %v1254 = vunpack.c.l.b16 %v948
        %v1255 = vunpack.c.h.b16 %v948
        %v1256 = vunpack.c.l.b16 %v949
        %v1257 = vunpack.c.h.b16 %v949
        %v1258 = vunpack.c.l.b16 %v950
        %v1259 = vunpack.c.h.b16 %v950
        %v1260 = vunpack.c.l.b16 %v951
        %v1261 = vunpack.c.h.b16 %v951
        %v1262 = vunpack.c.l.b16 %v952
        %v1263 = vunpack.c.h.b16 %v952
        %v1264 = vunpack.c.l.b16 %v953
        %v1265 = vunpack.c.h.b16 %v953
        %v1266 = vunpack.c.l.b16 %v954
        %v1267 = vunpack.c.h.b16 %v954
        %v1268 = vunpack.c.l.b16 %v955
        %v1269 = vunpack.c.h.b16 %v955
        %v1270 = vunpack.c.l.b16 %v956
        %v1271 = vunpack.c.h.b16 %v956
        %v1272 = vunpack.c.l.b16 %v957
        %v1273 = vunpack.c.h.b16 %v957
        %v1274 = vunpack.c.l.b16 %v958
        %v1275 = vunpack.c.h.b16 %v958
        %v1276 = vunpack.c.l.b16 %v959
        %v1277 = vunpack.c.h.b16 %v959
        %v1278 = vunpack.c.l.b16 %v960
        %v1279 = vunpack.c.h.b16 %v960
        %v1280 = vunpack.c.l.b16 %v961
        %v1281 = vunpack.c.h.b16 %v961
        %v1282 = vunpack.c.l.b16 %v962
        %v1283 = vunpack.c.h.b16 %v962
        %v1284 = vunpack.c.l.b16 %v963
        %v1285 = vunpack.c.h.b16 %v963
        %v1286 = vunpack.c.l.b16 %v964
        %v1287 = vunpack.c.h.b16 %v964
        %v1288 = vunpack.c.l.b16 %v965
        %v1289 = vunpack.c.h.b16 %v965
        %v1290 = vunpack.c.l.b16 %v966
        %v1291 = vunpack.c.h.b16 %v966
        %v1292 = vunpack.c.l.b16 %v967
        %v1293 = vunpack.c.h.b16 %v967
        %v1294 = vunpack.c.l.b16 %v968
        %v1295 = vunpack.c.h.b16 %v968
        %v1296 = vunpack.c.l.b16 %v969
        %v1297 = vunpack.c.h.b16 %v969
        %v1298 = vunpack.c.l.b16 %v970
        %v1299 = vunpack.c.h.b16 %v970
        %v1300 = vunpack.c.l.b16 %v971
        %v1301 = vunpack.c.h.b16 %v971
        %v1302 = vunpack.c.l.b16 %v972
        %v1303 = vunpack.c.h.b16 %v972
        %v1304 = vunpack.c.l.b16 %v973
        %v1305 = vunpack.c.h.b16 %v973
        %v1306 = vunpack.c.l.b16 %v974
        %v1307 = vunpack.c.h.b16 %v974
        %v1308 = vunpack.c.l.b16 %v975
        %v1309 = vunpack.c.h.b16 %v975
        %v1310 = vunpack.c.l.b16 %v976
        %v1311 = vunpack.c.h.b16 %v976
        %v1312 = vunpack.c.l.b16 %v977
        %v1313 = vunpack.c.h.b16 %v977
        %v1314 = vunpack.c.l.b16 %v978
        %v1315 = vunpack.c.h.b16 %v978
        %v1316 = vunpack.c.l.b16 %v979
        %v1317 = vunpack.c.h.b16 %v979
        %v1318 = vunpack.c.l.b16 %v980
        %v1319 = vunpack.c.h.b16 %v980
        %v1320 = vunpack.c.l.b16 %v981
        %v1321 = vunpack.c.h.b16 %v981
        %v1322 = vunpack.c.l.b16 %v982
        %v1323 = vunpack.c.h.b16 %v982
        %v1324 = vunpack.c.l.b16 %v983
        %v1325 = vunpack.c.h.b16 %v983
        %v1326 = vunpack.c.l.b16 %v984
        %v1327 = vunpack.c.h.b16 %v984
        %v1328 = vunpack.c.l.b16 %v985
        %v1329 = vunpack.c.h.b16 %v985
        %v1330 = vunpack.c.l.b16 %v986
        %v1331 = vunpack.c.h.b16 %v986
        %v1332 = vunpack.c.l.b16 %v987
        %v1333 = vunpack.c.h.b16 %v987
        %v1334 = vunpack.c.l.b16 %v988
        %v1335 = vunpack.c.h.b16 %v988
        %v1336 = vunpack.c.l.b16 %v989
        %v1337 = vunpack.c.h.b16 %v989
        %v1338 = vunpack.c.l.b16 %v990
        %v1339 = vunpack.c.h.b16 %v990
        %v1340 = vunpack.c.l.b16 %v991
        %v1341 = vunpack.c.h.b16 %v991
        %v1342 = vunpack.c.l.b16 %v992
        %v1343 = vunpack.c.h.b16 %v992
        %v1344 = vunpack.c.l.b16 %v993
        %v1345 = vunpack.c.h.b16 %v993
        %v1346 = vpack.c.b16 %v1166, %v1154
        %v1347 = vpack.c.b16 %v1167, %v1155
        %v1348 = vpack.c.b16 %v1168, %v1156
        %v1349 = vpack.c.b16 %v1169, %v1157
        %v1350 = vpack.c.b16 %v1170, %v1158
        %v1351 = vpack.c.b16 %v1171, %v1159
        %v1352 = vpack.c.b16 %v1172, %v1160
        %v1353 = vpack.c.b16 %v1173, %v1161
        %v1354 = vpack.c.b16 %v1174, %v1162
        %v1355 = vpack.c.b16 %v1175, %v1163
        %v1356 = vpack.c.b16 %v1176, %v1164
        %v1357 = vpack.c.b16 %v1177, %v1165
        %v1358 = vpack.c.b16 %v1190, %v1178
        %v1359 = vpack.c.b16 %v1191, %v1179
        %v1360 = vpack.c.b16 %v1192, %v1180
        %v1361 = vpack.c.b16 %v1193, %v1181
        %v1362 = vpack.c.b16 %v1194, %v1182
        %v1363 = vpack.c.b16 %v1195, %v1183
        %v1364 = vpack.c.b16 %v1196, %v1184
        %v1365 = vpack.c.b16 %v1197, %v1185
        %v1366 = vpack.c.b16 %v1198, %v1186
        %v1367 = vpack.c.b16 %v1199, %v1187
        %v1368 = vpack.c.b16 %v1200, %v1188
        %v1369 = vpack.c.b16 %v1201, %v1189
        %v1370 = vpack.c.b16 %v1214, %v1202
        %v1371 = vpack.c.b16 %v1215, %v1203
        %v1372 = vpack.c.b16 %v1216, %v1204
        %v1373 = vpack.c.b16 %v1217, %v1205
        %v1374 = vpack.c.b16 %v1218, %v1206
        %v1375 = vpack.c.b16 %v1219, %v1207
        %v1376 = vpack.c.b16 %v1220, %v1208
        %v1377 = vpack.c.b16 %v1221, %v1209
        %v1378 = vpack.c.b16 %v1222, %v1210
        %v1379 = vpack.c.b16 %v1223, %v1211
        %v1380 = vpack.c.b16 %v1224, %v1212
        %v1381 = vpack.c.b16 %v1225, %v1213
        %v1382 = vpack.c.b16 %v1238, %v1226
        %v1383 = vpack.c.b16 %v1239, %v1227
        %v1384 = vpack.c.b16 %v1240, %v1228
        %v1385 = vpack.c.b16 %v1241, %v1229
        %v1386 = vpack.c.b16 %v1242, %v1230
        %v1387 = vpack.c.b16 %v1243, %v1231
        %v1388 = vpack.c.b16 %v1244, %v1232
        %v1389 = vpack.c.b16 %v1245, %v1233
        %v1390 = vpack.c.b16 %v1246, %v1234
        %v1391 = vpack.c.b16 %v1247, %v1235
        %v1392 = vpack.c.b16 %v1248, %v1236
        %v1393 = vpack.c.b16 %v1249, %v1237
        %v1394 = vpack.c.b16 %v1262, %v1250
        %v1395 = vpack.c.b16 %v1263, %v1251
        %v1396 = vpack.c.b16 %v1264, %v1252
        %v1397 = vpack.c.b16 %v1265, %v1253
        %v1398 = vpack.c.b16 %v1266, %v1254
        %v1399 = vpack.c.b16 %v1267, %v1255
        %v1400 = vpack.c.b16 %v1268, %v1256
        %v1401 = vpack.c.b16 %v1269, %v1257
        %v1402 = vpack.c.b16 %v1270, %v1258
        %v1403 = vpack.c.b16 %v1271, %v1259
        %v1404 = vpack.c.b16 %v1272, %v1260
        %v1405 = vpack.c.b16 %v1273, %v1261
        %v1406 = vpack.c.b16 %v1286, %v1274
        %v1407 = vpack.c.b16 %v1287, %v1275
        %v1408 = vpack.c.b16 %v1288, %v1276
        %v1409 = vpack.c.b16 %v1289, %v1277
        %v1410 = vpack.c.b16 %v1290, %v1278
        %v1411 = vpack.c.b16 %v1291, %v1279
        %v1412 = vpack.c.b16 %v1292, %v1280
        %v1413 = vpack.c.b16 %v1293, %v1281
        %v1414 = vpack.c.b16 %v1294, %v1282
        %v1415 = vpack.c.b16 %v1295, %v1283
        %v1416 = vpack.c.b16 %v1296, %v1284
        %v1417 = vpack.c.b16 %v1297, %v1285
        %v1418 = vpack.c.b16 %v1310, %v1298
        %v1419 = vpack.c.b16 %v1311, %v1299
        %v1420 = vpack.c.b16 %v1312, %v1300
        %v1421 = vpack.c.b16 %v1313, %v1301
        %v1422 = vpack.c.b16 %v1314, %v1302
        %v1423 = vpack.c.b16 %v1315, %v1303
        %v1424 = vpack.c.b16 %v1316, %v1304
        %v1425 = vpack.c.b16 %v1317, %v1305
        %v1426 = vpack.c.b16 %v1318, %v1306
        %v1427 = vpack.c.b16 %v1319, %v1307
        %v1428 = vpack.c.b16 %v1320, %v1308
        %v1429 = vpack.c.b16 %v1321, %v1309
        %v1430 = vpack.c.b16 %v1334, %v1322
        %v1431 = vpack.c.b16 %v1335, %v1323
        %v1432 = vpack.c.b16 %v1336, %v1324
        %v1433 = vpack.c.b16 %v1337, %v1325
        %v1434 = vpack.c.b16 %v1338, %v1326
        %v1435 = vpack.c.b16 %v1339, %v1327
        %v1436 = vpack.c.b16 %v1340, %v1328
        %v1437 = vpack.c.b16 %v1341, %v1329
        %v1438 = vpack.c.b16 %v1342, %v1330
        %v1439 = vpack.c.b16 %v1343, %v1331
        %v1440 = vpack.c.b16 %v1344, %v1332
        %v1441 = vpack.c.b16 %v1345, %v1333
        %1538 = vmatprep.subr.bf16.mxu0 %v1347
        %1539 = vmatpush1.bf16.msra.mxu0 %v1346
        %1540 = vmatprep.subr.bf16.mxu0 %v1359
        %1541 = vmatpush1.bf16.msra.mxu0 %v1358
        %1542 = vmatprep.subr.bf16.mxu0 %v1371
        %1543 = vmatpush1.bf16.msra.mxu0 %v1370
        %1544 = vmatprep.subr.bf16.mxu0 %v1383
        %1545 = vmatpush1.bf16.msra.mxu0 %v1382
        %1546 = vmatprep.subr.bf16.mxu0 %v1395
        %1547 = vmatpush1.bf16.msra.mxu0 %v1394
        %1548 = vmatprep.subr.bf16.mxu0 %v1407
        %1549 = vmatpush1.bf16.msra.mxu0 %v1406
        %1550 = vmatprep.subr.bf16.mxu0 %v1419
        %1551 = vmatpush1.bf16.msra.mxu0 %v1418
        %1552 = vmatprep.subr.bf16.mxu0 %v1431
        %1553 = vmatpush1.bf16.msra.mxu0 %v1430
        %1554 = vmatprep.subr.bf16.mxu0 0
        %1555 = vmatpush1.bf16.msra.mxu0 0
        %1556 = vmatprep.subr.bf16.mxu0 0
        %1557 = vmatpush1.bf16.msra.mxu0 0
        %1558 = vmatprep.subr.bf16.mxu0 0
        %1559 = vmatpush1.bf16.msra.mxu0 0
        %1560 = vmatprep.subr.bf16.mxu0 0
        %1561 = vmatpush1.bf16.msra.mxu0 0
        %1562 = vmatprep.subr.bf16.mxu0 0
        %1563 = vmatpush1.bf16.msra.mxu0 0
        %1564 = vmatprep.subr.bf16.mxu0 0
        %1565 = vmatpush1.bf16.msra.mxu0 0
        %1566 = vmatprep.subr.bf16.mxu0 0
        %1567 = vmatpush1.bf16.msra.mxu0 0
        %1568 = vmatprep.subr.bf16.mxu0 0
        %1569 = vmatpush1.bf16.msra.mxu0 0
        %1570 = vmatprep.mubr.bf16.mxu0 0
        %1571 = vmatmul.mubr.bf16.gmra.mrb[0].mxu0 %v897
        %v1572 = vpop.f32.mrb[0].mxu0
        %v1573 = vadd.f32 %v1001, %v1572
        %v1574 = vpop.f32.mrb[0].mxu0
        %v1575 = vadd.f32 %v1005, %v1574
        %v1576 = vpop.f32.mrb[0].mxu0
        %v1577 = vadd.f32 %v1001, %v1576
        %v1578 = vpop.f32.mrb[0].mxu0
        %v1579 = vadd.f32 %v1005, %v1578
        %1580 = vdwg.mxu0
        %1581 = vmatprep.subr.bf16.mxu0 %v1349
        %1582 = vmatpush1.bf16.msra.mxu0 %v1348
        %1583 = vmatprep.subr.bf16.mxu0 %v1361
        %1584 = vmatpush1.bf16.msra.mxu0 %v1360
        %1585 = vmatprep.subr.bf16.mxu0 %v1373
        %1586 = vmatpush1.bf16.msra.mxu0 %v1372
        %1587 = vmatprep.subr.bf16.mxu0 %v1385
        %1588 = vmatpush1.bf16.msra.mxu0 %v1384
        %1589 = vmatprep.subr.bf16.mxu0 %v1397
        %1590 = vmatpush1.bf16.msra.mxu0 %v1396
        %1591 = vmatprep.subr.bf16.mxu0 %v1409
        %1592 = vmatpush1.bf16.msra.mxu0 %v1408
        %1593 = vmatprep.subr.bf16.mxu0 %v1421
        %1594 = vmatpush1.bf16.msra.mxu0 %v1420
        %1595 = vmatprep.subr.bf16.mxu0 %v1433
        %1596 = vmatpush1.bf16.msra.mxu0 %v1432
        %1597 = vmatprep.subr.bf16.mxu0 0
        %1598 = vmatpush1.bf16.msra.mxu0 0
        %1599 = vmatprep.subr.bf16.mxu0 0
        %1600 = vmatpush1.bf16.msra.mxu0 0
        %1601 = vmatprep.subr.bf16.mxu0 0
        %1602 = vmatpush1.bf16.msra.mxu0 0
        %1603 = vmatprep.subr.bf16.mxu0 0
        %1604 = vmatpush1.bf16.msra.mxu0 0
        %1605 = vmatprep.subr.bf16.mxu0 0
        %1606 = vmatpush1.bf16.msra.mxu0 0
        %1607 = vmatprep.subr.bf16.mxu0 0
        %1608 = vmatpush1.bf16.msra.mxu0 0
        %1609 = vmatprep.subr.bf16.mxu0 0
        %1610 = vmatpush1.bf16.msra.mxu0 0
        %1611 = vmatprep.subr.bf16.mxu0 0
        %1612 = vmatpush1.bf16.msra.mxu0 0
        %1613 = vmatprep.mubr.bf16.mxu0 0
        %1614 = vmatmul.mubr.bf16.gmra.mrb[0].mxu0 %v897
        %v1615 = vpop.f32.mrb[0].mxu0
        %v1616 = vadd.f32 %v1009, %v1615
        %v1617 = vpop.f32.mrb[0].mxu0
        %v1618 = vadd.f32 %v1013, %v1617
        %v1619 = vpop.f32.mrb[0].mxu0
        %v1620 = vadd.f32 %v1009, %v1619
        %v1621 = vpop.f32.mrb[0].mxu0
        %v1622 = vadd.f32 %v1013, %v1621
        %1623 = vdwg.mxu0
        %1624 = vmatprep.subr.bf16.mxu0 %v1351
        %1625 = vmatpush1.bf16.msra.mxu0 %v1350
        %1626 = vmatprep.subr.bf16.mxu0 %v1363
        %1627 = vmatpush1.bf16.msra.mxu0 %v1362
        %1628 = vmatprep.subr.bf16.mxu0 %v1375
        %1629 = vmatpush1.bf16.msra.mxu0 %v1374
        %1630 = vmatprep.subr.bf16.mxu0 %v1387
        %1631 = vmatpush1.bf16.msra.mxu0 %v1386
        %1632 = vmatprep.subr.bf16.mxu0 %v1399
        %1633 = vmatpush1.bf16.msra.mxu0 %v1398
        %1634 = vmatprep.subr.bf16.mxu0 %v1411
        %1635 = vmatpush1.bf16.msra.mxu0 %v1410
        %1636 = vmatprep.subr.bf16.mxu0 %v1423
        %1637 = vmatpush1.bf16.msra.mxu0 %v1422
        %1638 = vmatprep.subr.bf16.mxu0 %v1435
        %1639 = vmatpush1.bf16.msra.mxu0 %v1434
        %1640 = vmatprep.subr.bf16.mxu0 0
        %1641 = vmatpush1.bf16.msra.mxu0 0
        %1642 = vmatprep.subr.bf16.mxu0 0
        %1643 = vmatpush1.bf16.msra.mxu0 0
        %1644 = vmatprep.subr.bf16.mxu0 0
        %1645 = vmatpush1.bf16.msra.mxu0 0
        %1646 = vmatprep.subr.bf16.mxu0 0
        %1647 = vmatpush1.bf16.msra.mxu0 0
        %1648 = vmatprep.subr.bf16.mxu0 0
        %1649 = vmatpush1.bf16.msra.mxu0 0
        %1650 = vmatprep.subr.bf16.mxu0 0
        %1651 = vmatpush1.bf16.msra.mxu0 0
        %1652 = vmatprep.subr.bf16.mxu0 0
        %1653 = vmatpush1.bf16.msra.mxu0 0
        %1654 = vmatprep.subr.bf16.mxu0 0
        %1655 = vmatpush1.bf16.msra.mxu0 0
        %1656 = vmatprep.mubr.bf16.mxu0 0
        %1657 = vmatmul.mubr.bf16.gmra.mrb[0].mxu0 %v897
        %v1658 = vpop.f32.mrb[0].mxu0
        %v1659 = vadd.f32 %v1017, %v1658
        %v1660 = vpop.f32.mrb[0].mxu0
        %v1661 = vadd.f32 %v1021, %v1660
        %v1662 = vpop.f32.mrb[0].mxu0
        %v1663 = vadd.f32 %v1017, %v1662
        %v1664 = vpop.f32.mrb[0].mxu0
        %v1665 = vadd.f32 %v1021, %v1664
        %1666 = vdwg.mxu0
        %1667 = vmatprep.subr.bf16.mxu0 %v1353
        %1668 = vmatpush1.bf16.msra.mxu0 %v1352
        %1669 = vmatprep.subr.bf16.mxu0 %v1365
        %1670 = vmatpush1.bf16.msra.mxu0 %v1364
        %1671 = vmatprep.subr.bf16.mxu0 %v1377
        %1672 = vmatpush1.bf16.msra.mxu0 %v1376
        %1673 = vmatprep.subr.bf16.mxu0 %v1389
        %1674 = vmatpush1.bf16.msra.mxu0 %v1388
        %1675 = vmatprep.subr.bf16.mxu0 %v1401
        %1676 = vmatpush1.bf16.msra.mxu0 %v1400
        %1677 = vmatprep.subr.bf16.mxu0 %v1413
        %1678 = vmatpush1.bf16.msra.mxu0 %v1412
        %1679 = vmatprep.subr.bf16.mxu0 %v1425
        %1680 = vmatpush1.bf16.msra.mxu0 %v1424
        %1681 = vmatprep.subr.bf16.mxu0 %v1437
        %1682 = vmatpush1.bf16.msra.mxu0 %v1436
        %1683 = vmatprep.subr.bf16.mxu0 0
        %1684 = vmatpush1.bf16.msra.mxu0 0
        %1685 = vmatprep.subr.bf16.mxu0 0
        %1686 = vmatpush1.bf16.msra.mxu0 0
        %1687 = vmatprep.subr.bf16.mxu0 0
        %1688 = vmatpush1.bf16.msra.mxu0 0
        %1689 = vmatprep.subr.bf16.mxu0 0
        %1690 = vmatpush1.bf16.msra.mxu0 0
        %1691 = vmatprep.subr.bf16.mxu0 0
        %1692 = vmatpush1.bf16.msra.mxu0 0
        %1693 = vmatprep.subr.bf16.mxu0 0
        %1694 = vmatpush1.bf16.msra.mxu0 0
        %1695 = vmatprep.subr.bf16.mxu0 0
        %1696 = vmatpush1.bf16.msra.mxu0 0
        %1697 = vmatprep.subr.bf16.mxu0 0
        %1698 = vmatpush1.bf16.msra.mxu0 0
        %1699 = vmatprep.mubr.bf16.mxu0 0
        %1700 = vmatmul.mubr.bf16.gmra.mrb[0].mxu0 %v897
        %v1701 = vpop.f32.mrb[0].mxu0
        %v1702 = vadd.f32 %v1025, %v1701
        %v1703 = vpop.f32.mrb[0].mxu0
        %v1704 = vadd.f32 %v1029, %v1703
        %v1705 = vpop.f32.mrb[0].mxu0
        %v1706 = vadd.f32 %v1025, %v1705
        %v1707 = vpop.f32.mrb[0].mxu0
        %v1708 = vadd.f32 %v1029, %v1707
        %1709 = vdwg.mxu0
        %1710 = vmatprep.subr.bf16.mxu0 %v1355
        %1711 = vmatpush1.bf16.msra.mxu0 %v1354
        %1712 = vmatprep.subr.bf16.mxu0 %v1367
        %1713 = vmatpush1.bf16.msra.mxu0 %v1366
        %1714 = vmatprep.subr.bf16.mxu0 %v1379
        %1715 = vmatpush1.bf16.msra.mxu0 %v1378
        %1716 = vmatprep.subr.bf16.mxu0 %v1391
        %1717 = vmatpush1.bf16.msra.mxu0 %v1390
        %1718 = vmatprep.subr.bf16.mxu0 %v1403
        %1719 = vmatpush1.bf16.msra.mxu0 %v1402
        %1720 = vmatprep.subr.bf16.mxu0 %v1415
        %1721 = vmatpush1.bf16.msra.mxu0 %v1414
        %1722 = vmatprep.subr.bf16.mxu0 %v1427
        %1723 = vmatpush1.bf16.msra.mxu0 %v1426
        %1724 = vmatprep.subr.bf16.mxu0 %v1439
        %1725 = vmatpush1.bf16.msra.mxu0 %v1438
        %1726 = vmatprep.subr.bf16.mxu0 0
        %1727 = vmatpush1.bf16.msra.mxu0 0
        %1728 = vmatprep.subr.bf16.mxu0 0
        %1729 = vmatpush1.bf16.msra.mxu0 0
        %1730 = vmatprep.subr.bf16.mxu0 0
        %1731 = vmatpush1.bf16.msra.mxu0 0
        %1732 = vmatprep.subr.bf16.mxu0 0
        %1733 = vmatpush1.bf16.msra.mxu0 0
        %1734 = vmatprep.subr.bf16.mxu0 0
        %1735 = vmatpush1.bf16.msra.mxu0 0
        %1736 = vmatprep.subr.bf16.mxu0 0
        %1737 = vmatpush1.bf16.msra.mxu0 0
        %1738 = vmatprep.subr.bf16.mxu0 0
        %1739 = vmatpush1.bf16.msra.mxu0 0
        %1740 = vmatprep.subr.bf16.mxu0 0
        %1741 = vmatpush1.bf16.msra.mxu0 0
        %1742 = vmatprep.mubr.bf16.mxu0 0
        %1743 = vmatmul.mubr.bf16.gmra.mrb[0].mxu0 %v897
        %v1744 = vpop.f32.mrb[0].mxu0
        %v1745 = vadd.f32 %v1033, %v1744
        %v1746 = vpop.f32.mrb[0].mxu0
        %v1747 = vadd.f32 %v1037, %v1746
        %v1748 = vpop.f32.mrb[0].mxu0
        %v1749 = vadd.f32 %v1033, %v1748
        %v1750 = vpop.f32.mrb[0].mxu0
        %v1751 = vadd.f32 %v1037, %v1750
        %1752 = vdwg.mxu0
        %1753 = vmatprep.subr.bf16.mxu0 %v1357
        %1754 = vmatpush1.bf16.msra.mxu0 %v1356
        %1755 = vmatprep.subr.bf16.mxu0 %v1369
        %1756 = vmatpush1.bf16.msra.mxu0 %v1368
        %1757 = vmatprep.subr.bf16.mxu0 %v1381
        %1758 = vmatpush1.bf16.msra.mxu0 %v1380
        %1759 = vmatprep.subr.bf16.mxu0 %v1393
        %1760 = vmatpush1.bf16.msra.mxu0 %v1392
        %1761 = vmatprep.subr.bf16.mxu0 %v1405
        %1762 = vmatpush1.bf16.msra.mxu0 %v1404
        %1763 = vmatprep.subr.bf16.mxu0 %v1417
        %1764 = vmatpush1.bf16.msra.mxu0 %v1416
        %1765 = vmatprep.subr.bf16.mxu0 %v1429
        %1766 = vmatpush1.bf16.msra.mxu0 %v1428
        %1767 = vmatprep.subr.bf16.mxu0 %v1441
        %1768 = vmatpush1.bf16.msra.mxu0 %v1440
        %1769 = vmatprep.subr.bf16.mxu0 0
        %1770 = vmatpush1.bf16.msra.mxu0 0
        %1771 = vmatprep.subr.bf16.mxu0 0
        %1772 = vmatpush1.bf16.msra.mxu0 0
        %1773 = vmatprep.subr.bf16.mxu0 0
        %1774 = vmatpush1.bf16.msra.mxu0 0
        %1775 = vmatprep.subr.bf16.mxu0 0
        %1776 = vmatpush1.bf16.msra.mxu0 0
        %1777 = vmatprep.subr.bf16.mxu0 0
        %1778 = vmatpush1.bf16.msra.mxu0 0
        %1779 = vmatprep.subr.bf16.mxu0 0
        %1780 = vmatpush1.bf16.msra.mxu0 0
        %1781 = vmatprep.subr.bf16.mxu0 0
        %1782 = vmatpush1.bf16.msra.mxu0 0
        %1783 = vmatprep.subr.bf16.mxu0 0
        %1784 = vmatpush1.bf16.msra.mxu0 0
        %1785 = vmatprep.mubr.bf16.mxu0 0
        %1786 = vmatmul.mubr.bf16.gmra.mrb[0].mxu0 %v897
        %v1787 = vpop.f32.mrb[0].mxu0
        %v1788 = vadd.f32 %v1041, %v1787
        %v1789 = vpop.f32.mrb[0].mxu0
        %v1790 = vadd.f32 %v1045, %v1789
        %v1791 = vpop.f32.mrb[0].mxu0
        %v1792 = vadd.f32 %v1041, %v1791
        %v1793 = vpop.f32.mrb[0].mxu0
        %v1794 = vadd.f32 %v1045, %v1793
        %1795 = vdwg.mxu0
        %v1796 = vpack.c.bf16 %v1577, %v1573
        %v1797 = vpack.c.bf16 %v1579, %v1575
        %v1798 = vpack.c.bf16 %v1620, %v1616
        %v1799 = vpack.c.bf16 %v1622, %v1618
        %v1800 = vpack.c.bf16 %v1663, %v1659
        %v1801 = vpack.c.bf16 %v1665, %v1661
        %v1802 = vpack.c.bf16 %v1706, %v1702
        %v1803 = vpack.c.bf16 %v1708, %v1704
        %v1804 = vpack.c.bf16 %v1749, %v1745
        %v1805 = vpack.c.bf16 %v1751, %v1747
        %v1806 = vpack.c.bf16 %v1792, %v1788
        %v1807 = vpack.c.bf16 %v1794, %v1790
        %1808 = vmatprep.subr.bf16.mxu0 0
        %1809 = vmatpush1.bf16.xpose.msra.mxu0 %v1800
        %1810 = vmatprep.subr.bf16.mxu0 0
        %1811 = vmatpush1.bf16.xpose.msra.mxu0 0
        %1812 = vmatprep.subr.bf16.mxu0 0
        %1813 = vmatpush1.bf16.xpose.msra.mxu0 0
        %1814 = vmatprep.subr.bf16.mxu0 0
        %1815 = vmatpush1.bf16.xpose.msra.mxu0 0
        %1816 = vmatprep.subr.bf16.mxu0 0
        %1817 = vmatpush1.bf16.xpose.msra.mxu0 0
        %1818 = vmatprep.subr.bf16.mxu0 0
        %1819 = vmatpush1.bf16.xpose.msra.mxu0 0
        %1820 = vmatprep.subr.bf16.mxu0 0
        %1821 = vmatpush1.bf16.xpose.msra.mxu0 0
        %1822 = vmatprep.subr.bf16.mxu0 0
        %1823 = vmatpush1.bf16.xpose.msra.mxu0 0
        %1824 = vmatprep.subr.bf16.mxu0 0
        %1825 = vmatpush1.bf16.xpose.msra.mxu0 0
        %1826 = vmatprep.subr.bf16.mxu0 0
        %1827 = vmatpush1.bf16.xpose.msra.mxu0 0
        %1828 = vmatprep.subr.bf16.mxu0 0
        %1829 = vmatpush1.bf16.xpose.msra.mxu0 0
        %1830 = vmatprep.subr.bf16.mxu0 0
        %1831 = vmatpush1.bf16.xpose.msra.mxu0 0
        %1832 = vmatprep.subr.bf16.mxu0 0
        %1833 = vmatpush1.bf16.xpose.msra.mxu0 0
        %1834 = vmatprep.subr.bf16.mxu0 0
        %1835 = vmatpush1.bf16.xpose.msra.mxu0 0
        %1836 = vmatprep.subr.bf16.mxu0 0
        %1837 = vmatpush1.bf16.xpose.msra.mxu0 0
        %1838 = vmatprep.subr.bf16.mxu0 0
        %1839 = vmatpush1.bf16.xpose.msra.mxu0 0
        %1840 = vmatprep.mubr.bf16.mxu0 0
        %1841 = vmatmul.mubr.bf16.gmra.mrb[0].mxu0 %v1796
        %v1842 = vpop.f32.mrb[0].mxu0
        %v1843 = vadd.f32 %v895, %v1842
        %v1844 = vpop.f32.mrb[0].mxu0
        %v1845 = vpop.f32.mrb[0].mxu0
        %v1846 = vadd.f32 %v896, %v1845
        %v1847 = vpop.f32.mrb[0].mxu0
        %1848 = vdwg.mxu0
        %vm1849 = vcmask 130048
        %v1850 = vsel %vm1849, %v1843, -inf
        %1851 = vmax.xlane.f32.xlu0 %v1850
        %v1852 = vpop.xlane.xlu0 %1851
        %v1853 = vsel %vm1849, %v1846, -inf
        %1854 = vmax.xlane.f32.xlu0 %v1853
        %v1855 = vpop.xlane.xlu0 %1854
        %v1856 = vsub.f32 %v1843, %v1852
        %v1857 = vsub.f32 %v1846, %v1855
        %v1858 = vmul.f32 %v1856, 1.442695
        %v1859 = vpow.pop %v1858
        %v1860 = vmul.f32 %v1857, 1.442695
        %v1861 = vpow.pop %v1860
        %v1862 = vsel %vm1849, %v1859, 0.0
        %1863 = vadd.xlane.f32.xlu0 %v1862
        %v1864 = vpop.xlane.xlu0 %1863
        %v1865 = vsel %vm1849, %v1861, 0.0
        %1866 = vadd.xlane.f32.xlu0 %v1865
        %v1867 = vpop.xlane.xlu0 %1866
        %v1868 = vrcp.pop %v1864
        %v1869 = vrcp.pop %v1867
        %v1870 = vmul.f32 %v1859, %v1868
        %v1871 = vmul.f32 %v1861, %v1869
        %v1872 = vpack.c.bf16 %v1871, %v1870
        %v1874 = vsel %vm1849, %v1872, 0
        %1876 = vmatprep.subr.bf16.mxu0 0
        %1877 = vmatpush1.bf16.msra.mxu0 %v1804
        %1878 = vmatprep.subr.bf16.mxu0 0
        %1879 = vmatpush1.bf16.msra.mxu0 0
        %1880 = vmatprep.subr.bf16.mxu0 0
        %1881 = vmatpush1.bf16.msra.mxu0 0
        %1882 = vmatprep.subr.bf16.mxu0 0
        %1883 = vmatpush1.bf16.msra.mxu0 0
        %1884 = vmatprep.subr.bf16.mxu0 0
        %1885 = vmatpush1.bf16.msra.mxu0 0
        %1886 = vmatprep.subr.bf16.mxu0 0
        %1887 = vmatpush1.bf16.msra.mxu0 0
        %1888 = vmatprep.subr.bf16.mxu0 0
        %1889 = vmatpush1.bf16.msra.mxu0 0
        %1890 = vmatprep.subr.bf16.mxu0 0
        %1891 = vmatpush1.bf16.msra.mxu0 0
        %1892 = vmatprep.subr.bf16.mxu0 0
        %1893 = vmatpush1.bf16.msra.mxu0 0
        %1894 = vmatprep.subr.bf16.mxu0 0
        %1895 = vmatpush1.bf16.msra.mxu0 0
        %1896 = vmatprep.subr.bf16.mxu0 0
        %1897 = vmatpush1.bf16.msra.mxu0 0
        %1898 = vmatprep.subr.bf16.mxu0 0
        %1899 = vmatpush1.bf16.msra.mxu0 0
        %1900 = vmatprep.subr.bf16.mxu0 0
        %1901 = vmatpush1.bf16.msra.mxu0 0
        %1902 = vmatprep.subr.bf16.mxu0 0
        %1903 = vmatpush1.bf16.msra.mxu0 0
        %1904 = vmatprep.subr.bf16.mxu0 0
        %1905 = vmatpush1.bf16.msra.mxu0 0
        %1906 = vmatprep.subr.bf16.mxu0 0
        %1907 = vmatpush1.bf16.msra.mxu0 0
        %1908 = vmatprep.mubr.bf16.mxu0 0
        %1909 = vmatmul.mubr.bf16.gmra.mrb[0].mxu0 %v1874
        %v1910 = vpop.f32.mrb[0].mxu0
        %v1911 = vadd.f32 0.0, %v1910
        %v1912 = vpop.f32.mrb[0].mxu0
        %v1913 = vpop.f32.mrb[0].mxu0
        %v1914 = vadd.f32 0.0, %v1913
        %v1915 = vpop.f32.mrb[0].mxu0
        %1916 = vdwg.mxu0
        %1917 = vmatprep.subr.bf16.mxu0 0
        %1918 = vmatpush1.bf16.xpose.msra.mxu0 %v1801
        %1919 = vmatprep.subr.bf16.mxu0 0
        %1920 = vmatpush1.bf16.xpose.msra.mxu0 0
        %1921 = vmatprep.subr.bf16.mxu0 0
        %1922 = vmatpush1.bf16.xpose.msra.mxu0 0
        %1923 = vmatprep.subr.bf16.mxu0 0
        %1924 = vmatpush1.bf16.xpose.msra.mxu0 0
        %1925 = vmatprep.subr.bf16.mxu0 0
        %1926 = vmatpush1.bf16.xpose.msra.mxu0 0
        %1927 = vmatprep.subr.bf16.mxu0 0
        %1928 = vmatpush1.bf16.xpose.msra.mxu0 0
        %1929 = vmatprep.subr.bf16.mxu0 0
        %1930 = vmatpush1.bf16.xpose.msra.mxu0 0
        %1931 = vmatprep.subr.bf16.mxu0 0
        %1932 = vmatpush1.bf16.xpose.msra.mxu0 0
        %1933 = vmatprep.subr.bf16.mxu0 0
        %1934 = vmatpush1.bf16.xpose.msra.mxu0 0
        %1935 = vmatprep.subr.bf16.mxu0 0
        %1936 = vmatpush1.bf16.xpose.msra.mxu0 0
        %1937 = vmatprep.subr.bf16.mxu0 0
        %1938 = vmatpush1.bf16.xpose.msra.mxu0 0
        %1939 = vmatprep.subr.bf16.mxu0 0
        %1940 = vmatpush1.bf16.xpose.msra.mxu0 0
        %1941 = vmatprep.subr.bf16.mxu0 0
        %1942 = vmatpush1.bf16.xpose.msra.mxu0 0
        %1943 = vmatprep.subr.bf16.mxu0 0
        %1944 = vmatpush1.bf16.xpose.msra.mxu0 0
        %1945 = vmatprep.subr.bf16.mxu0 0
        %1946 = vmatpush1.bf16.xpose.msra.mxu0 0
        %1947 = vmatprep.subr.bf16.mxu0 0
        %1948 = vmatpush1.bf16.xpose.msra.mxu0 0
        %1949 = vmatprep.mubr.bf16.mxu0 0
        %1950 = vmatmul.mubr.bf16.gmra.mrb[0].mxu0 %v1797
        %v1951 = vpop.f32.mrb[0].mxu0
        %v1952 = vadd.f32 %v895, %v1951
        %v1953 = vpop.f32.mrb[0].mxu0
        %v1954 = vpop.f32.mrb[0].mxu0
        %v1955 = vadd.f32 %v896, %v1954
        %v1956 = vpop.f32.mrb[0].mxu0
        %1957 = vdwg.mxu0
        %v1958 = vsel %vm1849, %v1952, -inf
        %1959 = vmax.xlane.f32.xlu0 %v1958
        %v1960 = vpop.xlane.xlu0 %1959
        %v1961 = vsel %vm1849, %v1955, -inf
        %1962 = vmax.xlane.f32.xlu0 %v1961
        %v1963 = vpop.xlane.xlu0 %1962
        %v1964 = vsub.f32 %v1952, %v1960
        %v1965 = vsub.f32 %v1955, %v1963
        %v1966 = vmul.f32 %v1964, 1.442695
        %v1967 = vpow.pop %v1966
        %v1968 = vmul.f32 %v1965, 1.442695
        %v1969 = vpow.pop %v1968
        %v1970 = vsel %vm1849, %v1967, 0.0
        %1971 = vadd.xlane.f32.xlu0 %v1970
        %v1972 = vpop.xlane.xlu0 %1971
        %v1973 = vsel %vm1849, %v1969, 0.0
        %1974 = vadd.xlane.f32.xlu0 %v1973
        %v1975 = vpop.xlane.xlu0 %1974
        %v1976 = vrcp.pop %v1972
        %v1977 = vrcp.pop %v1975
        %v1978 = vmul.f32 %v1967, %v1976
        %v1979 = vmul.f32 %v1969, %v1977
        %v1980 = vpack.c.bf16 %v1979, %v1978
        %v1982 = vsel %vm1849, %v1980, 0
        %1984 = vmatprep.subr.bf16.mxu0 0
        %1985 = vmatpush1.bf16.msra.mxu0 %v1805
        %1986 = vmatprep.subr.bf16.mxu0 0
        %1987 = vmatpush1.bf16.msra.mxu0 0
        %1988 = vmatprep.subr.bf16.mxu0 0
        %1989 = vmatpush1.bf16.msra.mxu0 0
        %1990 = vmatprep.subr.bf16.mxu0 0
        %1991 = vmatpush1.bf16.msra.mxu0 0
        %1992 = vmatprep.subr.bf16.mxu0 0
        %1993 = vmatpush1.bf16.msra.mxu0 0
        %1994 = vmatprep.subr.bf16.mxu0 0
        %1995 = vmatpush1.bf16.msra.mxu0 0
        %1996 = vmatprep.subr.bf16.mxu0 0
        %1997 = vmatpush1.bf16.msra.mxu0 0
        %1998 = vmatprep.subr.bf16.mxu0 0
        %1999 = vmatpush1.bf16.msra.mxu0 0
        %2000 = vmatprep.subr.bf16.mxu0 0
        %2001 = vmatpush1.bf16.msra.mxu0 0
        %2002 = vmatprep.subr.bf16.mxu0 0
        %2003 = vmatpush1.bf16.msra.mxu0 0
        %2004 = vmatprep.subr.bf16.mxu0 0
        %2005 = vmatpush1.bf16.msra.mxu0 0
        %2006 = vmatprep.subr.bf16.mxu0 0
        %2007 = vmatpush1.bf16.msra.mxu0 0
        %2008 = vmatprep.subr.bf16.mxu0 0
        %2009 = vmatpush1.bf16.msra.mxu0 0
        %2010 = vmatprep.subr.bf16.mxu0 0
        %2011 = vmatpush1.bf16.msra.mxu0 0
        %2012 = vmatprep.subr.bf16.mxu0 0
        %2013 = vmatpush1.bf16.msra.mxu0 0
        %2014 = vmatprep.subr.bf16.mxu0 0
        %2015 = vmatpush1.bf16.msra.mxu0 0
        %2016 = vmatprep.mubr.bf16.mxu0 0
        %2017 = vmatmul.mubr.bf16.gmra.mrb[0].mxu0 %v1982
        %v2018 = vpop.f32.mrb[0].mxu0
        %v2019 = vadd.f32 0.0, %v2018
        %v2020 = vpop.f32.mrb[0].mxu0
        %v2021 = vpop.f32.mrb[0].mxu0
        %v2022 = vadd.f32 0.0, %v2021
        %v2023 = vpop.f32.mrb[0].mxu0
        %2024 = vdwg.mxu0
        %2025 = vmatprep.subr.bf16.mxu0 0
        %2026 = vmatpush1.bf16.xpose.msra.mxu0 %v1802
        %2027 = vmatprep.subr.bf16.mxu0 0
        %2028 = vmatpush1.bf16.xpose.msra.mxu0 0
        %2029 = vmatprep.subr.bf16.mxu0 0
        %2030 = vmatpush1.bf16.xpose.msra.mxu0 0
        %2031 = vmatprep.subr.bf16.mxu0 0
        %2032 = vmatpush1.bf16.xpose.msra.mxu0 0
        %2033 = vmatprep.subr.bf16.mxu0 0
        %2034 = vmatpush1.bf16.xpose.msra.mxu0 0
        %2035 = vmatprep.subr.bf16.mxu0 0
        %2036 = vmatpush1.bf16.xpose.msra.mxu0 0
        %2037 = vmatprep.subr.bf16.mxu0 0
        %2038 = vmatpush1.bf16.xpose.msra.mxu0 0
        %2039 = vmatprep.subr.bf16.mxu0 0
        %2040 = vmatpush1.bf16.xpose.msra.mxu0 0
        %2041 = vmatprep.subr.bf16.mxu0 0
        %2042 = vmatpush1.bf16.xpose.msra.mxu0 0
        %2043 = vmatprep.subr.bf16.mxu0 0
        %2044 = vmatpush1.bf16.xpose.msra.mxu0 0
        %2045 = vmatprep.subr.bf16.mxu0 0
        %2046 = vmatpush1.bf16.xpose.msra.mxu0 0
        %2047 = vmatprep.subr.bf16.mxu0 0
        %2048 = vmatpush1.bf16.xpose.msra.mxu0 0
        %2049 = vmatprep.subr.bf16.mxu0 0
        %2050 = vmatpush1.bf16.xpose.msra.mxu0 0
        %2051 = vmatprep.subr.bf16.mxu0 0
        %2052 = vmatpush1.bf16.xpose.msra.mxu0 0
        %2053 = vmatprep.subr.bf16.mxu0 0
        %2054 = vmatpush1.bf16.xpose.msra.mxu0 0
        %2055 = vmatprep.subr.bf16.mxu0 0
        %2056 = vmatpush1.bf16.xpose.msra.mxu0 0
        %2057 = vmatprep.mubr.bf16.mxu0 0
        %2058 = vmatmul.mubr.bf16.gmra.mrb[0].mxu0 %v1798
        %v2059 = vpop.f32.mrb[0].mxu0
        %v2060 = vadd.f32 %v895, %v2059
        %v2061 = vpop.f32.mrb[0].mxu0
        %v2062 = vpop.f32.mrb[0].mxu0
        %v2063 = vadd.f32 %v896, %v2062
        %v2064 = vpop.f32.mrb[0].mxu0
        %2065 = vdwg.mxu0
        %v2066 = vsel %vm1849, %v2060, -inf
        %2067 = vmax.xlane.f32.xlu0 %v2066
        %v2068 = vpop.xlane.xlu0 %2067
        %v2069 = vsel %vm1849, %v2063, -inf
        %2070 = vmax.xlane.f32.xlu0 %v2069
        %v2071 = vpop.xlane.xlu0 %2070
        %v2072 = vsub.f32 %v2060, %v2068
        %v2073 = vsub.f32 %v2063, %v2071
        %v2074 = vmul.f32 %v2072, 1.442695
        %v2075 = vpow.pop %v2074
        %v2076 = vmul.f32 %v2073, 1.442695
        %v2077 = vpow.pop %v2076
        %v2078 = vsel %vm1849, %v2075, 0.0
        %2079 = vadd.xlane.f32.xlu0 %v2078
        %v2080 = vpop.xlane.xlu0 %2079
        %v2081 = vsel %vm1849, %v2077, 0.0
        %2082 = vadd.xlane.f32.xlu0 %v2081
        %v2083 = vpop.xlane.xlu0 %2082
        %v2084 = vrcp.pop %v2080
        %v2085 = vrcp.pop %v2083
        %v2086 = vmul.f32 %v2075, %v2084
        %v2087 = vmul.f32 %v2077, %v2085
        %v2088 = vpack.c.bf16 %v2087, %v2086
        %v2090 = vsel %vm1849, %v2088, 0
        %2092 = vmatprep.subr.bf16.mxu0 0
        %2093 = vmatpush1.bf16.msra.mxu0 %v1806
        %2094 = vmatprep.subr.bf16.mxu0 0
        %2095 = vmatpush1.bf16.msra.mxu0 0
        %2096 = vmatprep.subr.bf16.mxu0 0
        %2097 = vmatpush1.bf16.msra.mxu0 0
        %2098 = vmatprep.subr.bf16.mxu0 0
        %2099 = vmatpush1.bf16.msra.mxu0 0
        %2100 = vmatprep.subr.bf16.mxu0 0
        %2101 = vmatpush1.bf16.msra.mxu0 0
        %2102 = vmatprep.subr.bf16.mxu0 0
        %2103 = vmatpush1.bf16.msra.mxu0 0
        %2104 = vmatprep.subr.bf16.mxu0 0
        %2105 = vmatpush1.bf16.msra.mxu0 0
        %2106 = vmatprep.subr.bf16.mxu0 0
        %2107 = vmatpush1.bf16.msra.mxu0 0
        %2108 = vmatprep.subr.bf16.mxu0 0
        %2109 = vmatpush1.bf16.msra.mxu0 0
        %2110 = vmatprep.subr.bf16.mxu0 0
        %2111 = vmatpush1.bf16.msra.mxu0 0
        %2112 = vmatprep.subr.bf16.mxu0 0
        %2113 = vmatpush1.bf16.msra.mxu0 0
        %2114 = vmatprep.subr.bf16.mxu0 0
        %2115 = vmatpush1.bf16.msra.mxu0 0
        %2116 = vmatprep.subr.bf16.mxu0 0
        %2117 = vmatpush1.bf16.msra.mxu0 0
        %2118 = vmatprep.subr.bf16.mxu0 0
        %2119 = vmatpush1.bf16.msra.mxu0 0
        %2120 = vmatprep.subr.bf16.mxu0 0
        %2121 = vmatpush1.bf16.msra.mxu0 0
        %2122 = vmatprep.subr.bf16.mxu0 0
        %2123 = vmatpush1.bf16.msra.mxu0 0
        %2124 = vmatprep.mubr.bf16.mxu0 0
        %2125 = vmatmul.mubr.bf16.gmra.mrb[0].mxu0 %v2090
        %v2126 = vpop.f32.mrb[0].mxu0
        %v2127 = vadd.f32 0.0, %v2126
        %v2128 = vpop.f32.mrb[0].mxu0
        %v2129 = vpop.f32.mrb[0].mxu0
        %v2130 = vadd.f32 0.0, %v2129
        %v2131 = vpop.f32.mrb[0].mxu0
        %2132 = vdwg.mxu0
        %2133 = vmatprep.subr.bf16.mxu0 0
        %2134 = vmatpush1.bf16.xpose.msra.mxu0 %v1803
        %2135 = vmatprep.subr.bf16.mxu0 0
        %2136 = vmatpush1.bf16.xpose.msra.mxu0 0
        %2137 = vmatprep.subr.bf16.mxu0 0
        %2138 = vmatpush1.bf16.xpose.msra.mxu0 0
        %2139 = vmatprep.subr.bf16.mxu0 0
        %2140 = vmatpush1.bf16.xpose.msra.mxu0 0
        %2141 = vmatprep.subr.bf16.mxu0 0
        %2142 = vmatpush1.bf16.xpose.msra.mxu0 0
        %2143 = vmatprep.subr.bf16.mxu0 0
        %2144 = vmatpush1.bf16.xpose.msra.mxu0 0
        %2145 = vmatprep.subr.bf16.mxu0 0
        %2146 = vmatpush1.bf16.xpose.msra.mxu0 0
        %2147 = vmatprep.subr.bf16.mxu0 0
        %2148 = vmatpush1.bf16.xpose.msra.mxu0 0
        %2149 = vmatprep.subr.bf16.mxu0 0
        %2150 = vmatpush1.bf16.xpose.msra.mxu0 0
        %2151 = vmatprep.subr.bf16.mxu0 0
        %2152 = vmatpush1.bf16.xpose.msra.mxu0 0
        %2153 = vmatprep.subr.bf16.mxu0 0
        %2154 = vmatpush1.bf16.xpose.msra.mxu0 0
        %2155 = vmatprep.subr.bf16.mxu0 0
        %2156 = vmatpush1.bf16.xpose.msra.mxu0 0
        %2157 = vmatprep.subr.bf16.mxu0 0
        %2158 = vmatpush1.bf16.xpose.msra.mxu0 0
        %2159 = vmatprep.subr.bf16.mxu0 0
        %2160 = vmatpush1.bf16.xpose.msra.mxu0 0
        %2161 = vmatprep.subr.bf16.mxu0 0
        %2162 = vmatpush1.bf16.xpose.msra.mxu0 0
        %2163 = vmatprep.subr.bf16.mxu0 0
        %2164 = vmatpush1.bf16.xpose.msra.mxu0 0
        %2165 = vmatprep.mubr.bf16.mxu0 0
        %2166 = vmatmul.mubr.bf16.gmra.mrb[0].mxu0 %v1799
        %v2167 = vpop.f32.mrb[0].mxu0
        %v2168 = vadd.f32 %v895, %v2167
        %v2169 = vpop.f32.mrb[0].mxu0
        %v2170 = vpop.f32.mrb[0].mxu0
        %v2171 = vadd.f32 %v896, %v2170
        %v2172 = vpop.f32.mrb[0].mxu0
        %2173 = vdwg.mxu0
        %v2174 = vsel %vm1849, %v2168, -inf
        %2175 = vmax.xlane.f32.xlu0 %v2174
        %v2176 = vpop.xlane.xlu0 %2175
        %v2177 = vsel %vm1849, %v2171, -inf
        %2178 = vmax.xlane.f32.xlu0 %v2177
        %v2179 = vpop.xlane.xlu0 %2178
        %v2180 = vsub.f32 %v2168, %v2176
        %v2181 = vsub.f32 %v2171, %v2179
        %v2182 = vmul.f32 %v2180, 1.442695
        %v2183 = vpow.pop %v2182
        %v2184 = vmul.f32 %v2181, 1.442695
        %v2185 = vpow.pop %v2184
        %v2186 = vsel %vm1849, %v2183, 0.0
        %2187 = vadd.xlane.f32.xlu0 %v2186
        %v2188 = vpop.xlane.xlu0 %2187
        %v2189 = vsel %vm1849, %v2185, 0.0
        %2190 = vadd.xlane.f32.xlu0 %v2189
        %v2191 = vpop.xlane.xlu0 %2190
        %v2192 = vrcp.pop %v2188
        %v2193 = vrcp.pop %v2191
        %v2194 = vmul.f32 %v2183, %v2192
        %v2195 = vmul.f32 %v2185, %v2193
        %v2196 = vpack.c.bf16 %v2195, %v2194
        %v2198 = vsel %vm1849, %v2196, 0
        %2200 = vmatprep.subr.bf16.mxu0 0
        %2201 = vmatpush1.bf16.msra.mxu0 %v1807
        %2202 = vmatprep.subr.bf16.mxu0 0
        %2203 = vmatpush1.bf16.msra.mxu0 0
        %2204 = vmatprep.subr.bf16.mxu0 0
        %2205 = vmatpush1.bf16.msra.mxu0 0
        %2206 = vmatprep.subr.bf16.mxu0 0
        %2207 = vmatpush1.bf16.msra.mxu0 0
        %2208 = vmatprep.subr.bf16.mxu0 0
        %2209 = vmatpush1.bf16.msra.mxu0 0
        %2210 = vmatprep.subr.bf16.mxu0 0
        %2211 = vmatpush1.bf16.msra.mxu0 0
        %2212 = vmatprep.subr.bf16.mxu0 0
        %2213 = vmatpush1.bf16.msra.mxu0 0
        %2214 = vmatprep.subr.bf16.mxu0 0
        %2215 = vmatpush1.bf16.msra.mxu0 0
        %2216 = vmatprep.subr.bf16.mxu0 0
        %2217 = vmatpush1.bf16.msra.mxu0 0
        %2218 = vmatprep.subr.bf16.mxu0 0
        %2219 = vmatpush1.bf16.msra.mxu0 0
        %2220 = vmatprep.subr.bf16.mxu0 0
        %2221 = vmatpush1.bf16.msra.mxu0 0
        %2222 = vmatprep.subr.bf16.mxu0 0
        %2223 = vmatpush1.bf16.msra.mxu0 0
        %2224 = vmatprep.subr.bf16.mxu0 0
        %2225 = vmatpush1.bf16.msra.mxu0 0
        %2226 = vmatprep.subr.bf16.mxu0 0
        %2227 = vmatpush1.bf16.msra.mxu0 0
        %2228 = vmatprep.subr.bf16.mxu0 0
        %2229 = vmatpush1.bf16.msra.mxu0 0
        %2230 = vmatprep.subr.bf16.mxu0 0
        %2231 = vmatpush1.bf16.msra.mxu0 0
        %2232 = vmatprep.mubr.bf16.mxu0 0
        %2233 = vmatmul.mubr.bf16.gmra.mrb[0].mxu0 %v2198
        %v2234 = vpop.f32.mrb[0].mxu0
        %v2235 = vadd.f32 0.0, %v2234
        %v2236 = vpop.f32.mrb[0].mxu0
        %v2237 = vpop.f32.mrb[0].mxu0
        %v2238 = vadd.f32 0.0, %v2237
        %v2239 = vpop.f32.mrb[0].mxu0
        %2240 = vdwg.mxu0
        %v2241 = vpack.c.bf16 %v1914, %v1911
        %v2242 = vpack.c.bf16 %v2022, %v2019
        %v2243 = vpack.c.bf16 %v2130, %v2127
        %v2244 = vpack.c.bf16 %v2238, %v2235
        %v2245 = vld [vmem:[%s708] sm:$0xf]
        %v2246 = vld [vmem:[%s708 + $0x4] sm:$0xf]
        %v2247 = vld [vmem:[%s708 + $0x8] sm:$0xf]
        %v2248 = vld [vmem:[%s708 + $0xc] sm:$0xf]
        %v2249 = vld [vmem:[%s708 + $0x10] sm:$0xf]
        %v2250 = vld [vmem:[%s708 + $0x14] sm:$0xf]
        %v2251 = vld [vmem:[%s708 + $0x18] sm:$0xf]
        %v2252 = vld [vmem:[%s708 + $0x1c] sm:$0xf]
        %v2253 = vld [vmem:[%s708 + $0x20] sm:$0xf]
        %v2254 = vld [vmem:[%s708 + $0x24] sm:$0xf]
        %v2255 = vld [vmem:[%s708 + $0x28] sm:$0xf]
        %v2256 = vld [vmem:[%s708 + $0x2c] sm:$0xf]
        %v2257 = vld [vmem:[%s708 + $0x30] sm:$0xf]
        %v2258 = vld [vmem:[%s708 + $0x34] sm:$0xf]
        %v2259 = vld [vmem:[%s708 + $0x38] sm:$0xf]
        %v2260 = vld [vmem:[%s708 + $0x3c] sm:$0xf]
        %v2261 = vld [vmem:[%s708 + $0x40] sm:$0xf]
        %v2262 = vld [vmem:[%s708 + $0x44] sm:$0xf]
        %v2263 = vld [vmem:[%s708 + $0x48] sm:$0xf]
        %v2264 = vld [vmem:[%s708 + $0x4c] sm:$0xf]
        %v2265 = vld [vmem:[%s708 + $0x50] sm:$0xf]
        %v2266 = vld [vmem:[%s708 + $0x54] sm:$0xf]
        %v2267 = vld [vmem:[%s708 + $0x58] sm:$0xf]
        %v2268 = vld [vmem:[%s708 + $0x5c] sm:$0xf]
        %v2269 = vld [vmem:[%s708 + $0x60] sm:$0xf]
        %v2270 = vld [vmem:[%s708 + $0x64] sm:$0xf]
        %v2271 = vld [vmem:[%s708 + $0x68] sm:$0xf]
        %v2272 = vld [vmem:[%s708 + $0x6c] sm:$0xf]
        %v2273 = vld [vmem:[%s708 + $0x70] sm:$0xf]
        %v2274 = vld [vmem:[%s708 + $0x74] sm:$0xf]
        %v2275 = vld [vmem:[%s708 + $0x78] sm:$0xf]
        %v2276 = vld [vmem:[%s708 + $0x7c] sm:$0xf]
        %v2277 = vld [vmem:[%s708 + $0x80] sm:$0xf]
        %v2278 = vld [vmem:[%s708 + $0x84] sm:$0xf]
        %v2279 = vld [vmem:[%s708 + $0x88] sm:$0xf]
        %v2280 = vld [vmem:[%s708 + $0x8c] sm:$0xf]
        %v2281 = vld [vmem:[%s708 + $0x90] sm:$0xf]
        %v2282 = vld [vmem:[%s708 + $0x94] sm:$0xf]
        %v2283 = vld [vmem:[%s708 + $0x98] sm:$0xf]
        %v2284 = vld [vmem:[%s708 + $0x9c] sm:$0xf]
        %v2285 = vld [vmem:[%s708 + $0xa0] sm:$0xf]
        %v2286 = vld [vmem:[%s708 + $0xa4] sm:$0xf]
        %v2287 = vld [vmem:[%s708 + $0xa8] sm:$0xf]
        %v2288 = vld [vmem:[%s708 + $0xac] sm:$0xf]
        %v2289 = vld [vmem:[%s708 + $0xb0] sm:$0xf]
        %v2290 = vld [vmem:[%s708 + $0xb4] sm:$0xf]
        %v2291 = vld [vmem:[%s708 + $0xb8] sm:$0xf]
        %v2292 = vld [vmem:[%s708 + $0xbc] sm:$0xf]
        %v2293 = vld [vmem:[%s708 + $0xc0] sm:$0xf]
        %v2294 = vld [vmem:[%s708 + $0xc4] sm:$0xf]
        %v2295 = vld [vmem:[%s708 + $0xc8] sm:$0xf]
        %v2296 = vld [vmem:[%s708 + $0xcc] sm:$0xf]
        %v2297 = vld [vmem:[%s708 + $0xd0] sm:$0xf]
        %v2298 = vld [vmem:[%s708 + $0xd4] sm:$0xf]
        %v2299 = vld [vmem:[%s708 + $0xd8] sm:$0xf]
        %v2300 = vld [vmem:[%s708 + $0xdc] sm:$0xf]
        %v2301 = vld [vmem:[%s708 + $0xe0] sm:$0xf]
        %v2302 = vld [vmem:[%s708 + $0xe4] sm:$0xf]
        %v2303 = vld [vmem:[%s708 + $0xe8] sm:$0xf]
        %v2304 = vld [vmem:[%s708 + $0xec] sm:$0xf]
        %v2305 = vld [vmem:[%s708 + $0xf0] sm:$0xf]
        %v2306 = vld [vmem:[%s708 + $0xf4] sm:$0xf]
        %v2307 = vld [vmem:[%s708 + $0xf8] sm:$0xf]
        %v2308 = vld [vmem:[%s708 + $0xfc] sm:$0xf]
        %v2309 = vld [vmem:[%s823] sm:$0x1]
        %v2311 = vlaneseq
        %v2312 = vshrl.u32 %v2311, 7
        %v2313 = vsub.s32 0, %v2312
        %v2314 = vrot.slane %v2309, %v2313
        %v2380 = vunpack.c.l.b16 %v2245
        %v2381 = vunpack.c.l.b16 %v2246
        %v2382 = vunpack.c.l.b16 %v2247
        %v2383 = vunpack.c.l.b16 %v2248
        %v2384 = vunpack.c.l.b16 %v2249
        %v2385 = vunpack.c.l.b16 %v2250
        %v2386 = vunpack.c.l.b16 %v2251
        %v2387 = vunpack.c.l.b16 %v2252
        %v2388 = vunpack.c.l.b16 %v2253
        %v2389 = vunpack.c.l.b16 %v2254
        %v2390 = vunpack.c.l.b16 %v2255
        %v2391 = vunpack.c.l.b16 %v2256
        %v2392 = vunpack.c.l.b16 %v2257
        %v2393 = vunpack.c.l.b16 %v2258
        %v2394 = vunpack.c.l.b16 %v2259
        %v2395 = vunpack.c.l.b16 %v2260
        %v2396 = vunpack.c.l.b16 %v2261
        %v2397 = vunpack.c.l.b16 %v2262
        %v2398 = vunpack.c.l.b16 %v2263
        %v2399 = vunpack.c.l.b16 %v2264
        %v2400 = vunpack.c.l.b16 %v2265
        %v2401 = vunpack.c.l.b16 %v2266
        %v2402 = vunpack.c.l.b16 %v2267
        %v2403 = vunpack.c.l.b16 %v2268
        %v2404 = vunpack.c.l.b16 %v2269
        %v2405 = vunpack.c.l.b16 %v2270
        %v2406 = vunpack.c.l.b16 %v2271
        %v2407 = vunpack.c.l.b16 %v2272
        %v2408 = vunpack.c.l.b16 %v2273
        %v2409 = vunpack.c.l.b16 %v2274
        %v2410 = vunpack.c.l.b16 %v2275
        %v2411 = vunpack.c.l.b16 %v2276
        %v2412 = vunpack.c.l.b16 %v2277
        %v2413 = vunpack.c.l.b16 %v2278
        %v2414 = vunpack.c.l.b16 %v2279
        %v2415 = vunpack.c.l.b16 %v2280
        %v2416 = vunpack.c.l.b16 %v2281
        %v2417 = vunpack.c.l.b16 %v2282
        %v2418 = vunpack.c.l.b16 %v2283
        %v2419 = vunpack.c.l.b16 %v2284
        %v2420 = vunpack.c.l.b16 %v2285
        %v2421 = vunpack.c.l.b16 %v2286
        %v2422 = vunpack.c.l.b16 %v2287
        %v2423 = vunpack.c.l.b16 %v2288
        %v2424 = vunpack.c.l.b16 %v2289
        %v2425 = vunpack.c.l.b16 %v2290
        %v2426 = vunpack.c.l.b16 %v2291
        %v2427 = vunpack.c.l.b16 %v2292
        %v2428 = vunpack.c.l.b16 %v2293
        %v2429 = vunpack.c.l.b16 %v2294
        %v2430 = vunpack.c.l.b16 %v2295
        %v2431 = vunpack.c.l.b16 %v2296
        %v2432 = vunpack.c.l.b16 %v2297
        %v2433 = vunpack.c.l.b16 %v2298
        %v2434 = vunpack.c.l.b16 %v2299
        %v2435 = vunpack.c.l.b16 %v2300
        %v2436 = vunpack.c.l.b16 %v2301
        %v2437 = vunpack.c.l.b16 %v2302
        %v2438 = vunpack.c.l.b16 %v2303
        %v2439 = vunpack.c.l.b16 %v2304
        %v2440 = vunpack.c.l.b16 %v2305
        %v2441 = vunpack.c.l.b16 %v2306
        %v2442 = vunpack.c.l.b16 %v2307
        %v2443 = vunpack.c.l.b16 %v2308
        %v2444 = vpack.c.b16 %v2381, %v2380
        %v2445 = vpack.c.b16 %v2383, %v2382
        %v2446 = vpack.c.b16 %v2385, %v2384
        %v2447 = vpack.c.b16 %v2387, %v2386
        %v2448 = vpack.c.b16 %v2389, %v2388
        %v2449 = vpack.c.b16 %v2391, %v2390
        %v2450 = vpack.c.b16 %v2393, %v2392
        %v2451 = vpack.c.b16 %v2395, %v2394
        %v2452 = vpack.c.b16 %v2397, %v2396
        %v2453 = vpack.c.b16 %v2399, %v2398
        %v2454 = vpack.c.b16 %v2401, %v2400
        %v2455 = vpack.c.b16 %v2403, %v2402
        %v2456 = vpack.c.b16 %v2405, %v2404
        %v2457 = vpack.c.b16 %v2407, %v2406
        %v2458 = vpack.c.b16 %v2409, %v2408
        %v2459 = vpack.c.b16 %v2411, %v2410
        %v2460 = vpack.c.b16 %v2413, %v2412
        %v2461 = vpack.c.b16 %v2415, %v2414
        %v2462 = vpack.c.b16 %v2417, %v2416
        %v2463 = vpack.c.b16 %v2419, %v2418
        %v2464 = vpack.c.b16 %v2421, %v2420
        %v2465 = vpack.c.b16 %v2423, %v2422
        %v2466 = vpack.c.b16 %v2425, %v2424
        %v2467 = vpack.c.b16 %v2427, %v2426
        %v2468 = vpack.c.b16 %v2429, %v2428
        %v2469 = vpack.c.b16 %v2431, %v2430
        %v2470 = vpack.c.b16 %v2433, %v2432
        %v2471 = vpack.c.b16 %v2435, %v2434
        %v2472 = vpack.c.b16 %v2437, %v2436
        %v2473 = vpack.c.b16 %v2439, %v2438
        %v2474 = vpack.c.b16 %v2441, %v2440
        %v2475 = vpack.c.b16 %v2443, %v2442
        %2508 = vmatprep.subr.bf16.mxu0 0
        %2509 = vmatpush1.bf16.msra.mxu0 %v2444
        %2510 = vmatprep.subr.bf16.mxu0 0
        %2511 = vmatpush1.bf16.msra.mxu0 %v2445
        %2512 = vmatprep.subr.bf16.mxu0 0
        %2513 = vmatpush1.bf16.msra.mxu0 %v2446
        %2514 = vmatprep.subr.bf16.mxu0 0
        %2515 = vmatpush1.bf16.msra.mxu0 %v2447
        %2516 = vmatprep.subr.bf16.mxu0 0
        %2517 = vmatpush1.bf16.msra.mxu0 %v2448
        %2518 = vmatprep.subr.bf16.mxu0 0
        %2519 = vmatpush1.bf16.msra.mxu0 %v2449
        %2520 = vmatprep.subr.bf16.mxu0 0
        %2521 = vmatpush1.bf16.msra.mxu0 %v2450
        %2522 = vmatprep.subr.bf16.mxu0 0
        %2523 = vmatpush1.bf16.msra.mxu0 %v2451
        %2524 = vmatprep.subr.bf16.mxu0 0
        %2525 = vmatpush1.bf16.msra.mxu0 %v2452
        %2526 = vmatprep.subr.bf16.mxu0 0
        %2527 = vmatpush1.bf16.msra.mxu0 %v2453
        %2528 = vmatprep.subr.bf16.mxu0 0
        %2529 = vmatpush1.bf16.msra.mxu0 %v2454
        %2530 = vmatprep.subr.bf16.mxu0 0
        %2531 = vmatpush1.bf16.msra.mxu0 %v2455
        %2532 = vmatprep.subr.bf16.mxu0 0
        %2533 = vmatpush1.bf16.msra.mxu0 %v2456
        %2534 = vmatprep.subr.bf16.mxu0 0
        %2535 = vmatpush1.bf16.msra.mxu0 %v2457
        %2536 = vmatprep.subr.bf16.mxu0 0
        %2537 = vmatpush1.bf16.msra.mxu0 %v2458
        %2538 = vmatprep.subr.bf16.mxu0 0
        %2539 = vmatpush1.bf16.msra.mxu0 %v2459
        %2540 = vmatprep.mubr.bf16.mxu0 %v2242
        %2541 = vmatmul.mubr.bf16.gmra.mrb[0].mxu0 %v2241
        %v2542 = vpop.f32.mrb[0].mxu0
        %v2543 = vadd.f32 %v2314, %v2542
        %v2544 = vpop.f32.mrb[0].mxu0
        %v2545 = vpop.f32.mrb[0].mxu0
        %v2546 = vadd.f32 %v2314, %v2545
        %v2547 = vpop.f32.mrb[0].mxu0
        %2548 = vdwg.mxu0
        %2549 = vmatprep.subr.bf16.mxu0 0
        %2550 = vmatpush1.bf16.msra.mxu0 %v2460
        %2551 = vmatprep.subr.bf16.mxu0 0
        %2552 = vmatpush1.bf16.msra.mxu0 %v2461
        %2553 = vmatprep.subr.bf16.mxu0 0
        %2554 = vmatpush1.bf16.msra.mxu0 %v2462
        %2555 = vmatprep.subr.bf16.mxu0 0
        %2556 = vmatpush1.bf16.msra.mxu0 %v2463
        %2557 = vmatprep.subr.bf16.mxu0 0
        %2558 = vmatpush1.bf16.msra.mxu0 %v2464
        %2559 = vmatprep.subr.bf16.mxu0 0
        %2560 = vmatpush1.bf16.msra.mxu0 %v2465
        %2561 = vmatprep.subr.bf16.mxu0 0
        %2562 = vmatpush1.bf16.msra.mxu0 %v2466
        %2563 = vmatprep.subr.bf16.mxu0 0
        %2564 = vmatpush1.bf16.msra.mxu0 %v2467
        %2565 = vmatprep.subr.bf16.mxu0 0
        %2566 = vmatpush1.bf16.msra.mxu0 %v2468
        %2567 = vmatprep.subr.bf16.mxu0 0
        %2568 = vmatpush1.bf16.msra.mxu0 %v2469
        %2569 = vmatprep.subr.bf16.mxu0 0
        %2570 = vmatpush1.bf16.msra.mxu0 %v2470
        %2571 = vmatprep.subr.bf16.mxu0 0
        %2572 = vmatpush1.bf16.msra.mxu0 %v2471
        %2573 = vmatprep.subr.bf16.mxu0 0
        %2574 = vmatpush1.bf16.msra.mxu0 %v2472
        %2575 = vmatprep.subr.bf16.mxu0 0
        %2576 = vmatpush1.bf16.msra.mxu0 %v2473
        %2577 = vmatprep.subr.bf16.mxu0 0
        %2578 = vmatpush1.bf16.msra.mxu0 %v2474
        %2579 = vmatprep.subr.bf16.mxu0 0
        %2580 = vmatpush1.bf16.msra.mxu0 %v2475
        %2581 = vmatprep.mubr.bf16.mxu0 %v2244
        %2582 = vmatmul.mubr.bf16.gmra.mrb[0].mxu0 %v2243
        %v2583 = vpop.f32.mrb[0].mxu0
        %v2584 = vadd.f32 %v2543, %v2583
        %v2585 = vpop.f32.mrb[0].mxu0
        %v2586 = vpop.f32.mrb[0].mxu0
        %v2587 = vadd.f32 %v2546, %v2586
        %v2588 = vpop.f32.mrb[0].mxu0
        %2589 = vdwg.mxu0
        %v2590 = vadd.f32 %v2584, %v893
        %v2591 = vadd.f32 %v2587, %v894
        %v2592 = vld [vmem:[%s826] sm:$0x1]
        %v2593 = vld [vmem:[%s829] sm:$0x1]
        %2594 = vadd.xlane.f32.xlu0 %v2590
        %v2595 = vpop.xlane.xlu0 %2594
        %2596 = vadd.xlane.f32.xlu0 %v2591
        %v2597 = vpop.xlane.xlu0 %2596
        %v2598 = vrcp.pop 128.0
        %v2599 = vmul.f32 %v2595, %v2598
        %v2600 = vmul.f32 %v2597, %v2598
        %v2601 = vsub.f32 %v2590, %v2599
        %v2602 = vsub.f32 %v2591, %v2600
        %v2603 = vmul.f32 %v2601, %v2601
        %v2604 = vmul.f32 %v2602, %v2602
        %2605 = vadd.xlane.f32.xlu0 %v2603
        %v2606 = vpop.xlane.xlu0 %2605
        %2607 = vadd.xlane.f32.xlu0 %v2604
        %v2608 = vpop.xlane.xlu0 %2607
        %v2609 = vmul.f32 %v2606, %v2598
        %v2610 = vmul.f32 %v2608, %v2598
        %v2611 = vadd.f32 %v2609, 1e-12
        %v2612 = vadd.f32 %v2610, 1e-12
        %v2613 = vrsqrt.pop %v2611
        %v2614 = vrsqrt.pop %v2612
        %v2615 = vmul.f32 %v2601, %v2613
        %v2616 = vmul.f32 %v2602, %v2614
        %v2618 = vlaneseq
        %v2619 = vshrl.u32 %v2618, 7
        %v2620 = vsub.s32 0, %v2619
        %v2621 = vrot.slane %v2592, %v2620
        %v2623 = vmul.f32 %v2615, %v2621
        %v2624 = vmul.f32 %v2616, %v2621
        %v2626 = vlaneseq
        %v2627 = vshrl.u32 %v2626, 7
        %v2628 = vsub.s32 0, %v2627
        %v2629 = vrot.slane %v2593, %v2628
        %v2631 = vadd.f32 %v2623, %v2629
        %v2632 = vadd.f32 %v2624, %v2629
        %v2633 = vpack.c.bf16 %v2632, %v2631
        %v2634 = vld [vmem:[%s717] sm:$0xff]
        %v2635 = vld [vmem:[%s717 + $0x8] sm:$0xff]
        %v2636 = vld [vmem:[%s717 + $0x10] sm:$0xff]
        %v2637 = vld [vmem:[%s717 + $0x18] sm:$0xff]
        %v2638 = vld [vmem:[%s717 + $0x20] sm:$0xff]
        %v2639 = vld [vmem:[%s717 + $0x28] sm:$0xff]
        %v2640 = vld [vmem:[%s717 + $0x30] sm:$0xff]
        %v2641 = vld [vmem:[%s717 + $0x38] sm:$0xff]
        %v2642 = vld [vmem:[%s717 + $0x40] sm:$0xff]
        %v2643 = vld [vmem:[%s717 + $0x48] sm:$0xff]
        %v2644 = vld [vmem:[%s717 + $0x50] sm:$0xff]
        %v2645 = vld [vmem:[%s717 + $0x58] sm:$0xff]
        %v2646 = vld [vmem:[%s717 + $0x60] sm:$0xff]
        %v2647 = vld [vmem:[%s717 + $0x68] sm:$0xff]
        %v2648 = vld [vmem:[%s717 + $0x70] sm:$0xff]
        %v2649 = vld [vmem:[%s717 + $0x78] sm:$0xff]
        %v2650 = vld [vmem:[%s833] sm:$0x3]
        %v2652 = vlaneseq
        %v2653 = vshrl.u32 %v2652, 7
        %v2654 = vsub.s32 0, %v2653
        %v2655 = vrot.slane %v2650, %v2654
        %v2656 = vlaneseq
        %v2657 = vshrl.u32 %v2656, 7
        %v2658 = vsub.s32 1, %v2657
        %v2659 = vrot.slane %v2650, %v2658
        %v2678 = vunpack.c.l.b16 %v2634
        %v2679 = vunpack.c.h.b16 %v2634
        %v2680 = vunpack.c.l.b16 %v2635
        %v2681 = vunpack.c.h.b16 %v2635
        %v2682 = vunpack.c.l.b16 %v2636
        %v2683 = vunpack.c.h.b16 %v2636
        %v2684 = vunpack.c.l.b16 %v2637
        %v2685 = vunpack.c.h.b16 %v2637
        %v2686 = vunpack.c.l.b16 %v2638
        %v2687 = vunpack.c.h.b16 %v2638
        %v2688 = vunpack.c.l.b16 %v2639
        %v2689 = vunpack.c.h.b16 %v2639
        %v2690 = vunpack.c.l.b16 %v2640
        %v2691 = vunpack.c.h.b16 %v2640
        %v2692 = vunpack.c.l.b16 %v2641
        %v2693 = vunpack.c.h.b16 %v2641
        %v2694 = vunpack.c.l.b16 %v2642
        %v2695 = vunpack.c.h.b16 %v2642
        %v2696 = vunpack.c.l.b16 %v2643
        %v2697 = vunpack.c.h.b16 %v2643
        %v2698 = vunpack.c.l.b16 %v2644
        %v2699 = vunpack.c.h.b16 %v2644
        %v2700 = vunpack.c.l.b16 %v2645
        %v2701 = vunpack.c.h.b16 %v2645
        %v2702 = vunpack.c.l.b16 %v2646
        %v2703 = vunpack.c.h.b16 %v2646
        %v2704 = vunpack.c.l.b16 %v2647
        %v2705 = vunpack.c.h.b16 %v2647
        %v2706 = vunpack.c.l.b16 %v2648
        %v2707 = vunpack.c.h.b16 %v2648
        %v2708 = vunpack.c.l.b16 %v2649
        %v2709 = vunpack.c.h.b16 %v2649
        %v2710 = vpack.c.b16 %v2680, %v2678
        %v2711 = vpack.c.b16 %v2681, %v2679
        %v2712 = vpack.c.b16 %v2684, %v2682
        %v2713 = vpack.c.b16 %v2685, %v2683
        %v2714 = vpack.c.b16 %v2688, %v2686
        %v2715 = vpack.c.b16 %v2689, %v2687
        %v2716 = vpack.c.b16 %v2692, %v2690
        %v2717 = vpack.c.b16 %v2693, %v2691
        %v2718 = vpack.c.b16 %v2696, %v2694
        %v2719 = vpack.c.b16 %v2697, %v2695
        %v2720 = vpack.c.b16 %v2700, %v2698
        %v2721 = vpack.c.b16 %v2701, %v2699
        %v2722 = vpack.c.b16 %v2704, %v2702
        %v2723 = vpack.c.b16 %v2705, %v2703
        %v2724 = vpack.c.b16 %v2708, %v2706
        %v2725 = vpack.c.b16 %v2709, %v2707
        %2742 = vmatprep.subr.bf16.mxu0 %v2711
        %2743 = vmatpush1.bf16.msra.mxu0 %v2710
        %2744 = vmatprep.subr.bf16.mxu0 %v2713
        %2745 = vmatpush1.bf16.msra.mxu0 %v2712
        %2746 = vmatprep.subr.bf16.mxu0 %v2715
        %2747 = vmatpush1.bf16.msra.mxu0 %v2714
        %2748 = vmatprep.subr.bf16.mxu0 %v2717
        %2749 = vmatpush1.bf16.msra.mxu0 %v2716
        %2750 = vmatprep.subr.bf16.mxu0 %v2719
        %2751 = vmatpush1.bf16.msra.mxu0 %v2718
        %2752 = vmatprep.subr.bf16.mxu0 %v2721
        %2753 = vmatpush1.bf16.msra.mxu0 %v2720
        %2754 = vmatprep.subr.bf16.mxu0 %v2723
        %2755 = vmatpush1.bf16.msra.mxu0 %v2722
        %2756 = vmatprep.subr.bf16.mxu0 %v2725
        %2757 = vmatpush1.bf16.msra.mxu0 %v2724
        %2758 = vmatprep.subr.bf16.mxu0 0
        %2759 = vmatpush1.bf16.msra.mxu0 0
        %2760 = vmatprep.subr.bf16.mxu0 0
        %2761 = vmatpush1.bf16.msra.mxu0 0
        %2762 = vmatprep.subr.bf16.mxu0 0
        %2763 = vmatpush1.bf16.msra.mxu0 0
        %2764 = vmatprep.subr.bf16.mxu0 0
        %2765 = vmatpush1.bf16.msra.mxu0 0
        %2766 = vmatprep.subr.bf16.mxu0 0
        %2767 = vmatpush1.bf16.msra.mxu0 0
        %2768 = vmatprep.subr.bf16.mxu0 0
        %2769 = vmatpush1.bf16.msra.mxu0 0
        %2770 = vmatprep.subr.bf16.mxu0 0
        %2771 = vmatpush1.bf16.msra.mxu0 0
        %2772 = vmatprep.subr.bf16.mxu0 0
        %2773 = vmatpush1.bf16.msra.mxu0 0
        %2774 = vmatprep.mubr.bf16.mxu0 0
        %2775 = vmatmul.mubr.bf16.gmra.mrb[0].mxu0 %v2633
        %v2776 = vpop.f32.mrb[0].mxu0
        %v2777 = vadd.f32 %v2655, %v2776
        %v2778 = vpop.f32.mrb[0].mxu0
        %v2779 = vadd.f32 %v2659, %v2778
        %v2780 = vpop.f32.mrb[0].mxu0
        %v2781 = vadd.f32 %v2655, %v2780
        %v2782 = vpop.f32.mrb[0].mxu0
        %v2783 = vadd.f32 %v2659, %v2782
        %2784 = vdwg.mxu0
        %v2785 = vmul.f32 %v2777, %v2777
        %v2786 = vmul.f32 %v2779, %v2779
        %v2787 = vmul.f32 %v2781, %v2781
        %v2788 = vmul.f32 %v2783, %v2783
        %v2789 = vmul.f32 %v2777, %v2785
        %v2790 = vmul.f32 %v2779, %v2786
        %v2791 = vmul.f32 %v2781, %v2787
        %v2792 = vmul.f32 %v2783, %v2788
        %v2793 = vmul.f32 %v2789, 0.044715
        %v2794 = vmul.f32 %v2790, 0.044715
        %v2795 = vmul.f32 %v2791, 0.044715
        %v2796 = vmul.f32 %v2792, 0.044715
        %v2797 = vadd.f32 %v2777, %v2793
        %v2798 = vadd.f32 %v2779, %v2794
        %v2799 = vadd.f32 %v2781, %v2795
        %v2800 = vadd.f32 %v2783, %v2796
        %v2801 = vmul.f32 %v2797, 0.7978846
        %v2802 = vmul.f32 %v2798, 0.7978846
        %v2803 = vmul.f32 %v2799, 0.7978846
        %v2804 = vmul.f32 %v2800, 0.7978846
        %v2805 = vtanh.pop %v2801
        %v2806 = vtanh.pop %v2802
        %v2807 = vtanh.pop %v2803
        %v2808 = vtanh.pop %v2804
        %v2809 = vadd.f32 %v2805, 1.0
        %v2810 = vadd.f32 %v2806, 1.0
        %v2811 = vadd.f32 %v2807, 1.0
        %v2812 = vadd.f32 %v2808, 1.0
        %v2813 = vmul.f32 %v2809, 0.5
        %v2814 = vmul.f32 %v2810, 0.5
        %v2815 = vmul.f32 %v2811, 0.5
        %v2816 = vmul.f32 %v2812, 0.5
        %v2817 = vmul.f32 %v2777, %v2813
        %v2818 = vmul.f32 %v2779, %v2814
        %v2819 = vmul.f32 %v2781, %v2815
        %v2820 = vmul.f32 %v2783, %v2816
        %v2821 = vpack.c.bf16 %v2819, %v2817
        %v2822 = vpack.c.bf16 %v2820, %v2818
        %v2823 = vld [vmem:[%s726] sm:$0xf]
        %v2824 = vld [vmem:[%s726 + $0x4] sm:$0xf]
        %v2825 = vld [vmem:[%s726 + $0x8] sm:$0xf]
        %v2826 = vld [vmem:[%s726 + $0xc] sm:$0xf]
        %v2827 = vld [vmem:[%s726 + $0x10] sm:$0xf]
        %v2828 = vld [vmem:[%s726 + $0x14] sm:$0xf]
        %v2829 = vld [vmem:[%s726 + $0x18] sm:$0xf]
        %v2830 = vld [vmem:[%s726 + $0x1c] sm:$0xf]
        %v2831 = vld [vmem:[%s726 + $0x20] sm:$0xf]
        %v2832 = vld [vmem:[%s726 + $0x24] sm:$0xf]
        %v2833 = vld [vmem:[%s726 + $0x28] sm:$0xf]
        %v2834 = vld [vmem:[%s726 + $0x2c] sm:$0xf]
        %v2835 = vld [vmem:[%s726 + $0x30] sm:$0xf]
        %v2836 = vld [vmem:[%s726 + $0x34] sm:$0xf]
        %v2837 = vld [vmem:[%s726 + $0x38] sm:$0xf]
        %v2838 = vld [vmem:[%s726 + $0x3c] sm:$0xf]
        %v2839 = vld [vmem:[%s726 + $0x40] sm:$0xf]
        %v2840 = vld [vmem:[%s726 + $0x44] sm:$0xf]
        %v2841 = vld [vmem:[%s726 + $0x48] sm:$0xf]
        %v2842 = vld [vmem:[%s726 + $0x4c] sm:$0xf]
        %v2843 = vld [vmem:[%s726 + $0x50] sm:$0xf]
        %v2844 = vld [vmem:[%s726 + $0x54] sm:$0xf]
        %v2845 = vld [vmem:[%s726 + $0x58] sm:$0xf]
        %v2846 = vld [vmem:[%s726 + $0x5c] sm:$0xf]
        %v2847 = vld [vmem:[%s726 + $0x60] sm:$0xf]
        %v2848 = vld [vmem:[%s726 + $0x64] sm:$0xf]
        %v2849 = vld [vmem:[%s726 + $0x68] sm:$0xf]
        %v2850 = vld [vmem:[%s726 + $0x6c] sm:$0xf]
        %v2851 = vld [vmem:[%s726 + $0x70] sm:$0xf]
        %v2852 = vld [vmem:[%s726 + $0x74] sm:$0xf]
        %v2853 = vld [vmem:[%s726 + $0x78] sm:$0xf]
        %v2854 = vld [vmem:[%s726 + $0x7c] sm:$0xf]
        %v2855 = vld [vmem:[%s836] sm:$0x1]
        %v2857 = vlaneseq
        %v2858 = vshrl.u32 %v2857, 7
        %v2859 = vsub.s32 0, %v2858
        %v2860 = vrot.slane %v2855, %v2859
        %v2894 = vunpack.c.l.b16 %v2823
        %v2895 = vunpack.c.l.b16 %v2824
        %v2896 = vunpack.c.l.b16 %v2825
        %v2897 = vunpack.c.l.b16 %v2826
        %v2898 = vunpack.c.l.b16 %v2827
        %v2899 = vunpack.c.l.b16 %v2828
        %v2900 = vunpack.c.l.b16 %v2829
        %v2901 = vunpack.c.l.b16 %v2830
        %v2902 = vunpack.c.l.b16 %v2831
        %v2903 = vunpack.c.l.b16 %v2832
        %v2904 = vunpack.c.l.b16 %v2833
        %v2905 = vunpack.c.l.b16 %v2834
        %v2906 = vunpack.c.l.b16 %v2835
        %v2907 = vunpack.c.l.b16 %v2836
        %v2908 = vunpack.c.l.b16 %v2837
        %v2909 = vunpack.c.l.b16 %v2838
        %v2910 = vunpack.c.l.b16 %v2839
        %v2911 = vunpack.c.l.b16 %v2840
        %v2912 = vunpack.c.l.b16 %v2841
        %v2913 = vunpack.c.l.b16 %v2842
        %v2914 = vunpack.c.l.b16 %v2843
        %v2915 = vunpack.c.l.b16 %v2844
        %v2916 = vunpack.c.l.b16 %v2845
        %v2917 = vunpack.c.l.b16 %v2846
        %v2918 = vunpack.c.l.b16 %v2847
        %v2919 = vunpack.c.l.b16 %v2848
        %v2920 = vunpack.c.l.b16 %v2849
        %v2921 = vunpack.c.l.b16 %v2850
        %v2922 = vunpack.c.l.b16 %v2851
        %v2923 = vunpack.c.l.b16 %v2852
        %v2924 = vunpack.c.l.b16 %v2853
        %v2925 = vunpack.c.l.b16 %v2854
        %v2926 = vpack.c.b16 %v2895, %v2894
        %v2927 = vpack.c.b16 %v2897, %v2896
        %v2928 = vpack.c.b16 %v2899, %v2898
        %v2929 = vpack.c.b16 %v2901, %v2900
        %v2930 = vpack.c.b16 %v2903, %v2902
        %v2931 = vpack.c.b16 %v2905, %v2904
        %v2932 = vpack.c.b16 %v2907, %v2906
        %v2933 = vpack.c.b16 %v2909, %v2908
        %v2934 = vpack.c.b16 %v2911, %v2910
        %v2935 = vpack.c.b16 %v2913, %v2912
        %v2936 = vpack.c.b16 %v2915, %v2914
        %v2937 = vpack.c.b16 %v2917, %v2916
        %v2938 = vpack.c.b16 %v2919, %v2918
        %v2939 = vpack.c.b16 %v2921, %v2920
        %v2940 = vpack.c.b16 %v2923, %v2922
        %v2941 = vpack.c.b16 %v2925, %v2924
        %2958 = vmatprep.subr.bf16.mxu0 0
        %2959 = vmatpush1.bf16.msra.mxu0 %v2926
        %2960 = vmatprep.subr.bf16.mxu0 0
        %2961 = vmatpush1.bf16.msra.mxu0 %v2927
        %2962 = vmatprep.subr.bf16.mxu0 0
        %2963 = vmatpush1.bf16.msra.mxu0 %v2928
        %2964 = vmatprep.subr.bf16.mxu0 0
        %2965 = vmatpush1.bf16.msra.mxu0 %v2929
        %2966 = vmatprep.subr.bf16.mxu0 0
        %2967 = vmatpush1.bf16.msra.mxu0 %v2930
        %2968 = vmatprep.subr.bf16.mxu0 0
        %2969 = vmatpush1.bf16.msra.mxu0 %v2931
        %2970 = vmatprep.subr.bf16.mxu0 0
        %2971 = vmatpush1.bf16.msra.mxu0 %v2932
        %2972 = vmatprep.subr.bf16.mxu0 0
        %2973 = vmatpush1.bf16.msra.mxu0 %v2933
        %2974 = vmatprep.subr.bf16.mxu0 0
        %2975 = vmatpush1.bf16.msra.mxu0 %v2934
        %2976 = vmatprep.subr.bf16.mxu0 0
        %2977 = vmatpush1.bf16.msra.mxu0 %v2935
        %2978 = vmatprep.subr.bf16.mxu0 0
        %2979 = vmatpush1.bf16.msra.mxu0 %v2936
        %2980 = vmatprep.subr.bf16.mxu0 0
        %2981 = vmatpush1.bf16.msra.mxu0 %v2937
        %2982 = vmatprep.subr.bf16.mxu0 0
        %2983 = vmatpush1.bf16.msra.mxu0 %v2938
        %2984 = vmatprep.subr.bf16.mxu0 0
        %2985 = vmatpush1.bf16.msra.mxu0 %v2939
        %2986 = vmatprep.subr.bf16.mxu0 0
        %2987 = vmatpush1.bf16.msra.mxu0 %v2940
        %2988 = vmatprep.subr.bf16.mxu0 0
        %2989 = vmatpush1.bf16.msra.mxu0 %v2941
        %2990 = vmatprep.mubr.bf16.mxu0 %v2822
        %2991 = vmatmul.mubr.bf16.gmra.mrb[0].mxu0 %v2821
        %v2992 = vpop.f32.mrb[0].mxu0
        %v2993 = vadd.f32 %v2860, %v2992
        %v2994 = vpop.f32.mrb[0].mxu0
        %v2995 = vpop.f32.mrb[0].mxu0
        %v2996 = vadd.f32 %v2860, %v2995
        %v2997 = vpop.f32.mrb[0].mxu0
        %2998 = vdwg.mxu0
        %v2999 = vadd.f32 %v2993, %v2631
        %v3000 = vadd.f32 %v2996, %v2632
        %v3001 = vld [vmem:[%s839] sm:$0x1]
        %v3002 = vld [vmem:[%s842] sm:$0x1]
        %3003 = vadd.xlane.f32.xlu0 %v2999
        %v3004 = vpop.xlane.xlu0 %3003
        %3005 = vadd.xlane.f32.xlu0 %v3000
        %v3006 = vpop.xlane.xlu0 %3005
        %v3007 = vmul.f32 %v3004, %v2598
        %v3008 = vmul.f32 %v3006, %v2598
        %v3009 = vsub.f32 %v2999, %v3007
        %v3010 = vsub.f32 %v3000, %v3008
        %v3011 = vmul.f32 %v3009, %v3009
        %v3012 = vmul.f32 %v3010, %v3010
        %3013 = vadd.xlane.f32.xlu0 %v3011
        %v3014 = vpop.xlane.xlu0 %3013
        %3015 = vadd.xlane.f32.xlu0 %v3012
        %v3016 = vpop.xlane.xlu0 %3015
        %v3017 = vmul.f32 %v3014, %v2598
        %v3018 = vmul.f32 %v3016, %v2598
        %v3019 = vadd.f32 %v3017, 1e-12
        %v3020 = vadd.f32 %v3018, 1e-12
        %v3021 = vrsqrt.pop %v3019
        %v3022 = vrsqrt.pop %v3020
        %v3023 = vmul.f32 %v3009, %v3021
        %v3024 = vmul.f32 %v3010, %v3022
        %v3026 = vlaneseq
        %v3027 = vshrl.u32 %v3026, 7
        %v3028 = vsub.s32 0, %v3027
        %v3029 = vrot.slane %v3001, %v3028
        %v3031 = vmul.f32 %v3023, %v3029
        %v3032 = vmul.f32 %v3024, %v3029
        %v3034 = vlaneseq
        %v3035 = vshrl.u32 %v3034, 7
        %v3036 = vsub.s32 0, %v3035
        %v3037 = vrot.slane %v3002, %v3036
        %v3039 = vadd.f32 %v3031, %v3037
        %v3040 = vadd.f32 %v3032, %v3037
        %3041 = vst [vmem:[#allocation10] sm:$0xff] %v3039
        %3042 = vst [vmem:[#allocation10 + $0x8] sm:$0xff] %v3040
        %p3043 = scmp.eq.s32.totalorder %s42, 1
        // Predicated region
        $region113: #{diffusion_bert_forward.1} parent=91 // pred_check
          %p3044 = pneg %p3043
        $region114: #{diffusion_bert_forward.1} parent=91 // pred_check_branch
          %3046 = sbr.rel (%p3044) target = $region116
        $region115: #{diffusion_bert_forward.1} parent=91 // pred_region
          %v3047 = vpack.c.bf16 %v3040, %v3039
          %v3048 = vld [vmem:[%s4] sm:$0xff]
          %v3049 = vld [vmem:[%s4 + $0x8] sm:$0xff]
          %v3050 = vld [vmem:[%s4 + $0x10] sm:$0xff]
          %v3051 = vld [vmem:[%s4 + $0x18] sm:$0xff]
          %v3052 = vld [vmem:[%s4 + $0x20] sm:$0xff]
          %v3053 = vld [vmem:[%s4 + $0x28] sm:$0xff]
          %v3054 = vld [vmem:[%s4 + $0x30] sm:$0xff]
          %v3055 = vld [vmem:[%s4 + $0x38] sm:$0xff]
          %v3056 = vld [vmem:[%s4 + $0x40] sm:$0xff]
          %v3057 = vld [vmem:[%s4 + $0x48] sm:$0xff]
          %v3058 = vld [vmem:[%s4 + $0x50] sm:$0xff]
          %v3059 = vld [vmem:[%s4 + $0x58] sm:$0xff]
          %v3060 = vld [vmem:[%s4 + $0x60] sm:$0xff]
          %v3061 = vld [vmem:[%s4 + $0x68] sm:$0xff]
          %v3062 = vld [vmem:[%s4 + $0x70] sm:$0xff]
          %v3063 = vld [vmem:[%s4 + $0x78] sm:$0xff]
          %v3064 = vld [vmem:[%s4 + $0x80] sm:$0xff]
          %v3065 = vld [vmem:[%s4 + $0x88] sm:$0xff]
          %v3066 = vld [vmem:[%s4 + $0x90] sm:$0xff]
          %v3067 = vld [vmem:[%s4 + $0x98] sm:$0xff]
          %v3068 = vld [vmem:[%s4 + $0xa0] sm:$0xff]
          %v3069 = vld [vmem:[%s4 + $0xa8] sm:$0xff]
          %v3070 = vld [vmem:[%s4 + $0xb0] sm:$0xff]
          %v3071 = vld [vmem:[%s4 + $0xb8] sm:$0xff]
          %v3072 = vld [vmem:[%s4 + $0xc0] sm:$0xff]
          %v3073 = vld [vmem:[%s4 + $0xc8] sm:$0xff]
          %v3074 = vld [vmem:[%s4 + $0xd0] sm:$0xff]
          %v3075 = vld [vmem:[%s4 + $0xd8] sm:$0xff]
          %v3076 = vld [vmem:[%s4 + $0xe0] sm:$0xff]
          %v3077 = vld [vmem:[%s4 + $0xe8] sm:$0xff]
          %v3078 = vld [vmem:[%s4 + $0xf0] sm:$0xff]
          %v3079 = vld [vmem:[%s4 + $0xf8] sm:$0xff]
          %v3080 = vld [vmem:[%s5] sm:$0xf]
          %v3082 = vlaneseq
          %v3083 = vshrl.u32 %v3082, 7
          %v3084 = vsub.s32 0, %v3083
          %v3085 = vrot.slane %v3080, %v3084
          %v3086 = vlaneseq
          %v3087 = vshrl.u32 %v3086, 7
          %v3088 = vsub.s32 1, %v3087
          %v3089 = vrot.slane %v3080, %v3088
          %v3090 = vlaneseq
          %v3091 = vshrl.u32 %v3090, 7
          %v3092 = vsub.s32 2, %v3091
          %v3093 = vrot.slane %v3080, %v3092
          %v3094 = vlaneseq
          %v3095 = vshrl.u32 %v3094, 7
          %v3096 = vsub.s32 3, %v3095
          %v3097 = vrot.slane %v3080, %v3096
          %v3134 = vunpack.c.l.b16 %v3048
          %v3135 = vunpack.c.h.b16 %v3048
          %v3136 = vunpack.c.l.b16 %v3049
          %v3137 = vunpack.c.h.b16 %v3049
          %v3138 = vunpack.c.l.b16 %v3050
          %v3139 = vunpack.c.h.b16 %v3050
          %v3140 = vunpack.c.l.b16 %v3051
          %v3141 = vunpack.c.h.b16 %v3051
          %v3142 = vunpack.c.l.b16 %v3052
          %v3143 = vunpack.c.h.b16 %v3052
          %v3144 = vunpack.c.l.b16 %v3053
          %v3145 = vunpack.c.h.b16 %v3053
          %v3146 = vunpack.c.l.b16 %v3054
          %v3147 = vunpack.c.h.b16 %v3054
          %v3148 = vunpack.c.l.b16 %v3055
          %v3149 = vunpack.c.h.b16 %v3055
          %v3150 = vunpack.c.l.b16 %v3056
          %v3151 = vunpack.c.h.b16 %v3056
          %v3152 = vunpack.c.l.b16 %v3057
          %v3153 = vunpack.c.h.b16 %v3057
          %v3154 = vunpack.c.l.b16 %v3058
          %v3155 = vunpack.c.h.b16 %v3058
          %v3156 = vunpack.c.l.b16 %v3059
          %v3157 = vunpack.c.h.b16 %v3059
          %v3158 = vunpack.c.l.b16 %v3060
          %v3159 = vunpack.c.h.b16 %v3060
          %v3160 = vunpack.c.l.b16 %v3061
          %v3161 = vunpack.c.h.b16 %v3061
          %v3162 = vunpack.c.l.b16 %v3062
          %v3163 = vunpack.c.h.b16 %v3062
          %v3164 = vunpack.c.l.b16 %v3063
          %v3165 = vunpack.c.h.b16 %v3063
          %v3166 = vunpack.c.l.b16 %v3064
          %v3167 = vunpack.c.h.b16 %v3064
          %v3168 = vunpack.c.l.b16 %v3065
          %v3169 = vunpack.c.h.b16 %v3065
          %v3170 = vunpack.c.l.b16 %v3066
          %v3171 = vunpack.c.h.b16 %v3066
          %v3172 = vunpack.c.l.b16 %v3067
          %v3173 = vunpack.c.h.b16 %v3067
          %v3174 = vunpack.c.l.b16 %v3068
          %v3175 = vunpack.c.h.b16 %v3068
          %v3176 = vunpack.c.l.b16 %v3069
          %v3177 = vunpack.c.h.b16 %v3069
          %v3178 = vunpack.c.l.b16 %v3070
          %v3179 = vunpack.c.h.b16 %v3070
          %v3180 = vunpack.c.l.b16 %v3071
          %v3181 = vunpack.c.h.b16 %v3071
          %v3182 = vunpack.c.l.b16 %v3072
          %v3183 = vunpack.c.h.b16 %v3072
          %v3184 = vunpack.c.l.b16 %v3073
          %v3185 = vunpack.c.h.b16 %v3073
          %v3186 = vunpack.c.l.b16 %v3074
          %v3187 = vunpack.c.h.b16 %v3074
          %v3188 = vunpack.c.l.b16 %v3075
          %v3189 = vunpack.c.h.b16 %v3075
          %v3190 = vunpack.c.l.b16 %v3076
          %v3191 = vunpack.c.h.b16 %v3076
          %v3192 = vunpack.c.l.b16 %v3077
          %v3193 = vunpack.c.h.b16 %v3077
          %v3194 = vunpack.c.l.b16 %v3078
          %v3195 = vunpack.c.h.b16 %v3078
          %v3196 = vunpack.c.l.b16 %v3079
          %v3197 = vunpack.c.h.b16 %v3079
          %v3198 = vpack.c.b16 %v3138, %v3134
          %v3199 = vpack.c.b16 %v3139, %v3135
          %v3200 = vpack.c.b16 %v3140, %v3136
          %v3201 = vpack.c.b16 %v3141, %v3137
          %v3202 = vpack.c.b16 %v3146, %v3142
          %v3203 = vpack.c.b16 %v3147, %v3143
          %v3204 = vpack.c.b16 %v3148, %v3144
          %v3205 = vpack.c.b16 %v3149, %v3145
          %v3206 = vpack.c.b16 %v3154, %v3150
          %v3207 = vpack.c.b16 %v3155, %v3151
          %v3208 = vpack.c.b16 %v3156, %v3152
          %v3209 = vpack.c.b16 %v3157, %v3153
          %v3210 = vpack.c.b16 %v3162, %v3158
          %v3211 = vpack.c.b16 %v3163, %v3159
          %v3212 = vpack.c.b16 %v3164, %v3160
          %v3213 = vpack.c.b16 %v3165, %v3161
          %v3214 = vpack.c.b16 %v3170, %v3166
          %v3215 = vpack.c.b16 %v3171, %v3167
          %v3216 = vpack.c.b16 %v3172, %v3168
          %v3217 = vpack.c.b16 %v3173, %v3169
          %v3218 = vpack.c.b16 %v3178, %v3174
          %v3219 = vpack.c.b16 %v3179, %v3175
          %v3220 = vpack.c.b16 %v3180, %v3176
          %v3221 = vpack.c.b16 %v3181, %v3177
          %v3222 = vpack.c.b16 %v3186, %v3182
          %v3223 = vpack.c.b16 %v3187, %v3183
          %v3224 = vpack.c.b16 %v3188, %v3184
          %v3225 = vpack.c.b16 %v3189, %v3185
          %v3226 = vpack.c.b16 %v3194, %v3190
          %v3227 = vpack.c.b16 %v3195, %v3191
          %v3228 = vpack.c.b16 %v3196, %v3192
          %v3229 = vpack.c.b16 %v3197, %v3193
          %3262 = vmatprep.subr.bf16.mxu0 %v3199
          %3263 = vmatpush1.bf16.msra.mxu0 %v3198
          %3264 = vmatprep.subr.bf16.mxu0 %v3203
          %3265 = vmatpush1.bf16.msra.mxu0 %v3202
          %3266 = vmatprep.subr.bf16.mxu0 %v3207
          %3267 = vmatpush1.bf16.msra.mxu0 %v3206
          %3268 = vmatprep.subr.bf16.mxu0 %v3211
          %3269 = vmatpush1.bf16.msra.mxu0 %v3210
          %3270 = vmatprep.subr.bf16.mxu0 %v3215
          %3271 = vmatpush1.bf16.msra.mxu0 %v3214
          %3272 = vmatprep.subr.bf16.mxu0 %v3219
          %3273 = vmatpush1.bf16.msra.mxu0 %v3218
          %3274 = vmatprep.subr.bf16.mxu0 %v3223
          %3275 = vmatpush1.bf16.msra.mxu0 %v3222
          %3276 = vmatprep.subr.bf16.mxu0 %v3227
          %3277 = vmatpush1.bf16.msra.mxu0 %v3226
          %3278 = vmatprep.subr.bf16.mxu0 0
          %3279 = vmatpush1.bf16.msra.mxu0 0
          %3280 = vmatprep.subr.bf16.mxu0 0
          %3281 = vmatpush1.bf16.msra.mxu0 0
          %3282 = vmatprep.subr.bf16.mxu0 0
          %3283 = vmatpush1.bf16.msra.mxu0 0
          %3284 = vmatprep.subr.bf16.mxu0 0
          %3285 = vmatpush1.bf16.msra.mxu0 0
          %3286 = vmatprep.subr.bf16.mxu0 0
          %3287 = vmatpush1.bf16.msra.mxu0 0
          %3288 = vmatprep.subr.bf16.mxu0 0
          %3289 = vmatpush1.bf16.msra.mxu0 0
          %3290 = vmatprep.subr.bf16.mxu0 0
          %3291 = vmatpush1.bf16.msra.mxu0 0
          %3292 = vmatprep.subr.bf16.mxu0 0
          %3293 = vmatpush1.bf16.msra.mxu0 0
          %3294 = vmatprep.mubr.bf16.mxu0 0
          %3295 = vmatmul.mubr.bf16.gmra.mrb[0].mxu0 %v3047
          %v3296 = vpop.f32.mrb[0].mxu0
          %v3297 = vadd.f32 %v3085, %v3296
          %v3298 = vpop.f32.mrb[0].mxu0
          %v3299 = vadd.f32 %v3089, %v3298
          %v3300 = vpop.f32.mrb[0].mxu0
          %v3301 = vadd.f32 %v3085, %v3300
          %v3302 = vpop.f32.mrb[0].mxu0
          %v3303 = vadd.f32 %v3089, %v3302
          %3304 = vdwg.mxu0
          %3305 = vmatprep.subr.bf16.mxu0 %v3201
          %3306 = vmatpush1.bf16.msra.mxu0 %v3200
          %3307 = vmatprep.subr.bf16.mxu0 %v3205
          %3308 = vmatpush1.bf16.msra.mxu0 %v3204
          %3309 = vmatprep.subr.bf16.mxu0 %v3209
          %3310 = vmatpush1.bf16.msra.mxu0 %v3208
          %3311 = vmatprep.subr.bf16.mxu0 %v3213
          %3312 = vmatpush1.bf16.msra.mxu0 %v3212
          %3313 = vmatprep.subr.bf16.mxu0 %v3217
          %3314 = vmatpush1.bf16.msra.mxu0 %v3216
          %3315 = vmatprep.subr.bf16.mxu0 %v3221
          %3316 = vmatpush1.bf16.msra.mxu0 %v3220
          %3317 = vmatprep.subr.bf16.mxu0 %v3225
          %3318 = vmatpush1.bf16.msra.mxu0 %v3224
          %3319 = vmatprep.subr.bf16.mxu0 %v3229
          %3320 = vmatpush1.bf16.msra.mxu0 %v3228
          %3321 = vmatprep.subr.bf16.mxu0 0
          %3322 = vmatpush1.bf16.msra.mxu0 0
          %3323 = vmatprep.subr.bf16.mxu0 0
          %3324 = vmatpush1.bf16.msra.mxu0 0
          %3325 = vmatprep.subr.bf16.mxu0 0
          %3326 = vmatpush1.bf16.msra.mxu0 0
          %3327 = vmatprep.subr.bf16.mxu0 0
          %3328 = vmatpush1.bf16.msra.mxu0 0
          %3329 = vmatprep.subr.bf16.mxu0 0
          %3330 = vmatpush1.bf16.msra.mxu0 0
          %3331 = vmatprep.subr.bf16.mxu0 0
          %3332 = vmatpush1.bf16.msra.mxu0 0
          %3333 = vmatprep.subr.bf16.mxu0 0
          %3334 = vmatpush1.bf16.msra.mxu0 0
          %3335 = vmatprep.subr.bf16.mxu0 0
          %3336 = vmatpush1.bf16.msra.mxu0 0
          %3337 = vmatprep.mubr.bf16.mxu0 0
          %3338 = vmatmul.mubr.bf16.gmra.mrb[0].mxu0 %v3047
          %v3339 = vpop.f32.mrb[0].mxu0
          %v3340 = vadd.f32 %v3093, %v3339
          %v3341 = vpop.f32.mrb[0].mxu0
          %v3342 = vadd.f32 %v3097, %v3341
          %v3343 = vpop.f32.mrb[0].mxu0
          %v3344 = vadd.f32 %v3093, %v3343
          %v3345 = vpop.f32.mrb[0].mxu0
          %v3346 = vadd.f32 %v3097, %v3345
          %3347 = vdwg.mxu0
          %3348 = vst [vmem:[#allocation11] sm:$0xff] %v3297
          %3349 = vst [vmem:[#allocation11 + $0x8] sm:$0xff] %v3299
          %3350 = vst [vmem:[#allocation11 + $0x10] sm:$0xff] %v3340
          %3351 = vst [vmem:[#allocation11 + $0x18] sm:$0xff] %v3342
          %3352 = vst [vmem:[#allocation11 + $0x20] sm:$0xff] %v3301
          %3353 = vst [vmem:[#allocation11 + $0x28] sm:$0xff] %v3303
          %3354 = vst [vmem:[#allocation11 + $0x30] sm:$0xff] %v3344
          %3355 = vst [vmem:[#allocation11 + $0x38] sm:$0xff] %v3346
        $region116: #{diffusion_bert_forward.1} parent=91 // pred_fallthru
          _
        // Predicated region
        $region117: #{diffusion_bert_forward.1} parent=91 // pred_check
          %p3356 = pneg %p493
        $region118: #{diffusion_bert_forward.1} parent=91 // pred_check_branch
          %3358 = sbr.rel (%p3356) target = $region120
        $region119: #{diffusion_bert_forward.1} parent=91 // pred_region
          %s3360 = ssub.s32 256, 256
          %3361 = vsyncadd [#allocation4], %s3360
          %s3362 = sshll.u32 [#allocation10], 4
          %s3363 = int_to_ptr.vmem [resolvable:$true] %s3362
          %3368 = dma.vmem_to_hbm [thread:$0]  %s3363, 256, %s18, [#allocation4], 128, 128, 8
        $region120: #{diffusion_bert_forward.1} parent=91 // pred_fallthru
          _
        // Predicated region
        $region121: #{diffusion_bert_forward.1} parent=91 // pred_check
          %p3369 = pneg %p514
        $region122: #{diffusion_bert_forward.1} parent=91 // pred_check_branch
          %3371 = sbr.rel (%p3369) target = $region124
        $region123: #{diffusion_bert_forward.1} parent=91 // pred_region
          %s3373 = ssub.s32 1024, 1024
          %3374 = vsyncadd [#allocation12], %s3373
          %s3375 = sshll.u32 [#allocation11], 4
          %s3376 = int_to_ptr.vmem [resolvable:$true] %s3375
          %3381 = dma.vmem_to_hbm [thread:$0]  %s3376, 1024, %s19, [#allocation12], 512, 512, 32
        $region124: #{diffusion_bert_forward.1} parent=91 // pred_fallthru
          _
        // Predicated region
        $region125: #{diffusion_bert_forward.1} parent=91 // pred_check
          %p3382 = pneg %p493
        $region126: #{diffusion_bert_forward.1} parent=91 // pred_check_branch
          %3384 = sbr.rel (%p3382) target = $region128
        $region127: #{diffusion_bert_forward.1} parent=91 // pred_region
          %3385 = dma.done [#allocation4], 256
        $region128: #{diffusion_bert_forward.1} parent=91 // pred_fallthru
          _
        // Predicated region
        $region129: #{diffusion_bert_forward.1} parent=91 // pred_check
          %p3386 = pneg %p514
        $region130: #{diffusion_bert_forward.1} parent=91 // pred_check_branch
          %3388 = sbr.rel (%p3386) target = $region132
        $region131: #{diffusion_bert_forward.1} parent=91 // pred_region
          %3389 = dma.done [#allocation12], 1024
        $region132: #{diffusion_bert_forward.1} parent=91 // pred_fallthru
          _
      $region92: #{diffusion_bert_forward.1} parent=5 // pred_fallthru
        _
      %p3390 = scmp.le.s32.totalorder 2, %s37
      // Predicated region
      $region133: #{diffusion_bert_forward.1} parent=5 // pred_check
        %p3391 = pneg %p3390
      $region134: #{diffusion_bert_forward.1} parent=5 // pred_check_branch
        %3393 = sbr.rel (%p3391) target = $region136
      $region135: #{diffusion_bert_forward.1} parent=5 // pred_region
        %s3394 = ssub.s32 %s37, 2
      $region136: #{diffusion_bert_forward.1} parent=5 // pred_fallthru
        _
    $region6: #{diffusion_bert_forward.1} parent=1 // loop_footer
      %s41 = sadd.s32 1, %s37
    $region7: #{diffusion_bert_forward.1} parent=1 // loop_footer_branch
      %36 = sbr.rel target = $region3
    $region8: #{diffusion_bert_forward.1} parent=1 // loop_exit
      _
    %3395 = vsyncpa [#allocation3], 1
    %s3396 = scalar_lea.sflag [#allocation3], 1
    %3397 = vsyncpa %s3396, 1
    %3398 = vsyncpa [#allocation6], 1
    %s3399 = scalar_lea.sflag [#allocation6], 1
    %3400 = vsyncpa %s3399, 1
    %3401 = vsyncpa [#allocation9], 1
    %s3402 = scalar_lea.sflag [#allocation9], 1
    %3403 = vsyncpa %s3402, 1
    %3404 = vsyncpa [#allocation4], 1
    %s3405 = scalar_lea.sflag [#allocation4], 1
    %3406 = vsyncpa %s3405, 1
    %3407 = vsyncpa [#allocation12], 1

</llo_original>
